<compile_context>
chip_gen: v7x
topology: tpu7x:2x2x1
jax: 0.10.0
libtpu: 0.0.40
codegen_flags: <defaults>
</compile_context>

<pallas_src>
import functools

import numpy as np
import jax
import jax.numpy as jnp
from jax.experimental import pallas as pl
from jax.experimental.pallas import tpu as pltpu


# ----------------------------------------------------------------------------
# Fused Pallas kernel: conv_offset + bilinear sampling + mask + 1x1 conv
# ----------------------------------------------------------------------------
def fused_dcn_kernel(p_ref, woff_ref, boff_ref, bx_ref, by_ref, yy_ref, xx_ref,
                     x_ref, w2_ref, off_ref, out_ref, samp_ref, *, kk):
    # ---- conv_offset, lane-dense: (3*KK, TILE) = (3*KK, c*KK) @ (c*KK, TILE) ----
    off_ref[...] = (
        jnp.dot(woff_ref[...], p_ref[...], preferred_element_type=jnp.float32)
        + boff_ref[...]
    )

    x = x_ref[...]          # (c, hw_in)         input image, flattened spatial
    yy = yy_ref[...]        # (hw_in, 1)         static row (y) coordinate per pixel
    xx = xx_ref[...]        # (hw_in, 1)         static col (x) coordinate per pixel
    c = x.shape[0]

    for k in range(kk):     # static unroll over the KK kernel taps
        # absolute sampling coordinates for tap k, (1, TILE)
        px = off_ref[pl.ds(k, 1), :] + bx_ref[pl.ds(k, 1), :]
        py = off_ref[pl.ds(kk + k, 1), :] + by_ref[pl.ds(k, 1), :]
        # sigmoid(mask logits) via EUP (exp + approx reciprocal)
        m = pl.reciprocal(1.0 + jnp.exp(-off_ref[pl.ds(2 * kk + k, 1), :]),
                          approx=True)

        # Bilinear sampling matrix S[p, t] = tri(yy[p]-py[t]) * tri(xx[p]-px[t])
        # with tri(d) = max(0, 1-|d|): exactly the 4-neighbour bilinear weights;
        # out-of-range neighbours have no row in S, i.e. zero padding (matches
        # the reference's clip-then-mask-by-valid behaviour).
        ty = jnp.maximum(1.0 - jnp.abs(yy - py), 0.0)     # (hw_in, TILE)
        tx = jnp.maximum(1.0 - jnp.abs(xx - px), 0.0)     # (hw_in, TILE)
        s_mat = ty * tx

        # gather-as-matmul: (c, hw_in) @ (hw_in, TILE) -> (c, TILE), then modulate
        sampled = jnp.dot(x, s_mat, preferred_element_type=jnp.float32)
        samp_ref[pl.ds(k * c, c), :] = sampled * m        # tap-major rows

    # ---- 1x1 conv over all taps/channels in one dense matmul ----
    out_ref[...] = jnp.dot(w2_ref[...], samp_ref[...],
                           preferred_element_type=jnp.float32)


# ----------------------------------------------------------------------------
# Glue helpers (plain JAX / numpy: layout + static coordinate grids)
# ----------------------------------------------------------------------------
def _out_hw(h, w, kernel_size, stride, padding, dilation):
    K0, K1 = kernel_size
    s0, s1 = stride
    p0, p1 = padding
    d0, d1 = dilation
    H = (h + 2 * p0 - d0 * (K0 - 1) - 1) // s0 + 1
    W = (w + 2 * p1 - d1 * (K1 - 1) - 1) // s1 + 1
    return H, W


def _im2col(x, kernel_size, stride, padding, dilation, H, W):
    """Returns patches^T, shape (b, c*K0*K1, H*W) — channel-major, tap-minor."""
    b, c, h, w = x.shape
    K0, K1 = kernel_size
    s0, s1 = stride
    p0, p1 = padding
    d0, d1 = dilation
    x_pad = jnp.pad(x, ((0, 0), (0, 0), (p0, p0), (p1, p1)))
    taps = []
    for ky in range(K0):
        for kx in range(K1):
            taps.append(x_pad[:, :, ky * d0: ky * d0 + s0 * H: s0,
                              kx * d1: kx * d1 + s1 * W: s1])
    patches = jnp.stack(taps, axis=2)                      # (b, c, K0*K1, H, W)
    return patches.reshape(b, c * K0 * K1, H * W)          # (b, c*KK, HW)


def _base_coords(kernel_size, stride, padding, dilation, H, W):
    """Static sampling-grid coordinates, shape (K0*K1, H*W) each (x and y)."""
    K0, K1 = kernel_size
    s0, s1 = stride
    p0, p1 = padding
    d0, d1 = dilation
    x_start = d1 / 2 * (K1 - 1) - p1
    y_start = d0 / 2 * (K0 - 1) - p0
    x_cood = x_start + s1 * np.arange(W, dtype=np.float32)
    y_cood = y_start + s0 * np.arange(H, dtype=np.float32)
    x_bias = d1 * (1 - K1) / 2 + d1 * np.arange(K1, dtype=np.float32)
    y_bias = d0 * (1 - K0) / 2 + d0 * np.arange(K0, dtype=np.float32)
    x_bias_k = np.tile(x_bias, K0)          # flattened tap index k = ky*K1 + kx
    y_bias_k = np.repeat(y_bias, K1)
    grid_x = np.broadcast_to(x_cood[None, :], (H, W)).reshape(-1)
    grid_y = np.broadcast_to(y_cood[:, None], (H, W)).reshape(-1)
    base_x = x_bias_k[:, None] + grid_x[None, :]
    base_y = y_bias_k[:, None] + grid_y[None, :]
    return jnp.asarray(base_x, jnp.float32), jnp.asarray(base_y, jnp.float32)


# ----------------------------------------------------------------------------
# Forward (== ModulatedDeformConv2dFastv2Pack.forward, mask=True, groups=1)
# ----------------------------------------------------------------------------
def forward(x, w_off, b_off, w_conv, *, kernel_size, stride, padding, dilation,
            tile_hw=512):
    b, c, h, w = x.shape
    K0, K1 = kernel_size
    KK = K0 * K1
    CKK = c * KK
    AKK = 3 * KK
    out_c = w_conv.shape[0]
    H, W = _out_hw(h, w, kernel_size, stride, padding, dilation)
    HW = H * W
    HWin = h * w

    # output-pixel tile (lane dim); fall back to a single full tile if HW does
    # not divide evenly.  TODO(synk): pad HW to a tile multiple for odd sizes.
    tile = tile_hw if (HW % tile_hw == 0) else HW

    # host-side prep (pure layout; no HBM roundtrip of intermediates)
    patches_t = _im2col(x, kernel_size, stride, padding, dilation, H, W)  # (b,CKK,HW)
    w_off_mat = w_off.reshape(AKK, CKK)                                   # (AKK,CKK)
    b_off2 = b_off.reshape(AKK, 1)
    base_x, base_y = _base_coords(kernel_size, stride, padding, dilation, H, W)
    yy_grid = jnp.asarray(
        (np.arange(HWin) // w).astype(np.float32).reshape(HWin, 1))
    xx_grid = jnp.asarray(
        (np.arange(HWin) % w).astype(np.float32).reshape(HWin, 1))
    x_flat = x.reshape(b, c, HWin)
    # reorder 1x1 conv weight to tap-major contraction rows (k*c + ci)
    w2 = w_conv.reshape(out_c, c, KK).transpose(0, 2, 1).reshape(out_c, KK * c)

    kernel = functools.partial(fused_dcn_kernel, kk=KK)
    off, out = pl.pallas_call(
        kernel,
        out_shape=(jax.ShapeDtypeStruct((b, AKK, HW), jnp.float32),
                   jax.ShapeDtypeStruct((b, out_c, HW), jnp.float32)),
        grid=(b, HW // tile),
        in_specs=[
            pl.BlockSpec((None, CKK, tile), lambda i, t: (i, 0, t)),   # patches^T
            pl.BlockSpec((AKK, CKK), lambda i, t: (0, 0)),             # w_off
            pl.BlockSpec((AKK, 1), lambda i, t: (0, 0)),               # b_off
            pl.BlockSpec((KK, tile), lambda i, t: (0, t)),             # base_x
            pl.BlockSpec((KK, tile), lambda i, t: (0, t)),             # base_y
            pl.BlockSpec((HWin, 1), lambda i, t: (0, 0)),              # yy grid
            pl.BlockSpec((HWin, 1), lambda i, t: (0, 0)),              # xx grid
            pl.BlockSpec((None, c, HWin), lambda i, t: (i, 0, 0)),     # x (flat)
            pl.BlockSpec((out_c, KK * c), lambda i, t: (0, 0)),        # 1x1 conv w
        ],
        out_specs=(
            pl.BlockSpec((None, AKK, tile), lambda i, t: (i, 0, t)),   # off (lane-dense)
            pl.BlockSpec((None, out_c, tile), lambda i, t: (i, 0, t)), # conv out
        ),
        scratch_shapes=[pltpu.VMEM((KK * c, tile), jnp.float32)],
        compiler_params=pltpu.CompilerParams(
            dimension_semantics=("parallel", "parallel")),
    )(patches_t, w_off_mat, b_off2, base_x, base_y, yy_grid, xx_grid, x_flat, w2)

    return off, out.reshape(b, out_c, H, W)


# ----------------------------------------------------------------------------
# Pure-JAX reference (sanity check of the Pallas kernel)
# ----------------------------------------------------------------------------
def _bilinear_sample_batch(x_flat_b, px_b, py_b, h, w):
    x0 = jnp.floor(px_b)
    y0 = jnp.floor(py_b)
    lx = px_b - x0
    ly = py_b - y0
    x0i = x0.astype(jnp.int32)
    y0i = y0.astype(jnp.int32)

    def g(xi, yi, wgt):
        valid = ((xi >= 0) & (xi < w) & (yi >= 0) & (yi < h)).astype(jnp.float32)
        xc = jnp.clip(xi, 0, w - 1)
        yc = jnp.clip(yi, 0, h - 1)
        v = x_flat_b[:, yc * w + xc]
        return v * (wgt * valid)[None, :]

    return (g(x0i, y0i, (1 - lx) * (1 - ly))
            + g(x0i + 1, y0i, lx * (1 - ly))
            + g(x0i, y0i + 1, (1 - lx) * ly)
            + g(x0i + 1, y0i + 1, lx * ly))


def reference_from_offsets(x, off_c, w_conv, kernel_size, stride, padding, dilation):
    # off_c: (b, 3*KK, HW) — raw conv_offset output (lane-dense layout).
    b, c, h, w = x.shape
    K0, K1 = kernel_size
    KK = K0 * K1
    out_c = w_conv.shape[0]
    H, W = _out_hw(h, w, kernel_size, stride, padding, dilation)
    HW = H * W

    o1 = off_c[:, :KK]
    o2 = off_c[:, KK:2 * KK]
    mk = jax.nn.sigmoid(off_c[:, 2 * KK:])

    bx, by = _base_coords(kernel_size, stride, padding, dilation, H, W)
    px = (o1 + bx[None]).reshape(b, KK * HW)
    py = (o2 + by[None]).reshape(b, KK * HW)
    x_flat = x.reshape(b, c, h * w)
    samp = jax.vmap(functools.partial(_bilinear_sample_batch, h=h, w=w))(
        x_flat, px, py)                                   # (b, c, KK*HW)
    samp = samp.reshape(b, c, KK, HW)
    y = samp * mk[:, None]                                # modulation
    y = y.reshape(b, c * KK, HW)
    out = jnp.einsum('oc,bci->boi', w_conv, y)
    return out.reshape(b, out_c, H, W)


# ----------------------------------------------------------------------------
if __name__ == "__main__":
    key = jax.random.PRNGKey(0)
    b, c, h, w = 2, 4, 16, 16
    out_channels = 8
    K = 3
    kernel_size = (K, K)
    stride = (1, 1)
    padding = (1, 1)
    dilation = (1, 1)
    KK = K * K

    k1, k2, k3, k4 = jax.random.split(key, 4)
    x = jax.random.normal(k1, (b, c, h, w), jnp.float32)
    # conv_offset: Conv2d(c, 3*K*K, K, bias=True); nonzero so the bilinear path
    # is actually exercised (the real module zero-inits it -> regular grid).
    w_off = 0.1 * jax.random.normal(k2, (3 * KK, c, K, K), jnp.float32)
    b_off = 0.1 * jax.random.normal(k3, (3 * KK,), jnp.float32)
    # conv: Conv2d(c*K*K, out_channels, 1, bias=False)
    w_conv = (1.0 / np.sqrt(3.0)) * jax.random.normal(
        k4, (out_channels, c * KK), jnp.float32)

    # tile_hw=128 exercises the multi-tile path at this small spatial size
    off, out = forward(x, w_off, b_off, w_conv,
                       kernel_size=kernel_size, stride=stride,
                       padding=padding, dilation=dilation, tile_hw=128)
    out = jax.block_until_ready(out)

    # --- sanity check against a pure-JAX reference ---
    H, W = _out_hw(h, w, kernel_size, stride, padding, dilation)
    patches_t = _im2col(x, kernel_size, stride, padding, dilation, H, W)
    off_ref = (jnp.einsum('ak,bkp->bap', w_off.reshape(3 * KK, c * KK), patches_t)
               + b_off[None, :, None])
    assert np.allclose(np.asarray(off), np.asarray(off_ref), atol=2e-2, rtol=2e-2)

    out_ref = reference_from_offsets(x, off, w_conv, kernel_size, stride,
                                     padding, dilation)
    assert np.allclose(np.asarray(out), np.asarray(out_ref), atol=2e-2, rtol=2e-2)
    assert out.shape == (b, out_channels, H, W)

    print("KERNEL_OK")
</pallas_src>

<mosaic_0001>
module attributes {stable_mosaic.version = 11 : i64} {
  func.func @fused_dcn_kernel(%arg0: i32, %arg1: i32, %arg2: memref<1x36x128xf32, #tpu.memory_space<vmem>>, %arg3: memref<27x36xf32, #tpu.memory_space<vmem>>, %arg4: memref<27x1xf32, #tpu.memory_space<vmem>>, %arg5: memref<9x128xf32, #tpu.memory_space<vmem>>, %arg6: memref<9x128xf32, #tpu.memory_space<vmem>>, %arg7: memref<256x1xf32, #tpu.memory_space<vmem>>, %arg8: memref<256x1xf32, #tpu.memory_space<vmem>>, %arg9: memref<1x4x256xf32, #tpu.memory_space<vmem>>, %arg10: memref<8x36xf32, #tpu.memory_space<vmem>>, %arg11: memref<1x27x128xf32, #tpu.memory_space<vmem>>, %arg12: memref<1x8x128xf32, #tpu.memory_space<vmem>>, %arg13: memref<36x128xf32, #tpu.memory_space<vmem>>) attributes {dimension_semantics = [#tpu.dimension_semantics<parallel>, #tpu.dimension_semantics<parallel>], iteration_bounds = array<i64: 2, 2>, scalar_prefetch = 0 : i64, scratch_operands = 1 : i64, tpu.core_type = #tpu.core_type<tc>, window_params = [{transform_indices = @transform_0, window_bounds = array<i64: 1, 36, 128>}, {pipeline_mode = #tpu.pipeline_mode<synchronous>, transform_indices = @transform_1, window_bounds = array<i64: 27, 36>}, {pipeline_mode = #tpu.pipeline_mode<synchronous>, transform_indices = @transform_2, window_bounds = array<i64: 27, 1>}, {transform_indices = @transform_3, window_bounds = array<i64: 9, 128>}, {transform_indices = @transform_4, window_bounds = array<i64: 9, 128>}, {pipeline_mode = #tpu.pipeline_mode<synchronous>, transform_indices = @transform_5, window_bounds = array<i64: 256, 1>}, {pipeline_mode = #tpu.pipeline_mode<synchronous>, transform_indices = @transform_6, window_bounds = array<i64: 256, 1>}, {transform_indices = @transform_7, window_bounds = array<i64: 1, 4, 256>}, {pipeline_mode = #tpu.pipeline_mode<synchronous>, transform_indices = @transform_8, window_bounds = array<i64: 8, 36>}, {transform_indices = @transform_9, window_bounds = array<i64: 1, 27, 128>}, {transform_indices = @transform_10, window_bounds = array<i64: 1, 8, 128>}]} {
    %c0 = arith.constant 0 : index
    %c0_0 = arith.constant 0 : index
    %0 = vector.load %arg3[%c0, %c0_0] : memref<27x36xf32, #tpu.memory_space<vmem>>, vector<27x36xf32>
    %c0_1 = arith.constant 0 : index
    %c0_2 = arith.constant 0 : index
    %c0_3 = arith.constant 0 : index
    %1 = vector.load %arg2[%c0_1, %c0_2, %c0_3] : memref<1x36x128xf32, #tpu.memory_space<vmem>>, vector<1x36x128xf32>
    %2 = vector.shape_cast %1 : vector<1x36x128xf32> to vector<36x128xf32>
    %cst = arith.constant dense<0.000000e+00> : vector<27x128xf32>
    %3 = tpu.matmul %0, %2, %cst {dimension_numbers = #tpu.dot_dimension_numbers<[1], [0], [0], [1], [0, 0, 1, 1], [], []>} : vector<27x36xf32>, vector<36x128xf32>, vector<27x128xf32> -> vector<27x128xf32>
    %c0_4 = arith.constant 0 : index
    %c0_5 = arith.constant 0 : index
    %4 = vector.load %arg4[%c0_4, %c0_5] : memref<27x1xf32, #tpu.memory_space<vmem>>, vector<27x1xf32>
    %5 = vector.broadcast %4 : vector<27x1xf32> to vector<27x128xf32>
    %6 = arith.addf %3, %5 : vector<27x128xf32>
    %c0_6 = arith.constant 0 : index
    %c0_7 = arith.constant 0 : index
    %c0_8 = arith.constant 0 : index
    %7 = vector.load %arg11[%c0_6, %c0_7, %c0_8] : memref<1x27x128xf32, #tpu.memory_space<vmem>>, vector<1x27x128xf32>
    %8 = vector.shape_cast %7 : vector<1x27x128xf32> to vector<27x128xf32>
    %9 = vector.shape_cast %6 : vector<27x128xf32> to vector<1x27x128xf32>
    tpu.vector_store %arg11[%c0_6, %c0_7, %c0_8], %9 {strides = array<i32>} : memref<1x27x128xf32, #tpu.memory_space<vmem>>, vector<1x27x128xf32>,
    %c0_9 = arith.constant 0 : index
    %c0_10 = arith.constant 0 : index
    %c0_11 = arith.constant 0 : index
    %10 = vector.load %arg9[%c0_9, %c0_10, %c0_11] : memref<1x4x256xf32, #tpu.memory_space<vmem>>, vector<1x4x256xf32>
    %11 = vector.shape_cast %10 : vector<1x4x256xf32> to vector<4x256xf32>
    %c0_12 = arith.constant 0 : index
    %c0_13 = arith.constant 0 : index
    %12 = vector.load %arg7[%c0_12, %c0_13] : memref<256x1xf32, #tpu.memory_space<vmem>>, vector<256x1xf32>
    %c0_14 = arith.constant 0 : index
    %c0_15 = arith.constant 0 : index
    %13 = vector.load %arg8[%c0_14, %c0_15] : memref<256x1xf32, #tpu.memory_space<vmem>>, vector<256x1xf32>
    %c0_16 = arith.constant 0 : index
    %c0_17 = arith.constant 0 : index
    %c0_18 = arith.constant 0 : index
    %14 = vector.load %arg11[%c0_16, %c0_17, %c0_18] : memref<1x27x128xf32, #tpu.memory_space<vmem>>, vector<1x1x128xf32>
    %15 = vector.shape_cast %14 : vector<1x1x128xf32> to vector<1x128xf32>
    %c0_19 = arith.constant 0 : index
    %c0_20 = arith.constant 0 : index
    %16 = vector.load %arg5[%c0_19, %c0_20] : memref<9x128xf32, #tpu.memory_space<vmem>>, vector<1x128xf32>
    %17 = arith.addf %15, %16 : vector<1x128xf32>
    %c0_21 = arith.constant 0 : index
    %c9 = arith.constant 9 : index
    %c0_22 = arith.constant 0 : index
    %18 = vector.load %arg11[%c0_21, %c9, %c0_22] : memref<1x27x128xf32, #tpu.memory_space<vmem>>, vector<1x1x128xf32>
    %19 = vector.shape_cast %18 : vector<1x1x128xf32> to vector<1x128xf32>
    %c0_23 = arith.constant 0 : index
    %c0_24 = arith.constant 0 : index
    %20 = vector.load %arg6[%c0_23, %c0_24] : memref<9x128xf32, #tpu.memory_space<vmem>>, vector<1x128xf32>
    %21 = arith.addf %19, %20 : vector<1x128xf32>
    %c0_25 = arith.constant 0 : index
    %c18 = arith.constant 18 : index
    %c0_26 = arith.constant 0 : index
    %22 = vector.load %arg11[%c0_25, %c18, %c0_26] : memref<1x27x128xf32, #tpu.memory_space<vmem>>, vector<1x1x128xf32>
    %23 = vector.shape_cast %22 : vector<1x1x128xf32> to vector<1x128xf32>
    %cst_27 = arith.constant 0.000000e+00 : f32
    %24 = vector.broadcast %cst_27 : f32 to vector<1x128xf32>
    %25 = arith.subf %24, %23 : vector<1x128xf32>
    %26 = math.exp %25 : vector<1x128xf32>
    %cst_28 = arith.constant 1.000000e+00 : f32
    %27 = vector.broadcast %cst_28 : f32 to vector<1x128xf32>
    %28 = arith.addf %27, %26 : vector<1x128xf32>
    %29 = tpu.reciprocal %28 {approx = true} : vector<1x128xf32> -> vector<1x128xf32>
    %30 = vector.broadcast %12 : vector<256x1xf32> to vector<256x128xf32>
    %31 = vector.broadcast %21 : vector<1x128xf32> to vector<256x128xf32>
    %32 = arith.subf %30, %31 : vector<256x128xf32>
    %33 = math.absf %32 : vector<256x128xf32>
    %cst_29 = arith.constant 1.000000e+00 : f32
    %34 = vector.broadcast %cst_29 : f32 to vector<256x128xf32>
    %35 = arith.subf %34, %33 : vector<256x128xf32>
    %cst_30 = arith.constant 0.000000e+00 : f32
    %36 = vector.broadcast %cst_30 : f32 to vector<256x128xf32>
    %37 = arith.maximumf %35, %36 : vector<256x128xf32>
    %38 = vector.broadcast %13 : vector<256x1xf32> to vector<256x128xf32>
    %39 = vector.broadcast %17 : vector<1x128xf32> to vector<256x128xf32>
    %40 = arith.subf %38, %39 : vector<256x128xf32>
    %41 = math.absf %40 : vector<256x128xf32>
    %cst_31 = arith.constant 1.000000e+00 : f32
    %42 = vector.broadcast %cst_31 : f32 to vector<256x128xf32>
    %43 = arith.subf %42, %41 : vector<256x128xf32>
    %cst_32 = arith.constant 0.000000e+00 : f32
    %44 = vector.broadcast %cst_32 : f32 to vector<256x128xf32>
    %45 = arith.maximumf %43, %44 : vector<256x128xf32>
    %46 = arith.mulf %37, %45 : vector<256x128xf32>
    %cst_33 = arith.constant dense<0.000000e+00> : vector<4x128xf32>
    %47 = tpu.matmul %11, %46, %cst_33 {dimension_numbers = #tpu.dot_dimension_numbers<[1], [0], [0], [1], [0, 0, 1, 1], [], []>} : vector<4x256xf32>, vector<256x128xf32>, vector<4x128xf32> -> vector<4x128xf32>
    %48 = vector.broadcast %29 : vector<1x128xf32> to vector<4x128xf32>
    %49 = arith.mulf %47, %48 : vector<4x128xf32>
    %c0_34 = arith.constant 0 : index
    %c0_35 = arith.constant 0 : index
    %50 = vector.load %arg13[%c0_34, %c0_35] : memref<36x128xf32, #tpu.memory_space<vmem>>, vector<4x128xf32>
    tpu.vector_store %arg13[%c0_34, %c0_35], %49 {strides = array<i32>} : memref<36x128xf32, #tpu.memory_space<vmem>>, vector<4x128xf32>,
    %c0_36 = arith.constant 0 : index
    %c1 = arith.constant 1 : index
    %c0_37 = arith.constant 0 : index
    %51 = vector.load %arg11[%c0_36, %c1, %c0_37] : memref<1x27x128xf32, #tpu.memory_space<vmem>>, vector<1x1x128xf32>
    %52 = vector.shape_cast %51 : vector<1x1x128xf32> to vector<1x128xf32>
    %c1_38 = arith.constant 1 : index
    %c0_39 = arith.constant 0 : index
    %53 = vector.load %arg5[%c1_38, %c0_39] : memref<9x128xf32, #tpu.memory_space<vmem>>, vector<1x128xf32>
    %54 = arith.addf %52, %53 : vector<1x128xf32>
    %c0_40 = arith.constant 0 : index
    %c10 = arith.constant 10 : index
    %c0_41 = arith.constant 0 : index
    %55 = vector.load %arg11[%c0_40, %c10, %c0_41] : memref<1x27x128xf32, #tpu.memory_space<vmem>>, vector<1x1x128xf32>
    %56 = vector.shape_cast %55 : vector<1x1x128xf32> to vector<1x128xf32>
    %c1_42 = arith.constant 1 : index
    %c0_43 = arith.constant 0 : index
    %57 = vector.load %arg6[%c1_42, %c0_43] : memref<9x128xf32, #tpu.memory_space<vmem>>, vector<1x128xf32>
    %58 = arith.addf %56, %57 : vector<1x128xf32>
    %c0_44 = arith.constant 0 : index
    %c19 = arith.constant 19 : index
    %c0_45 = arith.constant 0 : index
    %59 = vector.load %arg11[%c0_44, %c19, %c0_45] : memref<1x27x128xf32, #tpu.memory_space<vmem>>, vector<1x1x128xf32>
    %60 = vector.shape_cast %59 : vector<1x1x128xf32> to vector<1x128xf32>
    %cst_46 = arith.constant 0.000000e+00 : f32
    %61 = vector.broadcast %cst_46 : f32 to vector<1x128xf32>
    %62 = arith.subf %61, %60 : vector<1x128xf32>
    %63 = math.exp %62 : vector<1x128xf32>
    %cst_47 = arith.constant 1.000000e+00 : f32
    %64 = vector.broadcast %cst_47 : f32 to vector<1x128xf32>
    %65 = arith.addf %64, %63 : vector<1x128xf32>
    %66 = tpu.reciprocal %65 {approx = true} : vector<1x128xf32> -> vector<1x128xf32>
    %67 = vector.broadcast %12 : vector<256x1xf32> to vector<256x128xf32>
    %68 = vector.broadcast %58 : vector<1x128xf32> to vector<256x128xf32>
    %69 = arith.subf %67, %68 : vector<256x128xf32>
    %70 = math.absf %69 : vector<256x128xf32>
    %cst_48 = arith.constant 1.000000e+00 : f32
    %71 = vector.broadcast %cst_48 : f32 to vector<256x128xf32>
    %72 = arith.subf %71, %70 : vector<256x128xf32>
    %cst_49 = arith.constant 0.000000e+00 : f32
    %73 = vector.broadcast %cst_49 : f32 to vector<256x128xf32>
    %74 = arith.maximumf %72, %73 : vector<256x128xf32>
    %75 = vector.broadcast %13 : vector<256x1xf32> to vector<256x128xf32>
    %76 = vector.broadcast %54 : vector<1x128xf32> to vector<256x128xf32>
    %77 = arith.subf %75, %76 : vector<256x128xf32>
    %78 = math.absf %77 : vector<256x128xf32>
    %cst_50 = arith.constant 1.000000e+00 : f32
    %79 = vector.broadcast %cst_50 : f32 to vector<256x128xf32>
    %80 = arith.subf %79, %78 : vector<256x128xf32>
    %cst_51 = arith.constant 0.000000e+00 : f32
    %81 = vector.broadcast %cst_51 : f32 to vector<256x128xf32>
    %82 = arith.maximumf %80, %81 : vector<256x128xf32>
    %83 = arith.mulf %74, %82 : vector<256x128xf32>
    %cst_52 = arith.constant dense<0.000000e+00> : vector<4x128xf32>
    %84 = tpu.matmul %11, %83, %cst_52 {dimension_numbers = #tpu.dot_dimension_numbers<[1], [0], [0], [1], [0, 0, 1, 1], [], []>} : vector<4x256xf32>, vector<256x128xf32>, vector<4x128xf32> -> vector<4x128xf32>
    %85 = vector.broadcast %66 : vector<1x128xf32> to vector<4x128xf32>
    %86 = arith.mulf %84, %85 : vector<4x128xf32>
    %c4 = arith.constant 4 : index
    %c0_53 = arith.constant 0 : index
    %87 = vector.load %arg13[%c4, %c0_53] : memref<36x128xf32, #tpu.memory_space<vmem>>, vector<4x128xf32>
    tpu.vector_store %arg13[%c4, %c0_53], %86 {strides = array<i32>} : memref<36x128xf32, #tpu.memory_space<vmem>>, vector<4x128xf32>,
    %c0_54 = arith.constant 0 : index
    %c2 = arith.constant 2 : index
    %c0_55 = arith.constant 0 : index
    %88 = vector.load %arg11[%c0_54, %c2, %c0_55] : memref<1x27x128xf32, #tpu.memory_space<vmem>>, vector<1x1x128xf32>
    %89 = vector.shape_cast %88 : vector<1x1x128xf32> to vector<1x128xf32>
    %c2_56 = arith.constant 2 : index
    %c0_57 = arith.constant 0 : index
    %90 = vector.load %arg5[%c2_56, %c0_57] : memref<9x128xf32, #tpu.memory_space<vmem>>, vector<1x128xf32>
    %91 = arith.addf %89, %90 : vector<1x128xf32>
    %c0_58 = arith.constant 0 : index
    %c11 = arith.constant 11 : index
    %c0_59 = arith.constant 0 : index
    %92 = vector.load %arg11[%c0_58, %c11, %c0_59] : memref<1x27x128xf32, #tpu.memory_space<vmem>>, vector<1x1x128xf32>
    %93 = vector.shape_cast %92 : vector<1x1x128xf32> to vector<1x128xf32>
    %c2_60 = arith.constant 2 : index
    %c0_61 = arith.constant 0 : index
    %94 = vector.load %arg6[%c2_60, %c0_61] : memref<9x128xf32, #tpu.memory_space<vmem>>, vector<1x128xf32>
    %95 = arith.addf %93, %94 : vector<1x128xf32>
    %c0_62 = arith.constant 0 : index
    %c20 = arith.constant 20 : index
    %c0_63 = arith.constant 0 : index
    %96 = vector.load %arg11[%c0_62, %c20, %c0_63] : memref<1x27x128xf32, #tpu.memory_space<vmem>>, vector<1x1x128xf32>
    %97 = vector.shape_cast %96 : vector<1x1x128xf32> to vector<1x128xf32>
    %cst_64 = arith.constant 0.000000e+00 : f32
    %98 = vector.broadcast %cst_64 : f32 to vector<1x128xf32>
    %99 = arith.subf %98, %97 : vector<1x128xf32>
    %100 = math.exp %99 : vector<1x128xf32>
    %cst_65 = arith.constant 1.000000e+00 : f32
    %101 = vector.broadcast %cst_65 : f32 to vector<1x128xf32>
    %102 = arith.addf %101, %100 : vector<1x128xf32>
    %103 = tpu.reciprocal %102 {approx = true} : vector<1x128xf32> -> vector<1x128xf32>
    %104 = vector.broadcast %12 : vector<256x1xf32> to vector<256x128xf32>
    %105 = vector.broadcast %95 : vector<1x128xf32> to vector<256x128xf32>
    %106 = arith.subf %104, %105 : vector<256x128xf32>
    %107 = math.absf %106 : vector<256x128xf32>
    %cst_66 = arith.constant 1.000000e+00 : f32
    %108 = vector.broadcast %cst_66 : f32 to vector<256x128xf32>
    %109 = arith.subf %108, %107 : vector<256x128xf32>
    %cst_67 = arith.constant 0.000000e+00 : f32
    %110 = vector.broadcast %cst_67 : f32 to vector<256x128xf32>
    %111 = arith.maximumf %109, %110 : vector<256x128xf32>
    %112 = vector.broadcast %13 : vector<256x1xf32> to vector<256x128xf32>
    %113 = vector.broadcast %91 : vector<1x128xf32> to vector<256x128xf32>
    %114 = arith.subf %112, %113 : vector<256x128xf32>
    %115 = math.absf %114 : vector<256x128xf32>
    %cst_68 = arith.constant 1.000000e+00 : f32
    %116 = vector.broadcast %cst_68 : f32 to vector<256x128xf32>
    %117 = arith.subf %116, %115 : vector<256x128xf32>
    %cst_69 = arith.constant 0.000000e+00 : f32
    %118 = vector.broadcast %cst_69 : f32 to vector<256x128xf32>
    %119 = arith.maximumf %117, %118 : vector<256x128xf32>
    %120 = arith.mulf %111, %119 : vector<256x128xf32>
    %cst_70 = arith.constant dense<0.000000e+00> : vector<4x128xf32>
    %121 = tpu.matmul %11, %120, %cst_70 {dimension_numbers = #tpu.dot_dimension_numbers<[1], [0], [0], [1], [0, 0, 1, 1], [], []>} : vector<4x256xf32>, vector<256x128xf32>, vector<4x128xf32> -> vector<4x128xf32>
    %122 = vector.broadcast %103 : vector<1x128xf32> to vector<4x128xf32>
    %123 = arith.mulf %121, %122 : vector<4x128xf32>
    %c8 = arith.constant 8 : index
    %c0_71 = arith.constant 0 : index
    %124 = vector.load %arg13[%c8, %c0_71] : memref<36x128xf32, #tpu.memory_space<vmem>>, vector<4x128xf32>
    tpu.vector_store %arg13[%c8, %c0_71], %123 {strides = array<i32>} : memref<36x128xf32, #tpu.memory_space<vmem>>, vector<4x128xf32>,
    %c0_72 = arith.constant 0 : index
    %c3 = arith.constant 3 : index
    %c0_73 = arith.constant 0 : index
    %125 = vector.load %arg11[%c0_72, %c3, %c0_73] : memref<1x27x128xf32, #tpu.memory_space<vmem>>, vector<1x1x128xf32>
    %126 = vector.shape_cast %125 : vector<1x1x128xf32> to vector<1x128xf32>
    %c3_74 = arith.constant 3 : index
    %c0_75 = arith.constant 0 : index
    %127 = vector.load %arg5[%c3_74, %c0_75] : memref<9x128xf32, #tpu.memory_space<vmem>>, vector<1x128xf32>
    %128 = arith.addf %126, %127 : vector<1x128xf32>
    %c0_76 = arith.constant 0 : index
    %c12 = arith.constant 12 : index
    %c0_77 = arith.constant 0 : index
    %129 = vector.load %arg11[%c0_76, %c12, %c0_77] : memref<1x27x128xf32, #tpu.memory_space<vmem>>, vector<1x1x128xf32>
    %130 = vector.shape_cast %129 : vector<1x1x128xf32> to vector<1x128xf32>
    %c3_78 = arith.constant 3 : index
    %c0_79 = arith.constant 0 : index
    %131 = vector.load %arg6[%c3_78, %c0_79] : memref<9x128xf32, #tpu.memory_space<vmem>>, vector<1x128xf32>
    %132 = arith.addf %130, %131 : vector<1x128xf32>
    %c0_80 = arith.constant 0 : index
    %c21 = arith.constant 21 : index
    %c0_81 = arith.constant 0 : index
    %133 = vector.load %arg11[%c0_80, %c21, %c0_81] : memref<1x27x128xf32, #tpu.memory_space<vmem>>, vector<1x1x128xf32>
    %134 = vector.shape_cast %133 : vector<1x1x128xf32> to vector<1x128xf32>
    %cst_82 = arith.constant 0.000000e+00 : f32
    %135 = vector.broadcast %cst_82 : f32 to vector<1x128xf32>
    %136 = arith.subf %135, %134 : vector<1x128xf32>
    %137 = math.exp %136 : vector<1x128xf32>
    %cst_83 = arith.constant 1.000000e+00 : f32
    %138 = vector.broadcast %cst_83 : f32 to vector<1x128xf32>
    %139 = arith.addf %138, %137 : vector<1x128xf32>
    %140 = tpu.reciprocal %139 {approx = true} : vector<1x128xf32> -> vector<1x128xf32>
    %141 = vector.broadcast %12 : vector<256x1xf32> to vector<256x128xf32>
    %142 = vector.broadcast %132 : vector<1x128xf32> to vector<256x128xf32>
    %143 = arith.subf %141, %142 : vector<256x128xf32>
    %144 = math.absf %143 : vector<256x128xf32>
    %cst_84 = arith.constant 1.000000e+00 : f32
    %145 = vector.broadcast %cst_84 : f32 to vector<256x128xf32>
    %146 = arith.subf %145, %144 : vector<256x128xf32>
    %cst_85 = arith.constant 0.000000e+00 : f32
    %147 = vector.broadcast %cst_85 : f32 to vector<256x128xf32>
    %148 = arith.maximumf %146, %147 : vector<256x128xf32>
    %149 = vector.broadcast %13 : vector<256x1xf32> to vector<256x128xf32>
    %150 = vector.broadcast %128 : vector<1x128xf32> to vector<256x128xf32>
    %151 = arith.subf %149, %150 : vector<256x128xf32>
    %152 = math.absf %151 : vector<256x128xf32>
    %cst_86 = arith.constant 1.000000e+00 : f32
    %153 = vector.broadcast %cst_86 : f32 to vector<256x128xf32>
    %154 = arith.subf %153, %152 : vector<256x128xf32>
    %cst_87 = arith.constant 0.000000e+00 : f32
    %155 = vector.broadcast %cst_87 : f32 to vector<256x128xf32>
    %156 = arith.maximumf %154, %155 : vector<256x128xf32>
    %157 = arith.mulf %148, %156 : vector<256x128xf32>
    %cst_88 = arith.constant dense<0.000000e+00> : vector<4x128xf32>
    %158 = tpu.matmul %11, %157, %cst_88 {dimension_numbers = #tpu.dot_dimension_numbers<[1], [0], [0], [1], [0, 0, 1, 1], [], []>} : vector<4x256xf32>, vector<256x128xf32>, vector<4x128xf32> -> vector<4x128xf32>
    %159 = vector.broadcast %140 : vector<1x128xf32> to vector<4x128xf32>
    %160 = arith.mulf %158, %159 : vector<4x128xf32>
    %c12_89 = arith.constant 12 : index
    %c0_90 = arith.constant 0 : index
    %161 = vector.load %arg13[%c12_89, %c0_90] : memref<36x128xf32, #tpu.memory_space<vmem>>, vector<4x128xf32>
    tpu.vector_store %arg13[%c12_89, %c0_90], %160 {strides = array<i32>} : memref<36x128xf32, #tpu.memory_space<vmem>>, vector<4x128xf32>,
    %c0_91 = arith.constant 0 : index
    %c4_92 = arith.constant 4 : index
    %c0_93 = arith.constant 0 : index
    %162 = vector.load %arg11[%c0_91, %c4_92, %c0_93] : memref<1x27x128xf32, #tpu.memory_space<vmem>>, vector<1x1x128xf32>
    %163 = vector.shape_cast %162 : vector<1x1x128xf32> to vector<1x128xf32>
    %c4_94 = arith.constant 4 : index
    %c0_95 = arith.constant 0 : index
    %164 = vector.load %arg5[%c4_94, %c0_95] : memref<9x128xf32, #tpu.memory_space<vmem>>, vector<1x128xf32>
    %165 = arith.addf %163, %164 : vector<1x128xf32>
    %c0_96 = arith.constant 0 : index
    %c13 = arith.constant 13 : index
    %c0_97 = arith.constant 0 : index
    %166 = vector.load %arg11[%c0_96, %c13, %c0_97] : memref<1x27x128xf32, #tpu.memory_space<vmem>>, vector<1x1x128xf32>
    %167 = vector.shape_cast %166 : vector<1x1x128xf32> to vector<1x128xf32>
    %c4_98 = arith.constant 4 : index
    %c0_99 = arith.constant 0 : index
    %168 = vector.load %arg6[%c4_98, %c0_99] : memref<9x128xf32, #tpu.memory_space<vmem>>, vector<1x128xf32>
    %169 = arith.addf %167, %168 : vector<1x128xf32>
    %c0_100 = arith.constant 0 : index
    %c22 = arith.constant 22 : index
    %c0_101 = arith.constant 0 : index
    %170 = vector.load %arg11[%c0_100, %c22, %c0_101] : memref<1x27x128xf32, #tpu.memory_space<vmem>>, vector<1x1x128xf32>
    %171 = vector.shape_cast %170 : vector<1x1x128xf32> to vector<1x128xf32>
    %cst_102 = arith.constant 0.000000e+00 : f32
    %172 = vector.broadcast %cst_102 : f32 to vector<1x128xf32>
    %173 = arith.subf %172, %171 : vector<1x128xf32>
    %174 = math.exp %173 : vector<1x128xf32>
    %cst_103 = arith.constant 1.000000e+00 : f32
    %175 = vector.broadcast %cst_103 : f32 to vector<1x128xf32>
    %176 = arith.addf %175, %174 : vector<1x128xf32>
    %177 = tpu.reciprocal %176 {approx = true} : vector<1x128xf32> -> vector<1x128xf32>
    %178 = vector.broadcast %12 : vector<256x1xf32> to vector<256x128xf32>
    %179 = vector.broadcast %169 : vector<1x128xf32> to vector<256x128xf32>
    %180 = arith.subf %178, %179 : vector<256x128xf32>
    %181 = math.absf %180 : vector<256x128xf32>
    %cst_104 = arith.constant 1.000000e+00 : f32
    %182 = vector.broadcast %cst_104 : f32 to vector<256x128xf32>
    %183 = arith.subf %182, %181 : vector<256x128xf32>
    %cst_105 = arith.constant 0.000000e+00 : f32
    %184 = vector.broadcast %cst_105 : f32 to vector<256x128xf32>
    %185 = arith.maximumf %183, %184 : vector<256x128xf32>
    %186 = vector.broadcast %13 : vector<256x1xf32> to vector<256x128xf32>
    %187 = vector.broadcast %165 : vector<1x128xf32> to vector<256x128xf32>
    %188 = arith.subf %186, %187 : vector<256x128xf32>
    %189 = math.absf %188 : vector<256x128xf32>
    %cst_106 = arith.constant 1.000000e+00 : f32
    %190 = vector.broadcast %cst_106 : f32 to vector<256x128xf32>
    %191 = arith.subf %190, %189 : vector<256x128xf32>
    %cst_107 = arith.constant 0.000000e+00 : f32
    %192 = vector.broadcast %cst_107 : f32 to vector<256x128xf32>
    %193 = arith.maximumf %191, %192 : vector<256x128xf32>
    %194 = arith.mulf %185, %193 : vector<256x128xf32>
    %cst_108 = arith.constant dense<0.000000e+00> : vector<4x128xf32>
    %195 = tpu.matmul %11, %194, %cst_108 {dimension_numbers = #tpu.dot_dimension_numbers<[1], [0], [0], [1], [0, 0, 1, 1], [], []>} : vector<4x256xf32>, vector<256x128xf32>, vector<4x128xf32> -> vector<4x128xf32>
    %196 = vector.broadcast %177 : vector<1x128xf32> to vector<4x128xf32>
    %197 = arith.mulf %195, %196 : vector<4x128xf32>
    %c16 = arith.constant 16 : index
    %c0_109 = arith.constant 0 : index
    %198 = vector.load %arg13[%c16, %c0_109] : memref<36x128xf32, #tpu.memory_space<vmem>>, vector<4x128xf32>
    tpu.vector_store %arg13[%c16, %c0_109], %197 {strides = array<i32>} : memref<36x128xf32, #tpu.memory_space<vmem>>, vector<4x128xf32>,
    %c0_110 = arith.constant 0 : index
    %c5 = arith.constant 5 : index
    %c0_111 = arith.constant 0 : index
    %199 = vector.load %arg11[%c0_110, %c5, %c0_111] : memref<1x27x128xf32, #tpu.memory_space<vmem>>, vector<1x1x128xf32>
    %200 = vector.shape_cast %199 : vector<1x1x128xf32> to vector<1x128xf32>
    %c5_112 = arith.constant 5 : index
    %c0_113 = arith.constant 0 : index
    %201 = vector.load %arg5[%c5_112, %c0_113] : memref<9x128xf32, #tpu.memory_space<vmem>>, vector<1x128xf32>
    %202 = arith.addf %200, %201 : vector<1x128xf32>
    %c0_114 = arith.constant 0 : index
    %c14 = arith.constant 14 : index
    %c0_115 = arith.constant 0 : index
    %203 = vector.load %arg11[%c0_114, %c14, %c0_115] : memref<1x27x128xf32, #tpu.memory_space<vmem>>, vector<1x1x128xf32>
    %204 = vector.shape_cast %203 : vector<1x1x128xf32> to vector<1x128xf32>
    %c5_116 = arith.constant 5 : index
    %c0_117 = arith.constant 0 : index
    %205 = vector.load %arg6[%c5_116, %c0_117] : memref<9x128xf32, #tpu.memory_space<vmem>>, vector<1x128xf32>
    %206 = arith.addf %204, %205 : vector<1x128xf32>
    %c0_118 = arith.constant 0 : index
    %c23 = arith.constant 23 : index
    %c0_119 = arith.constant 0 : index
    %207 = vector.load %arg11[%c0_118, %c23, %c0_119] : memref<1x27x128xf32, #tpu.memory_space<vmem>>, vector<1x1x128xf32>
    %208 = vector.shape_cast %207 : vector<1x1x128xf32> to vector<1x128xf32>
    %cst_120 = arith.constant 0.000000e+00 : f32
    %209 = vector.broadcast %cst_120 : f32 to vector<1x128xf32>
    %210 = arith.subf %209, %208 : vector<1x128xf32>
    %211 = math.exp %210 : vector<1x128xf32>
    %cst_121 = arith.constant 1.000000e+00 : f32
    %212 = vector.broadcast %cst_121 : f32 to vector<1x128xf32>
    %213 = arith.addf %212, %211 : vector<1x128xf32>
    %214 = tpu.reciprocal %213 {approx = true} : vector<1x128xf32> -> vector<1x128xf32>
    %215 = vector.broadcast %12 : vector<256x1xf32> to vector<256x128xf32>
    %216 = vector.broadcast %206 : vector<1x128xf32> to vector<256x128xf32>
    %217 = arith.subf %215, %216 : vector<256x128xf32>
    %218 = math.absf %217 : vector<256x128xf32>
    %cst_122 = arith.constant 1.000000e+00 : f32
    %219 = vector.broadcast %cst_122 : f32 to vector<256x128xf32>
    %220 = arith.subf %219, %218 : vector<256x128xf32>
    %cst_123 = arith.constant 0.000000e+00 : f32
    %221 = vector.broadcast %cst_123 : f32 to vector<256x128xf32>
    %222 = arith.maximumf %220, %221 : vector<256x128xf32>
    %223 = vector.broadcast %13 : vector<256x1xf32> to vector<256x128xf32>
    %224 = vector.broadcast %202 : vector<1x128xf32> to vector<256x128xf32>
    %225 = arith.subf %223, %224 : vector<256x128xf32>
    %226 = math.absf %225 : vector<256x128xf32>
    %cst_124 = arith.constant 1.000000e+00 : f32
    %227 = vector.broadcast %cst_124 : f32 to vector<256x128xf32>
    %228 = arith.subf %227, %226 : vector<256x128xf32>
    %cst_125 = arith.constant 0.000000e+00 : f32
    %229 = vector.broadcast %cst_125 : f32 to vector<256x128xf32>
    %230 = arith.maximumf %228, %229 : vector<256x128xf32>
    %231 = arith.mulf %222, %230 : vector<256x128xf32>
    %cst_126 = arith.constant dense<0.000000e+00> : vector<4x128xf32>
    %232 = tpu.matmul %11, %231, %cst_126 {dimension_numbers = #tpu.dot_dimension_numbers<[1], [0], [0], [1], [0, 0, 1, 1], [], []>} : vector<4x256xf32>, vector<256x128xf32>, vector<4x128xf32> -> vector<4x128xf32>
    %233 = vector.broadcast %214 : vector<1x128xf32> to vector<4x128xf32>
    %234 = arith.mulf %232, %233 : vector<4x128xf32>
    %c20_127 = arith.constant 20 : index
    %c0_128 = arith.constant 0 : index
    %235 = vector.load %arg13[%c20_127, %c0_128] : memref<36x128xf32, #tpu.memory_space<vmem>>, vector<4x128xf32>
    tpu.vector_store %arg13[%c20_127, %c0_128], %234 {strides = array<i32>} : memref<36x128xf32, #tpu.memory_space<vmem>>, vector<4x128xf32>,
    %c0_129 = arith.constant 0 : index
    %c6 = arith.constant 6 : index
    %c0_130 = arith.constant 0 : index
    %236 = vector.load %arg11[%c0_129, %c6, %c0_130] : memref<1x27x128xf32, #tpu.memory_space<vmem>>, vector<1x1x128xf32>
    %237 = vector.shape_cast %236 : vector<1x1x128xf32> to vector<1x128xf32>
    %c6_131 = arith.constant 6 : index
    %c0_132 = arith.constant 0 : index
    %238 = vector.load %arg5[%c6_131, %c0_132] : memref<9x128xf32, #tpu.memory_space<vmem>>, vector<1x128xf32>
    %239 = arith.addf %237, %238 : vector<1x128xf32>
    %c0_133 = arith.constant 0 : index
    %c15 = arith.constant 15 : index
    %c0_134 = arith.constant 0 : index
    %240 = vector.load %arg11[%c0_133, %c15, %c0_134] : memref<1x27x128xf32, #tpu.memory_space<vmem>>, vector<1x1x128xf32>
    %241 = vector.shape_cast %240 : vector<1x1x128xf32> to vector<1x128xf32>
    %c6_135 = arith.constant 6 : index
    %c0_136 = arith.constant 0 : index
    %242 = vector.load %arg6[%c6_135, %c0_136] : memref<9x128xf32, #tpu.memory_space<vmem>>, vector<1x128xf32>
    %243 = arith.addf %241, %242 : vector<1x128xf32>
    %c0_137 = arith.constant 0 : index
    %c24 = arith.constant 24 : index
    %c0_138 = arith.constant 0 : index
    %244 = vector.load %arg11[%c0_137, %c24, %c0_138] : memref<1x27x128xf32, #tpu.memory_space<vmem>>, vector<1x1x128xf32>
    %245 = vector.shape_cast %244 : vector<1x1x128xf32> to vector<1x128xf32>
    %cst_139 = arith.constant 0.000000e+00 : f32
    %246 = vector.broadcast %cst_139 : f32 to vector<1x128xf32>
    %247 = arith.subf %246, %245 : vector<1x128xf32>
    %248 = math.exp %247 : vector<1x128xf32>
    %cst_140 = arith.constant 1.000000e+00 : f32
    %249 = vector.broadcast %cst_140 : f32 to vector<1x128xf32>
    %250 = arith.addf %249, %248 : vector<1x128xf32>
    %251 = tpu.reciprocal %250 {approx = true} : vector<1x128xf32> -> vector<1x128xf32>
    %252 = vector.broadcast %12 : vector<256x1xf32> to vector<256x128xf32>
    %253 = vector.broadcast %243 : vector<1x128xf32> to vector<256x128xf32>
    %254 = arith.subf %252, %253 : vector<256x128xf32>
    %255 = math.absf %254 : vector<256x128xf32>
    %cst_141 = arith.constant 1.000000e+00 : f32
    %256 = vector.broadcast %cst_141 : f32 to vector<256x128xf32>
    %257 = arith.subf %256, %255 : vector<256x128xf32>
    %cst_142 = arith.constant 0.000000e+00 : f32
    %258 = vector.broadcast %cst_142 : f32 to vector<256x128xf32>
    %259 = arith.maximumf %257, %258 : vector<256x128xf32>
    %260 = vector.broadcast %13 : vector<256x1xf32> to vector<256x128xf32>
    %261 = vector.broadcast %239 : vector<1x128xf32> to vector<256x128xf32>
    %262 = arith.subf %260, %261 : vector<256x128xf32>
    %263 = math.absf %262 : vector<256x128xf32>
    %cst_143 = arith.constant 1.000000e+00 : f32
    %264 = vector.broadcast %cst_143 : f32 to vector<256x128xf32>
    %265 = arith.subf %264, %263 : vector<256x128xf32>
    %cst_144 = arith.constant 0.000000e+00 : f32
    %266 = vector.broadcast %cst_144 : f32 to vector<256x128xf32>
    %267 = arith.maximumf %265, %266 : vector<256x128xf32>
    %268 = arith.mulf %259, %267 : vector<256x128xf32>
    %cst_145 = arith.constant dense<0.000000e+00> : vector<4x128xf32>
    %269 = tpu.matmul %11, %268, %cst_145 {dimension_numbers = #tpu.dot_dimension_numbers<[1], [0], [0], [1], [0, 0, 1, 1], [], []>} : vector<4x256xf32>, vector<256x128xf32>, vector<4x128xf32> -> vector<4x128xf32>
    %270 = vector.broadcast %251 : vector<1x128xf32> to vector<4x128xf32>
    %271 = arith.mulf %269, %270 : vector<4x128xf32>
    %c24_146 = arith.constant 24 : index
    %c0_147 = arith.constant 0 : index
    %272 = vector.load %arg13[%c24_146, %c0_147] : memref<36x128xf32, #tpu.memory_space<vmem>>, vector<4x128xf32>
    tpu.vector_store %arg13[%c24_146, %c0_147], %271 {strides = array<i32>} : memref<36x128xf32, #tpu.memory_space<vmem>>, vector<4x128xf32>,
    %c0_148 = arith.constant 0 : index
    %c7 = arith.constant 7 : index
    %c0_149 = arith.constant 0 : index
    %273 = vector.load %arg11[%c0_148, %c7, %c0_149] : memref<1x27x128xf32, #tpu.memory_space<vmem>>, vector<1x1x128xf32>
    %274 = vector.shape_cast %273 : vector<1x1x128xf32> to vector<1x128xf32>
    %c7_150 = arith.constant 7 : index
    %c0_151 = arith.constant 0 : index
    %275 = vector.load %arg5[%c7_150, %c0_151] : memref<9x128xf32, #tpu.memory_space<vmem>>, vector<1x128xf32>
    %276 = arith.addf %274, %275 : vector<1x128xf32>
    %c0_152 = arith.constant 0 : index
    %c16_153 = arith.constant 16 : index
    %c0_154 = arith.constant 0 : index
    %277 = vector.load %arg11[%c0_152, %c16_153, %c0_154] : memref<1x27x128xf32, #tpu.memory_space<vmem>>, vector<1x1x128xf32>
    %278 = vector.shape_cast %277 : vector<1x1x128xf32> to vector<1x128xf32>
    %c7_155 = arith.constant 7 : index
    %c0_156 = arith.constant 0 : index
    %279 = vector.load %arg6[%c7_155, %c0_156] : memref<9x128xf32, #tpu.memory_space<vmem>>, vector<1x128xf32>
    %280 = arith.addf %278, %279 : vector<1x128xf32>
    %c0_157 = arith.constant 0 : index
    %c25 = arith.constant 25 : index
    %c0_158 = arith.constant 0 : index
    %281 = vector.load %arg11[%c0_157, %c25, %c0_158] : memref<1x27x128xf32, #tpu.memory_space<vmem>>, vector<1x1x128xf32>
    %282 = vector.shape_cast %281 : vector<1x1x128xf32> to vector<1x128xf32>
    %cst_159 = arith.constant 0.000000e+00 : f32
    %283 = vector.broadcast %cst_159 : f32 to vector<1x128xf32>
    %284 = arith.subf %283, %282 : vector<1x128xf32>
    %285 = math.exp %284 : vector<1x128xf32>
    %cst_160 = arith.constant 1.000000e+00 : f32
    %286 = vector.broadcast %cst_160 : f32 to vector<1x128xf32>
    %287 = arith.addf %286, %285 : vector<1x128xf32>
    %288 = tpu.reciprocal %287 {approx = true} : vector<1x128xf32> -> vector<1x128xf32>
    %289 = vector.broadcast %12 : vector<256x1xf32> to vector<256x128xf32>
    %290 = vector.broadcast %280 : vector<1x128xf32> to vector<256x128xf32>
    %291 = arith.subf %289, %290 : vector<256x128xf32>
    %292 = math.absf %291 : vector<256x128xf32>
    %cst_161 = arith.constant 1.000000e+00 : f32
    %293 = vector.broadcast %cst_161 : f32 to vector<256x128xf32>
    %294 = arith.subf %293, %292 : vector<256x128xf32>
    %cst_162 = arith.constant 0.000000e+00 : f32
    %295 = vector.broadcast %cst_162 : f32 to vector<256x128xf32>
    %296 = arith.maximumf %294, %295 : vector<256x128xf32>
    %297 = vector.broadcast %13 : vector<256x1xf32> to vector<256x128xf32>
    %298 = vector.broadcast %276 : vector<1x128xf32> to vector<256x128xf32>
    %299 = arith.subf %297, %298 : vector<256x128xf32>
    %300 = math.absf %299 : vector<256x128xf32>
    %cst_163 = arith.constant 1.000000e+00 : f32
    %301 = vector.broadcast %cst_163 : f32 to vector<256x128xf32>
    %302 = arith.subf %301, %300 : vector<256x128xf32>
    %cst_164 = arith.constant 0.000000e+00 : f32
    %303 = vector.broadcast %cst_164 : f32 to vector<256x128xf32>
    %304 = arith.maximumf %302, %303 : vector<256x128xf32>
    %305 = arith.mulf %296, %304 : vector<256x128xf32>
    %cst_165 = arith.constant dense<0.000000e+00> : vector<4x128xf32>
    %306 = tpu.matmul %11, %305, %cst_165 {dimension_numbers = #tpu.dot_dimension_numbers<[1], [0], [0], [1], [0, 0, 1, 1], [], []>} : vector<4x256xf32>, vector<256x128xf32>, vector<4x128xf32> -> vector<4x128xf32>
    %307 = vector.broadcast %288 : vector<1x128xf32> to vector<4x128xf32>
    %308 = arith.mulf %306, %307 : vector<4x128xf32>
    %c28 = arith.constant 28 : index
    %c0_166 = arith.constant 0 : index
    %309 = vector.load %arg13[%c28, %c0_166] : memref<36x128xf32, #tpu.memory_space<vmem>>, vector<4x128xf32>
    tpu.vector_store %arg13[%c28, %c0_166], %308 {strides = array<i32>} : memref<36x128xf32, #tpu.memory_space<vmem>>, vector<4x128xf32>,
    %c0_167 = arith.constant 0 : index
    %c8_168 = arith.constant 8 : index
    %c0_169 = arith.constant 0 : index
    %310 = vector.load %arg11[%c0_167, %c8_168, %c0_169] : memref<1x27x128xf32, #tpu.memory_space<vmem>>, vector<1x1x128xf32>
    %311 = vector.shape_cast %310 : vector<1x1x128xf32> to vector<1x128xf32>
    %c8_170 = arith.constant 8 : index
    %c0_171 = arith.constant 0 : index
    %312 = vector.load %arg5[%c8_170, %c0_171] : memref<9x128xf32, #tpu.memory_space<vmem>>, vector<1x128xf32>
    %313 = arith.addf %311, %312 : vector<1x128xf32>
    %c0_172 = arith.constant 0 : index
    %c17 = arith.constant 17 : index
    %c0_173 = arith.constant 0 : index
    %314 = vector.load %arg11[%c0_172, %c17, %c0_173] : memref<1x27x128xf32, #tpu.memory_space<vmem>>, vector<1x1x128xf32>
    %315 = vector.shape_cast %314 : vector<1x1x128xf32> to vector<1x128xf32>
    %c8_174 = arith.constant 8 : index
    %c0_175 = arith.constant 0 : index
    %316 = vector.load %arg6[%c8_174, %c0_175] : memref<9x128xf32, #tpu.memory_space<vmem>>, vector<1x128xf32>
    %317 = arith.addf %315, %316 : vector<1x128xf32>
    %c0_176 = arith.constant 0 : index
    %c26 = arith.constant 26 : index
    %c0_177 = arith.constant 0 : index
    %318 = vector.load %arg11[%c0_176, %c26, %c0_177] : memref<1x27x128xf32, #tpu.memory_space<vmem>>, vector<1x1x128xf32>
    %319 = vector.shape_cast %318 : vector<1x1x128xf32> to vector<1x128xf32>
    %cst_178 = arith.constant 0.000000e+00 : f32
    %320 = vector.broadcast %cst_178 : f32 to vector<1x128xf32>
    %321 = arith.subf %320, %319 : vector<1x128xf32>
    %322 = math.exp %321 : vector<1x128xf32>
    %cst_179 = arith.constant 1.000000e+00 : f32
    %323 = vector.broadcast %cst_179 : f32 to vector<1x128xf32>
    %324 = arith.addf %323, %322 : vector<1x128xf32>
    %325 = tpu.reciprocal %324 {approx = true} : vector<1x128xf32> -> vector<1x128xf32>
    %326 = vector.broadcast %12 : vector<256x1xf32> to vector<256x128xf32>
    %327 = vector.broadcast %317 : vector<1x128xf32> to vector<256x128xf32>
    %328 = arith.subf %326, %327 : vector<256x128xf32>
    %329 = math.absf %328 : vector<256x128xf32>
    %cst_180 = arith.constant 1.000000e+00 : f32
    %330 = vector.broadcast %cst_180 : f32 to vector<256x128xf32>
    %331 = arith.subf %330, %329 : vector<256x128xf32>
    %cst_181 = arith.constant 0.000000e+00 : f32
    %332 = vector.broadcast %cst_181 : f32 to vector<256x128xf32>
    %333 = arith.maximumf %331, %332 : vector<256x128xf32>
    %334 = vector.broadcast %13 : vector<256x1xf32> to vector<256x128xf32>
    %335 = vector.broadcast %313 : vector<1x128xf32> to vector<256x128xf32>
    %336 = arith.subf %334, %335 : vector<256x128xf32>
    %337 = math.absf %336 : vector<256x128xf32>
    %cst_182 = arith.constant 1.000000e+00 : f32
    %338 = vector.broadcast %cst_182 : f32 to vector<256x128xf32>
    %339 = arith.subf %338, %337 : vector<256x128xf32>
    %cst_183 = arith.constant 0.000000e+00 : f32
    %340 = vector.broadcast %cst_183 : f32 to vector<256x128xf32>
    %341 = arith.maximumf %339, %340 : vector<256x128xf32>
    %342 = arith.mulf %333, %341 : vector<256x128xf32>
    %cst_184 = arith.constant dense<0.000000e+00> : vector<4x128xf32>
    %343 = tpu.matmul %11, %342, %cst_184 {dimension_numbers = #tpu.dot_dimension_numbers<[1], [0], [0], [1], [0, 0, 1, 1], [], []>} : vector<4x256xf32>, vector<256x128xf32>, vector<4x128xf32> -> vector<4x128xf32>
    %344 = vector.broadcast %325 : vector<1x128xf32> to vector<4x128xf32>
    %345 = arith.mulf %343, %344 : vector<4x128xf32>
    %c32 = arith.constant 32 : index
    %c0_185 = arith.constant 0 : index
    %346 = vector.load %arg13[%c32, %c0_185] : memref<36x128xf32, #tpu.memory_space<vmem>>, vector<4x128xf32>
    tpu.vector_store %arg13[%c32, %c0_185], %345 {strides = array<i32>} : memref<36x128xf32, #tpu.memory_space<vmem>>, vector<4x128xf32>,
    %c0_186 = arith.constant 0 : index
    %c0_187 = arith.constant 0 : index
    %347 = vector.load %arg10[%c0_186, %c0_187] : memref<8x36xf32, #tpu.memory_space<vmem>>, vector<8x36xf32>
    %c0_188 = arith.constant 0 : index
    %c0_189 = arith.constant 0 : index
    %348 = vector.load %arg13[%c0_188, %c0_189] : memref<36x128xf32, #tpu.memory_space<vmem>>, vector<36x128xf32>
    %cst_190 = arith.constant dense<0.000000e+00> : vector<8x128xf32>
    %349 = tpu.matmul %347, %348, %cst_190 {dimension_numbers = #tpu.dot_dimension_numbers<[1], [0], [0], [1], [0, 0, 1, 1], [], []>} : vector<8x36xf32>, vector<36x128xf32>, vector<8x128xf32> -> vector<8x128xf32>
    %c0_191 = arith.constant 0 : index
    %c0_192 = arith.constant 0 : index
    %c0_193 = arith.constant 0 : index
    %350 = vector.load %arg12[%c0_191, %c0_192, %c0_193] : memref<1x8x128xf32, #tpu.memory_space<vmem>>, vector<1x8x128xf32>
    %351 = vector.shape_cast %350 : vector<1x8x128xf32> to vector<8x128xf32>
    %352 = vector.shape_cast %349 : vector<8x128xf32> to vector<1x8x128xf32>
    tpu.vector_store %arg12[%c0_191, %c0_192, %c0_193], %352 {strides = array<i32>} : memref<1x8x128xf32, #tpu.memory_space<vmem>>, vector<1x8x128xf32>,
    return
  }
  func.func @transform_0(%arg0: i32, %arg1: i32) -> (i32, i32, i32) {
    %c0_i32 = arith.constant 0 : i32
    %c0_i32_0 = arith.constant 0 : i32
    return %arg0, %c0_i32, %arg1 : i32, i32, i32
  }
  func.func @transform_1(%arg0: i32, %arg1: i32) -> (i32, i32) {
    %c0_i32 = arith.constant 0 : i32
    %c0_i32_0 = arith.constant 0 : i32
    %c0_i32_1 = arith.constant 0 : i32
    return %c0_i32, %c0_i32_0 : i32, i32
  }
  func.func @transform_2(%arg0: i32, %arg1: i32) -> (i32, i32) {
    %c0_i32 = arith.constant 0 : i32
    %c0_i32_0 = arith.constant 0 : i32
    %c0_i32_1 = arith.constant 0 : i32
    return %c0_i32, %c0_i32_0 : i32, i32
  }
  func.func @transform_3(%arg0: i32, %arg1: i32) -> (i32, i32) {
    %c0_i32 = arith.constant 0 : i32
    %c0_i32_0 = arith.constant 0 : i32
    return %c0_i32, %arg1 : i32, i32
  }
  func.func @transform_4(%arg0: i32, %arg1: i32) -> (i32, i32) {
    %c0_i32 = arith.constant 0 : i32
    %c0_i32_0 = arith.constant 0 : i32
    return %c0_i32, %arg1 : i32, i32
  }
  func.func @transform_5(%arg0: i32, %arg1: i32) -> (i32, i32) {
    %c0_i32 = arith.constant 0 : i32
    %c0_i32_0 = arith.constant 0 : i32
    %c0_i32_1 = arith.constant 0 : i32
    return %c0_i32, %c0_i32_0 : i32, i32
  }
  func.func @transform_6(%arg0: i32, %arg1: i32) -> (i32, i32) {
    %c0_i32 = arith.constant 0 : i32
    %c0_i32_0 = arith.constant 0 : i32
    %c0_i32_1 = arith.constant 0 : i32
    return %c0_i32, %c0_i32_0 : i32, i32
  }
  func.func @transform_7(%arg0: i32, %arg1: i32) -> (i32, i32, i32) {
    %c0_i32 = arith.constant 0 : i32
    %c0_i32_0 = arith.constant 0 : i32
    %c0_i32_1 = arith.constant 0 : i32
    return %arg0, %c0_i32, %c0_i32_0 : i32, i32, i32
  }
  func.func @transform_8(%arg0: i32, %arg1: i32) -> (i32, i32) {
    %c0_i32 = arith.constant 0 : i32
    %c0_i32_0 = arith.constant 0 : i32
    %c0_i32_1 = arith.constant 0 : i32
    return %c0_i32, %c0_i32_0 : i32, i32
  }
  func.func @transform_9(%arg0: i32, %arg1: i32) -> (i32, i32, i32) {
    %c0_i32 = arith.constant 0 : i32
    %c0_i32_0 = arith.constant 0 : i32
    return %arg0, %c0_i32, %arg1 : i32, i32, i32
  }
  func.func @transform_10(%arg0: i32, %arg1: i32) -> (i32, i32, i32) {
    %c0_i32 = arith.constant 0 : i32
    %c0_i32_0 = arith.constant 0 : i32
    return %arg0, %c0_i32, %arg1 : i32, i32, i32
  }
}

</mosaic_0001>

<llo_original>
// kernel: tpu_custom_call.1
$region0: #{tpu_custom_call.1}
  #allocation0 [shape = 'u32[]', space=smem, size = 0x4, offset = 0x4, fixed_abs, tag = 'smem constant byte address 0x4 - core index']
  #allocation1 [shape = 'u32[144,128]{1,0:T(1,128)}', space=vmem, size = 0x12000, scoped, tag = 'internal scratch']
  #allocation2 [shape = 'f32[36,128]{1,0:T(8,128)}', space=vmem, size = 0x5000, scoped, tag = 'scratch operand']
  %s0 = inlined_call_operand.vmem [shape: f32[2,36,256], index: 0, kind: input, shape index: {}]
  %s1 = inlined_call_operand.vmem [shape: f32[27,36], index: 1, kind: input, shape index: {}]
  %s2 = inlined_call_operand.vmem [shape: f32[27,1], index: 2, kind: input, shape index: {}]
  %s3 = inlined_call_operand.vmem [shape: f32[9,256], index: 3, kind: input, shape index: {}]
  %s4 = inlined_call_operand.vmem [shape: f32[9,256], index: 4, kind: input, shape index: {}]
  %s5 = inlined_call_operand.vmem [shape: f32[256,1], index: 5, kind: input, shape index: {}]
  %s6 = inlined_call_operand.vmem [shape: f32[256,1], index: 6, kind: input, shape index: {}]
  %s7 = inlined_call_operand.vmem [shape: f32[2,4,256], index: 7, kind: input, shape index: {}]
  %s8 = inlined_call_operand.vmem [shape: f32[8,36], index: 8, kind: input, shape index: {}]
  %s9 = inlined_call_operand.vmem [shape: f32[2,27,256], index: 9, kind: output, shape index: {0}]
  %s10 = inlined_call_operand.hbm [shape: f32[2,8,256], index: 10, kind: output, shape index: {1}]
  %11 = xla_tuple %s9, %s10
  %s12 = sld [smem:[#allocation0]]
  $region225: #{tpu_custom_call.1} parent=0
    _
  %s14 = ssub.s32 1, %s12
  %s15 = scalar_select 0, %s14, %s12
  $region1: #{tpu_custom_call.1} parent=0
    #allocation3 [shape = 'u8[40960]{0}', space=vmem, size = 0xa000, scoped, tag = 'input window, operand 0']
    #allocation4 [shape = 'u8[16384]{0}', space=vmem, size = 0x4000, scoped, tag = 'input window, operand 3']
    #allocation5 [shape = 'u8[16384]{0}', space=vmem, size = 0x4000, scoped, tag = 'input window, operand 4']
    #allocation6 [shape = 'u8[32768]{0}', space=vmem, size = 0x8000, scoped, tag = 'output window, operand 0']
    #allocation7 [shape = 'u8[8192]{0}', space=vmem, size = 0x2000, scoped, tag = 'output window, operand 1']
    #allocation8 [shape = 's32[2]{0}', space=sflag, size = 0x8, scoped, tag = 'scoped memory for tpu_custom_call.1']
    %16 = vsyncpa [#allocation8], 0
    %s17 = scalar_lea.sflag [#allocation8], 1
    %18 = vsyncpa %s17, 0
    loop: start=0, step=1, limit=6
    $region2: #{tpu_custom_call.1} parent=1 // loop_pre_header
      _
    $region3: #{tpu_custom_call.1} parent=1 // loop_header
      %s20 = sphi 0, %s24
      %p21 = scmp.ge.s32.totalorder %s20, 6
      %s27 = sphi 0, %s39
      %s28 = sphi 0, %s35
      %s29 = sphi 0, %s27
      %s30 = sphi 0, %s28
      %s31 = sphi 0, %s29
      %s32 = sphi 0, %s30
      %s44 = sphi 0, %s46
      %s47 = sphi 0, %s44
      %s48 = sphi 0, %s47
      %s64 = sphi 0, %s48
      %s68 = sphi 0, %s68
      %s70 = sphi 0, %s68
      %s71 = sphi 0, %s70
      %s85 = sphi 0, %s71
      %s89 = sphi 0, %s89
      %s91 = sphi 0, %s89
      %s92 = sphi 0, %s91
      %s106 = sphi 0, %s92
      %s112 = sphi 0, %s114
      %s115 = sphi 0, %s112
      %s116 = sphi 0, %s115
      %s132 = sphi 0, %s116
      %s138 = sphi 0, %s140
      %s141 = sphi 0, %s138
      %s142 = sphi 0, %s141
      %s158 = sphi 0, %s142
      %s162 = sphi 0, %s162
      %s164 = sphi 0, %s162
      %s165 = sphi 0, %s164
      %s179 = sphi 0, %s165
      %s183 = sphi 0, %s183
      %s185 = sphi 0, %s183
      %s186 = sphi 0, %s185
      %s200 = sphi 0, %s186
      %s206 = sphi 0, %s208
      %s209 = sphi 0, %s206
      %s210 = sphi 0, %s209
      %s226 = sphi 0, %s210
      %s230 = sphi 0, %s230
      %s232 = sphi 0, %s230
      %s233 = sphi 0, %s232
      %s247 = sphi 0, %s233
      %s255 = sphi 0, %s257
      %s258 = sphi 0, %s255
      %s259 = sphi 0, %s258
      %s275 = sphi 0, %s259
      %s283 = sphi 0, %s285
      %s286 = sphi 0, %s283
      %s287 = sphi 0, %s286
      %s303 = sphi 0, %s287
    $region4: #{tpu_custom_call.1} parent=1 // loop_header_branch
      %23 = sbr.rel (%p21) target = $region8
    $region5: #{tpu_custom_call.1} parent=1 // loop_body
      %s25 = ssub.s32 %s20, 1
      %s26 = ssub.s32 %s20, 2
      %s33 = sadd.s32 1, %s28
      %p34 = scmp.ge.s32.totalorder %s33, 2
      %s35 = scalar_select %p34, 0, %s33
      %s36 = sadd.s32 1, %s27
      %s37 = scalar_select %p34, %s36, %s27
      %p38 = scmp.ge.s32.totalorder %s37, 2
      %s39 = scalar_select %p38, 0, %s37
      %s40 = ssub.s32 %s27, %s39
      %s41 = ssub.s32 %s28, %s35
      %s42 = sor.u32 %s40, %s41
      %p43 = scmp.eq.s32.totalorder %s42, 0
      %s45 = sadd.s32 %s44, 1
      %s46 = scalar_select %p43, %s44, %s45
      %p49 = pneg %p43
      %p50 = scmp.eq.s32.totalorder %s20, 3
      %p51 = por %p49, %p50
      %p52 = scmp.ne.s32.totalorder %s44, %s47
      %p53 = scmp.eq.s32.totalorder %s20, 0
      %p54 = por %p52, %p53
      %p55 = scmp.ne.s32.totalorder %s44, %s47
      %p56 = scmp.eq.s32.totalorder %s25, 3
      %p57 = por %p55, %p56
      %p58 = scmp.ne.s32.totalorder %s47, %s48
      %p59 = scmp.eq.s32.totalorder %s25, 0
      %p60 = por %p58, %p59
      %p61 = scmp.ne.s32.totalorder %s47, %s48
      %p62 = scmp.eq.s32.totalorder %s26, 3
      %p63 = por %p61, %p62
      %p65 = scmp.ne.s32.totalorder %s48, %s64
      %p66 = scmp.eq.s32.totalorder %s26, 0
      %p67 = por %p65, %p66
      %s69 = sadd.s32 %s68, 1
      %p72 = scmp.eq.s32.totalorder %s20, 3
      %p73 = scmp.ne.s32.totalorder %s68, %s70
      %p74 = scmp.eq.s32.totalorder %s20, 0
      %p75 = por %p73, %p74
      %p76 = scmp.ne.s32.totalorder %s68, %s70
      %p77 = scmp.eq.s32.totalorder %s25, 3
      %p78 = por %p76, %p77
      %p79 = scmp.ne.s32.totalorder %s70, %s71
      %p80 = scmp.eq.s32.totalorder %s25, 0
      %p81 = por %p79, %p80
      %p82 = scmp.ne.s32.totalorder %s70, %s71
      %p83 = scmp.eq.s32.totalorder %s26, 3
      %p84 = por %p82, %p83
      %p86 = scmp.ne.s32.totalorder %s71, %s85
      %p87 = scmp.eq.s32.totalorder %s26, 0
      %p88 = por %p86, %p87
      %s90 = sadd.s32 %s89, 1
      %p93 = scmp.eq.s32.totalorder %s20, 3
      %p94 = scmp.ne.s32.totalorder %s89, %s91
      %p95 = scmp.eq.s32.totalorder %s20, 0
      %p96 = por %p94, %p95
      %p97 = scmp.ne.s32.totalorder %s89, %s91
      %p98 = scmp.eq.s32.totalorder %s25, 3
      %p99 = por %p97, %p98
      %p100 = scmp.ne.s32.totalorder %s91, %s92
      %p101 = scmp.eq.s32.totalorder %s25, 0
      %p102 = por %p100, %p101
      %p103 = scmp.ne.s32.totalorder %s91, %s92
      %p104 = scmp.eq.s32.totalorder %s26, 3
      %p105 = por %p103, %p104
      %p107 = scmp.ne.s32.totalorder %s92, %s106
      %p108 = scmp.eq.s32.totalorder %s26, 0
      %p109 = por %p107, %p108
      %s110 = ssub.s32 %s28, %s35
      %p111 = scmp.eq.s32.totalorder %s110, 0
      %s113 = sadd.s32 %s112, 1
      %s114 = scalar_select %p111, %s112, %s113
      %p117 = pneg %p111
      %p118 = scmp.eq.s32.totalorder %s20, 3
      %p119 = por %p117, %p118
      %p120 = scmp.ne.s32.totalorder %s112, %s115
      %p121 = scmp.eq.s32.totalorder %s20, 0
      %p122 = por %p120, %p121
      %p123 = scmp.ne.s32.totalorder %s112, %s115
      %p124 = scmp.eq.s32.totalorder %s25, 3
      %p125 = por %p123, %p124
      %p126 = scmp.ne.s32.totalorder %s115, %s116
      %p127 = scmp.eq.s32.totalorder %s25, 0
      %p128 = por %p126, %p127
      %p129 = scmp.ne.s32.totalorder %s115, %s116
      %p130 = scmp.eq.s32.totalorder %s26, 3
      %p131 = por %p129, %p130
      %p133 = scmp.ne.s32.totalorder %s116, %s132
      %p134 = scmp.eq.s32.totalorder %s26, 0
      %p135 = por %p133, %p134
      %s136 = ssub.s32 %s28, %s35
      %p137 = scmp.eq.s32.totalorder %s136, 0
      %s139 = sadd.s32 %s138, 1
      %s140 = scalar_select %p137, %s138, %s139
      %p143 = pneg %p137
      %p144 = scmp.eq.s32.totalorder %s20, 3
      %p145 = por %p143, %p144
      %p146 = scmp.ne.s32.totalorder %s138, %s141
      %p147 = scmp.eq.s32.totalorder %s20, 0
      %p148 = por %p146, %p147
      %p149 = scmp.ne.s32.totalorder %s138, %s141
      %p150 = scmp.eq.s32.totalorder %s25, 3
      %p151 = por %p149, %p150
      %p152 = scmp.ne.s32.totalorder %s141, %s142
      %p153 = scmp.eq.s32.totalorder %s25, 0
      %p154 = por %p152, %p153
      %p155 = scmp.ne.s32.totalorder %s141, %s142
      %p156 = scmp.eq.s32.totalorder %s26, 3
      %p157 = por %p155, %p156
      %p159 = scmp.ne.s32.totalorder %s142, %s158
      %p160 = scmp.eq.s32.totalorder %s26, 0
      %p161 = por %p159, %p160
      %s163 = sadd.s32 %s162, 1
      %p166 = scmp.eq.s32.totalorder %s20, 3
      %p167 = scmp.ne.s32.totalorder %s162, %s164
      %p168 = scmp.eq.s32.totalorder %s20, 0
      %p169 = por %p167, %p168
      %p170 = scmp.ne.s32.totalorder %s162, %s164
      %p171 = scmp.eq.s32.totalorder %s25, 3
      %p172 = por %p170, %p171
      %p173 = scmp.ne.s32.totalorder %s164, %s165
      %p174 = scmp.eq.s32.totalorder %s25, 0
      %p175 = por %p173, %p174
      %p176 = scmp.ne.s32.totalorder %s164, %s165
      %p177 = scmp.eq.s32.totalorder %s26, 3
      %p178 = por %p176, %p177
      %p180 = scmp.ne.s32.totalorder %s165, %s179
      %p181 = scmp.eq.s32.totalorder %s26, 0
      %p182 = por %p180, %p181
      %s184 = sadd.s32 %s183, 1
      %p187 = scmp.eq.s32.totalorder %s20, 3
      %p188 = scmp.ne.s32.totalorder %s183, %s185
      %p189 = scmp.eq.s32.totalorder %s20, 0
      %p190 = por %p188, %p189
      %p191 = scmp.ne.s32.totalorder %s183, %s185
      %p192 = scmp.eq.s32.totalorder %s25, 3
      %p193 = por %p191, %p192
      %p194 = scmp.ne.s32.totalorder %s185, %s186
      %p195 = scmp.eq.s32.totalorder %s25, 0
      %p196 = por %p194, %p195
      %p197 = scmp.ne.s32.totalorder %s185, %s186
      %p198 = scmp.eq.s32.totalorder %s26, 3
      %p199 = por %p197, %p198
      %p201 = scmp.ne.s32.totalorder %s186, %s200
      %p202 = scmp.eq.s32.totalorder %s26, 0
      %p203 = por %p201, %p202
      %s204 = ssub.s32 %s27, %s39
      %p205 = scmp.eq.s32.totalorder %s204, 0
      %s207 = sadd.s32 %s206, 1
      %s208 = scalar_select %p205, %s206, %s207
      %p211 = pneg %p205
      %p212 = scmp.eq.s32.totalorder %s20, 3
      %p213 = por %p211, %p212
      %p214 = scmp.ne.s32.totalorder %s206, %s209
      %p215 = scmp.eq.s32.totalorder %s20, 0
      %p216 = por %p214, %p215
      %p217 = scmp.ne.s32.totalorder %s206, %s209
      %p218 = scmp.eq.s32.totalorder %s25, 3
      %p219 = por %p217, %p218
      %p220 = scmp.ne.s32.totalorder %s209, %s210
      %p221 = scmp.eq.s32.totalorder %s25, 0
      %p222 = por %p220, %p221
      %p223 = scmp.ne.s32.totalorder %s209, %s210
      %p224 = scmp.eq.s32.totalorder %s26, 3
      %p225 = por %p223, %p224
      %p227 = scmp.ne.s32.totalorder %s210, %s226
      %p228 = scmp.eq.s32.totalorder %s26, 0
      %p229 = por %p227, %p228
      %s231 = sadd.s32 %s230, 1
      %p234 = scmp.eq.s32.totalorder %s20, 3
      %p235 = scmp.ne.s32.totalorder %s230, %s232
      %p236 = scmp.eq.s32.totalorder %s20, 0
      %p237 = por %p235, %p236
      %p238 = scmp.ne.s32.totalorder %s230, %s232
      %p239 = scmp.eq.s32.totalorder %s25, 3
      %p240 = por %p238, %p239
      %p241 = scmp.ne.s32.totalorder %s232, %s233
      %p242 = scmp.eq.s32.totalorder %s25, 0
      %p243 = por %p241, %p242
      %p244 = scmp.ne.s32.totalorder %s232, %s233
      %p245 = scmp.eq.s32.totalorder %s26, 3
      %p246 = por %p244, %p245
      %p248 = scmp.ne.s32.totalorder %s233, %s247
      %p249 = scmp.eq.s32.totalorder %s26, 0
      %p250 = por %p248, %p249
      %s251 = ssub.s32 %s27, %s39
      %s252 = ssub.s32 %s28, %s35
      %s253 = sor.u32 %s251, %s252
      %p254 = scmp.eq.s32.totalorder %s253, 0
      %s256 = sadd.s32 %s255, 1
      %s257 = scalar_select %p254, %s255, %s256
      %p260 = pneg %p254
      %p261 = scmp.eq.s32.totalorder %s20, 3
      %p262 = por %p260, %p261
      %p263 = scmp.ne.s32.totalorder %s255, %s258
      %p264 = scmp.eq.s32.totalorder %s20, 0
      %p265 = por %p263, %p264
      %p266 = scmp.ne.s32.totalorder %s255, %s258
      %p267 = scmp.eq.s32.totalorder %s25, 3
      %p268 = por %p266, %p267
      %p269 = scmp.ne.s32.totalorder %s258, %s259
      %p270 = scmp.eq.s32.totalorder %s25, 0
      %p271 = por %p269, %p270
      %p272 = scmp.ne.s32.totalorder %s258, %s259
      %p273 = scmp.eq.s32.totalorder %s26, 3
      %p274 = por %p272, %p273
      %p276 = scmp.ne.s32.totalorder %s259, %s275
      %p277 = scmp.eq.s32.totalorder %s26, 0
      %p278 = por %p276, %p277
      %s279 = ssub.s32 %s27, %s39
      %s280 = ssub.s32 %s28, %s35
      %s281 = sor.u32 %s279, %s280
      %p282 = scmp.eq.s32.totalorder %s281, 0
      %s284 = sadd.s32 %s283, 1
      %s285 = scalar_select %p282, %s283, %s284
      %p288 = pneg %p282
      %p289 = scmp.eq.s32.totalorder %s20, 3
      %p290 = por %p288, %p289
      %p291 = scmp.ne.s32.totalorder %s283, %s286
      %p292 = scmp.eq.s32.totalorder %s20, 0
      %p293 = por %p291, %p292
      %p294 = scmp.ne.s32.totalorder %s283, %s286
      %p295 = scmp.eq.s32.totalorder %s25, 3
      %p296 = por %p294, %p295
      %p297 = scmp.ne.s32.totalorder %s286, %s287
      %p298 = scmp.eq.s32.totalorder %s25, 0
      %p299 = por %p297, %p298
      %p300 = scmp.ne.s32.totalorder %s286, %s287
      %p301 = scmp.eq.s32.totalorder %s26, 3
      %p302 = por %p300, %p301
      %p304 = scmp.ne.s32.totalorder %s287, %s303
      %p305 = scmp.eq.s32.totalorder %s26, 0
      %p306 = por %p304, %p305
      %p307 = scmp.le.s32.totalorder 1, %s20
      %p308 = scmp.lt.s32.totalorder %s20, 5
      %p309 = pnand %p307, %p308
      %p310 = pneg %p309
      // Predicated region
      $region9: #{tpu_custom_call.1} parent=5 // pred_check
        _
      $region10: #{tpu_custom_call.1} parent=5 // pred_check_branch
        %312 = sbr.rel (%p309) target = $region12
      $region11: #{tpu_custom_call.1} parent=5 // pred_region
        %s313 = ssub.s32 %s20, 1
        // Predicated region
        $region13: #{tpu_custom_call.1} parent=11 // pred_check
          %p314 = pneg %p81
        $region14: #{tpu_custom_call.1} parent=11 // pred_check_branch
          %316 = sbr.rel (%p314) target = $region16
        $region15: #{tpu_custom_call.1} parent=11 // pred_region
          _
        $region16: #{tpu_custom_call.1} parent=11 // pred_fallthru
          _
        // Predicated region
        $region17: #{tpu_custom_call.1} parent=11 // pred_check
          %p317 = pneg %p102
        $region18: #{tpu_custom_call.1} parent=11 // pred_check_branch
          %319 = sbr.rel (%p317) target = $region20
        $region19: #{tpu_custom_call.1} parent=11 // pred_region
          _
        $region20: #{tpu_custom_call.1} parent=11 // pred_fallthru
          _
        // Predicated region
        $region21: #{tpu_custom_call.1} parent=11 // pred_check
          %p320 = pneg %p175
        $region22: #{tpu_custom_call.1} parent=11 // pred_check_branch
          %322 = sbr.rel (%p320) target = $region24
        $region23: #{tpu_custom_call.1} parent=11 // pred_region
          _
        $region24: #{tpu_custom_call.1} parent=11 // pred_fallthru
          _
        // Predicated region
        $region25: #{tpu_custom_call.1} parent=11 // pred_check
          %p323 = pneg %p196
        $region26: #{tpu_custom_call.1} parent=11 // pred_check_branch
          %325 = sbr.rel (%p323) target = $region28
        $region27: #{tpu_custom_call.1} parent=11 // pred_region
          _
        $region28: #{tpu_custom_call.1} parent=11 // pred_fallthru
          _
        // Predicated region
        $region29: #{tpu_custom_call.1} parent=11 // pred_check
          %p326 = pneg %p243
        $region30: #{tpu_custom_call.1} parent=11 // pred_check_branch
          %328 = sbr.rel (%p326) target = $region32
        $region31: #{tpu_custom_call.1} parent=11 // pred_region
          _
        $region32: #{tpu_custom_call.1} parent=11 // pred_fallthru
          _
      $region12: #{tpu_custom_call.1} parent=5 // pred_fallthru
        _
      %p329 = scmp.lt.s32.totalorder %s20, 4
      // Predicated region
      $region33: #{tpu_custom_call.1} parent=5 // pred_check
        %p330 = pneg %p329
      $region34: #{tpu_custom_call.1} parent=5 // pred_check_branch
        %332 = sbr.rel (%p330) target = $region36
      $region35: #{tpu_custom_call.1} parent=5 // pred_region
        // Predicated region
        $region37: #{tpu_custom_call.1} parent=35 // pred_check
          %p333 = pneg %p54
        $region38: #{tpu_custom_call.1} parent=35 // pred_check_branch
          %335 = sbr.rel (%p333) target = $region40
        $region39: #{tpu_custom_call.1} parent=35 // pred_region
          %s336 = sand.u32 %s44, 1
          %s337 = sand.u32 %s44, 1
          %s338 = smul.addr %s337, 40
          %s339 = scalar_lea.vmem [#allocation3], %s338
          %s340 = smul.addr %s27, 10
          %s341 = sadd.s32 %s28, %s340
          %s342 = smul.addr %s341, 8
          %s343 = scalar_lea.vmem %s0, %s342
          // Predicated region
          $region41: #{tpu_custom_call.1} parent=39 // pred_check
            _
          $region42: #{tpu_custom_call.1} parent=39 // pred_check_branch
            %345 = sbr.rel (0) target = $region44
          $region43: #{tpu_custom_call.1} parent=39 // pred_region
            // Predicated region
            $region45: #{tpu_custom_call.1} parent=43 // pred_check
              _
            $region46: #{tpu_custom_call.1} parent=43 // pred_check_branch
              %347 = sbr.rel (0) target = $region48
            $region47: #{tpu_custom_call.1} parent=43 // pred_region
              // Predicated region
              $region60: #{tpu_custom_call.1} parent=47 // pred_check
                _
              $region61: #{tpu_custom_call.1} parent=47 // pred_check_branch
                %370 = sbr.rel (0) target = $region63
              $region62: #{tpu_custom_call.1} parent=47 // pred_region
                loop: start=0, step=1, limit=1
                $region64: #{tpu_custom_call.1} parent=62 // loop_pre_header
                  _
                $region65: #{tpu_custom_call.1} parent=62 // loop_header
                  %s372 = sphi 0, %s376
                  %p373 = scmp.ge.s32.totalorder %s372, 1
                  %s377 = sphi %s343, %s343
                  %s378 = sphi %s339, %s339
                $region66: #{tpu_custom_call.1} parent=62 // loop_header_branch
                  %375 = sbr.rel (%p373) target = $region70
                $region67: #{tpu_custom_call.1} parent=62 // loop_body
                  %v379 = vld [vmem:[%s377] sm:$0xff]
                  %380 = vst [vmem:[%s378] sm:$0xff] %v379
                  %v381 = vld [vmem:[%s377 + $0x10] sm:$0xff]
                  %382 = vst [vmem:[%s378 + $0x8] sm:$0xff] %v381
                  %v383 = vld [vmem:[%s377 + $0x20] sm:$0xff]
                  %384 = vst [vmem:[%s378 + $0x10] sm:$0xff] %v383
                  %v385 = vld [vmem:[%s377 + $0x30] sm:$0xff]
                  %386 = vst [vmem:[%s378 + $0x18] sm:$0xff] %v385
                  %v387 = vld [vmem:[%s377 + $0x40] sm:$0xff]
                  %388 = vst [vmem:[%s378 + $0x20] sm:$0xff] %v387
                $region68: #{tpu_custom_call.1} parent=62 // loop_footer
                  %s376 = sadd.s32 1, %s372
                $region69: #{tpu_custom_call.1} parent=62 // loop_footer_branch
                  %371 = sbr.rel target = $region65
                $region70: #{tpu_custom_call.1} parent=62 // loop_exit
                  _
              $region63: #{tpu_custom_call.1} parent=47 // pred_fallthru
                _
              // Predicated region
              $region71: #{tpu_custom_call.1} parent=47 // pred_check
                _
              $region72: #{tpu_custom_call.1} parent=47 // pred_check_branch
                %390 = sbr.rel target = $region74
              $region73: #{tpu_custom_call.1} parent=47 // pred_region
                _
              $region74: #{tpu_custom_call.1} parent=47 // pred_fallthru
                _
            $region48: #{tpu_custom_call.1} parent=43 // pred_fallthru
              _
            // Predicated region
            $region49: #{tpu_custom_call.1} parent=43 // pred_check
              _
            $region50: #{tpu_custom_call.1} parent=43 // pred_check_branch
              %349 = sbr.rel target = $region52
            $region51: #{tpu_custom_call.1} parent=43 // pred_region
              loop: start=0, step=1, limit=1
              $region53: #{tpu_custom_call.1} parent=51 // loop_pre_header
                _
              $region54: #{tpu_custom_call.1} parent=51 // loop_header
                %s352 = sphi 0, %s356
                %p353 = scmp.ge.s32.totalorder %s352, 1
                %s357 = sphi %s343, %s343
                %s358 = sphi %s339, %s339
              $region55: #{tpu_custom_call.1} parent=51 // loop_header_branch
                %355 = sbr.rel (%p353) target = $region59
              $region56: #{tpu_custom_call.1} parent=51 // loop_body
                %v359 = vld [vmem:[%s357] sm:$0xff]
                %360 = vst [vmem:[%s358] sm:$0xff] %v359
                %v361 = vld [vmem:[%s357 + $0x10] sm:$0xff]
                %362 = vst [vmem:[%s358 + $0x8] sm:$0xff] %v361
                %v363 = vld [vmem:[%s357 + $0x20] sm:$0xff]
                %364 = vst [vmem:[%s358 + $0x10] sm:$0xff] %v363
                %v365 = vld [vmem:[%s357 + $0x30] sm:$0xff]
                %366 = vst [vmem:[%s358 + $0x18] sm:$0xff] %v365
                %v367 = vld [vmem:[%s357 + $0x40] sm:$0xff]
                %368 = vst [vmem:[%s358 + $0x20] sm:$0xff] %v367
              $region57: #{tpu_custom_call.1} parent=51 // loop_footer
                %s356 = sadd.s32 1, %s352
              $region58: #{tpu_custom_call.1} parent=51 // loop_footer_branch
                %351 = sbr.rel target = $region54
              $region59: #{tpu_custom_call.1} parent=51 // loop_exit
                _
            $region52: #{tpu_custom_call.1} parent=43 // pred_fallthru
              _
          $region44: #{tpu_custom_call.1} parent=39 // pred_fallthru
            _
          %391 = vnop
        $region40: #{tpu_custom_call.1} parent=35 // pred_fallthru
          _
        // Predicated region
        $region75: #{tpu_custom_call.1} parent=35 // pred_check
          %p392 = pneg %p122
        $region76: #{tpu_custom_call.1} parent=35 // pred_check_branch
          %394 = sbr.rel (%p392) target = $region78
        $region77: #{tpu_custom_call.1} parent=35 // pred_region
          %s395 = sand.u32 %s112, 1
          %s396 = sand.u32 %s112, 1
          %s397 = smul.addr %s396, 16
          %s398 = scalar_lea.vmem [#allocation4], %s397
          %s399 = smul.addr %s28, 8
          %s400 = scalar_lea.vmem %s3, %s399
          // Predicated region
          $region79: #{tpu_custom_call.1} parent=77 // pred_check
            _
          $region80: #{tpu_custom_call.1} parent=77 // pred_check_branch
            %402 = sbr.rel (0) target = $region82
          $region81: #{tpu_custom_call.1} parent=77 // pred_region
            // Predicated region
            $region83: #{tpu_custom_call.1} parent=81 // pred_check
              _
            $region84: #{tpu_custom_call.1} parent=81 // pred_check_branch
              %404 = sbr.rel (0) target = $region86
            $region85: #{tpu_custom_call.1} parent=81 // pred_region
              // Predicated region
              $region98: #{tpu_custom_call.1} parent=85 // pred_check
                _
              $region99: #{tpu_custom_call.1} parent=85 // pred_check_branch
                %421 = sbr.rel (0) target = $region101
              $region100: #{tpu_custom_call.1} parent=85 // pred_region
                loop: start=0, step=1, limit=1
                $region102: #{tpu_custom_call.1} parent=100 // loop_pre_header
                  _
                $region103: #{tpu_custom_call.1} parent=100 // loop_header
                  %s423 = sphi 0, %s427
                  %p424 = scmp.ge.s32.totalorder %s423, 1
                  %s428 = sphi %s400, %s400
                  %s429 = sphi %s398, %s398
                $region104: #{tpu_custom_call.1} parent=100 // loop_header_branch
                  %426 = sbr.rel (%p424) target = $region108
                $region105: #{tpu_custom_call.1} parent=100 // loop_body
                  %v430 = vld [vmem:[%s428] sm:$0xff]
                  %431 = vst [vmem:[%s429] sm:$0xff] %v430
                  %v432 = vld [vmem:[%s428 + $0x10] sm:$0xff]
                  %433 = vst [vmem:[%s429 + $0x8] sm:$0xff] %v432
                $region106: #{tpu_custom_call.1} parent=100 // loop_footer
                  %s427 = sadd.s32 1, %s423
                $region107: #{tpu_custom_call.1} parent=100 // loop_footer_branch
                  %422 = sbr.rel target = $region103
                $region108: #{tpu_custom_call.1} parent=100 // loop_exit
                  _
              $region101: #{tpu_custom_call.1} parent=85 // pred_fallthru
                _
              // Predicated region
              $region109: #{tpu_custom_call.1} parent=85 // pred_check
                _
              $region110: #{tpu_custom_call.1} parent=85 // pred_check_branch
                %435 = sbr.rel target = $region112
              $region111: #{tpu_custom_call.1} parent=85 // pred_region
                _
              $region112: #{tpu_custom_call.1} parent=85 // pred_fallthru
                _
            $region86: #{tpu_custom_call.1} parent=81 // pred_fallthru
              _
            // Predicated region
            $region87: #{tpu_custom_call.1} parent=81 // pred_check
              _
            $region88: #{tpu_custom_call.1} parent=81 // pred_check_branch
              %406 = sbr.rel target = $region90
            $region89: #{tpu_custom_call.1} parent=81 // pred_region
              loop: start=0, step=1, limit=1
              $region91: #{tpu_custom_call.1} parent=89 // loop_pre_header
                _
              $region92: #{tpu_custom_call.1} parent=89 // loop_header
                %s409 = sphi 0, %s413
                %p410 = scmp.ge.s32.totalorder %s409, 1
                %s414 = sphi %s400, %s400
                %s415 = sphi %s398, %s398
              $region93: #{tpu_custom_call.1} parent=89 // loop_header_branch
                %412 = sbr.rel (%p410) target = $region97
              $region94: #{tpu_custom_call.1} parent=89 // loop_body
                %v416 = vld [vmem:[%s414] sm:$0xff]
                %417 = vst [vmem:[%s415] sm:$0xff] %v416
                %v418 = vld [vmem:[%s414 + $0x10] sm:$0xff]
                %419 = vst [vmem:[%s415 + $0x8] sm:$0xff] %v418
              $region95: #{tpu_custom_call.1} parent=89 // loop_footer
                %s413 = sadd.s32 1, %s409
              $region96: #{tpu_custom_call.1} parent=89 // loop_footer_branch
                %408 = sbr.rel target = $region92
              $region97: #{tpu_custom_call.1} parent=89 // loop_exit
                _
            $region90: #{tpu_custom_call.1} parent=81 // pred_fallthru
              _
          $region82: #{tpu_custom_call.1} parent=77 // pred_fallthru
            _
          %436 = vnop
        $region78: #{tpu_custom_call.1} parent=35 // pred_fallthru
          _
        // Predicated region
        $region113: #{tpu_custom_call.1} parent=35 // pred_check
          %p437 = pneg %p148
        $region114: #{tpu_custom_call.1} parent=35 // pred_check_branch
          %439 = sbr.rel (%p437) target = $region116
        $region115: #{tpu_custom_call.1} parent=35 // pred_region
          %s440 = sand.u32 %s138, 1
          %s441 = sand.u32 %s138, 1
          %s442 = smul.addr %s441, 16
          %s443 = scalar_lea.vmem [#allocation5], %s442
          %s444 = smul.addr %s28, 8
          %s445 = scalar_lea.vmem %s4, %s444
          // Predicated region
          $region117: #{tpu_custom_call.1} parent=115 // pred_check
            _
          $region118: #{tpu_custom_call.1} parent=115 // pred_check_branch
            %447 = sbr.rel (0) target = $region120
          $region119: #{tpu_custom_call.1} parent=115 // pred_region
            // Predicated region
            $region121: #{tpu_custom_call.1} parent=119 // pred_check
              _
            $region122: #{tpu_custom_call.1} parent=119 // pred_check_branch
              %449 = sbr.rel (0) target = $region124
            $region123: #{tpu_custom_call.1} parent=119 // pred_region
              // Predicated region
              $region136: #{tpu_custom_call.1} parent=123 // pred_check
                _
              $region137: #{tpu_custom_call.1} parent=123 // pred_check_branch
                %466 = sbr.rel (0) target = $region139
              $region138: #{tpu_custom_call.1} parent=123 // pred_region
                loop: start=0, step=1, limit=1
                $region140: #{tpu_custom_call.1} parent=138 // loop_pre_header
                  _
                $region141: #{tpu_custom_call.1} parent=138 // loop_header
                  %s468 = sphi 0, %s472
                  %p469 = scmp.ge.s32.totalorder %s468, 1
                  %s473 = sphi %s445, %s445
                  %s474 = sphi %s443, %s443
                $region142: #{tpu_custom_call.1} parent=138 // loop_header_branch
                  %471 = sbr.rel (%p469) target = $region146
                $region143: #{tpu_custom_call.1} parent=138 // loop_body
                  %v475 = vld [vmem:[%s473] sm:$0xff]
                  %476 = vst [vmem:[%s474] sm:$0xff] %v475
                  %v477 = vld [vmem:[%s473 + $0x10] sm:$0xff]
                  %478 = vst [vmem:[%s474 + $0x8] sm:$0xff] %v477
                $region144: #{tpu_custom_call.1} parent=138 // loop_footer
                  %s472 = sadd.s32 1, %s468
                $region145: #{tpu_custom_call.1} parent=138 // loop_footer_branch
                  %467 = sbr.rel target = $region141
                $region146: #{tpu_custom_call.1} parent=138 // loop_exit
                  _
              $region139: #{tpu_custom_call.1} parent=123 // pred_fallthru
                _
              // Predicated region
              $region147: #{tpu_custom_call.1} parent=123 // pred_check
                _
              $region148: #{tpu_custom_call.1} parent=123 // pred_check_branch
                %480 = sbr.rel target = $region150
              $region149: #{tpu_custom_call.1} parent=123 // pred_region
                _
              $region150: #{tpu_custom_call.1} parent=123 // pred_fallthru
                _
            $region124: #{tpu_custom_call.1} parent=119 // pred_fallthru
              _
            // Predicated region
            $region125: #{tpu_custom_call.1} parent=119 // pred_check
              _
            $region126: #{tpu_custom_call.1} parent=119 // pred_check_branch
              %451 = sbr.rel target = $region128
            $region127: #{tpu_custom_call.1} parent=119 // pred_region
              loop: start=0, step=1, limit=1
              $region129: #{tpu_custom_call.1} parent=127 // loop_pre_header
                _
              $region130: #{tpu_custom_call.1} parent=127 // loop_header
                %s454 = sphi 0, %s458
                %p455 = scmp.ge.s32.totalorder %s454, 1
                %s459 = sphi %s445, %s445
                %s460 = sphi %s443, %s443
              $region131: #{tpu_custom_call.1} parent=127 // loop_header_branch
                %457 = sbr.rel (%p455) target = $region135
              $region132: #{tpu_custom_call.1} parent=127 // loop_body
                %v461 = vld [vmem:[%s459] sm:$0xff]
                %462 = vst [vmem:[%s460] sm:$0xff] %v461
                %v463 = vld [vmem:[%s459 + $0x10] sm:$0xff]
                %464 = vst [vmem:[%s460 + $0x8] sm:$0xff] %v463
              $region133: #{tpu_custom_call.1} parent=127 // loop_footer
                %s458 = sadd.s32 1, %s454
              $region134: #{tpu_custom_call.1} parent=127 // loop_footer_branch
                %453 = sbr.rel target = $region130
              $region135: #{tpu_custom_call.1} parent=127 // loop_exit
                _
            $region128: #{tpu_custom_call.1} parent=119 // pred_fallthru
              _
          $region120: #{tpu_custom_call.1} parent=115 // pred_fallthru
            _
          %481 = vnop
        $region116: #{tpu_custom_call.1} parent=35 // pred_fallthru
          _
        // Predicated region
        $region151: #{tpu_custom_call.1} parent=35 // pred_check
          %p482 = pneg %p216
        $region152: #{tpu_custom_call.1} parent=35 // pred_check_branch
          %484 = sbr.rel (%p482) target = $region154
        $region153: #{tpu_custom_call.1} parent=35 // pred_region
          %p485 = scmp.lt.s32.totalorder %s27, 1
          %s486 = scalar_select %p485, %s27, 1
          %s487 = smul.addr %s486, 2
          %s488 = smul.addr %s487, 4
          %s489 = scalar_lea.vmem %s7, %s488
        $region154: #{tpu_custom_call.1} parent=35 // pred_fallthru
          _
      $region36: #{tpu_custom_call.1} parent=5 // pred_fallthru
        _
      %p490 = scmp.le.s32.totalorder 1, %s20
      %p491 = scmp.lt.s32.totalorder %s20, 5
      %p492 = pnand %p490, %p491
      %p493 = pneg %p492
      // Predicated region
      $region155: #{tpu_custom_call.1} parent=5 // pred_check
        _
      $region156: #{tpu_custom_call.1} parent=5 // pred_check_branch
        %495 = sbr.rel (%p492) target = $region158
      $region157: #{tpu_custom_call.1} parent=5 // pred_region
        %s496 = ssub.s32 %s20, 1
        %s497 = sand.u32 %s47, 1
        %s498 = sand.u32 %s47, 1
        %s499 = smul.addr %s498, 40
        %s500 = scalar_lea.vmem [#allocation3], %s499
        // Predicated region
        $region159: #{tpu_custom_call.1} parent=157 // pred_check
          %p501 = pneg %p60
        $region160: #{tpu_custom_call.1} parent=157 // pred_check_branch
          %503 = sbr.rel (%p501) target = $region162
        $region161: #{tpu_custom_call.1} parent=157 // pred_region
          _
        $region162: #{tpu_custom_call.1} parent=157 // pred_fallthru
          _
        %s504 = sand.u32 %s115, 1
        %s505 = sand.u32 %s115, 1
        %s506 = smul.addr %s505, 16
        %s507 = scalar_lea.vmem [#allocation4], %s506
        // Predicated region
        $region163: #{tpu_custom_call.1} parent=157 // pred_check
          %p508 = pneg %p128
        $region164: #{tpu_custom_call.1} parent=157 // pred_check_branch
          %510 = sbr.rel (%p508) target = $region166
        $region165: #{tpu_custom_call.1} parent=157 // pred_region
          _
        $region166: #{tpu_custom_call.1} parent=157 // pred_fallthru
          _
        %s511 = sand.u32 %s141, 1
        %s512 = sand.u32 %s141, 1
        %s513 = smul.addr %s512, 16
        %s514 = scalar_lea.vmem [#allocation5], %s513
        // Predicated region
        $region167: #{tpu_custom_call.1} parent=157 // pred_check
          %p515 = pneg %p154
        $region168: #{tpu_custom_call.1} parent=157 // pred_check_branch
          %517 = sbr.rel (%p515) target = $region170
        $region169: #{tpu_custom_call.1} parent=157 // pred_region
          _
        $region170: #{tpu_custom_call.1} parent=157 // pred_fallthru
          _
        %s518 = sand.u32 %s47, 1
        %s519 = sand.u32 %s47, 1
        %s520 = smul.addr %s519, 40
        %s521 = scalar_lea.vmem [#allocation3], %s520
        %p522 = pneg %p60
        %p523 = pneg %p57
        %p524 = pneg %p81
        %p525 = pneg %p78
        %p526 = pneg %p102
        %p527 = pneg %p99
        %s528 = sand.u32 %s115, 1
        %s529 = sand.u32 %s115, 1
        %s530 = smul.addr %s529, 16
        %s531 = scalar_lea.vmem [#allocation4], %s530
        %p532 = pneg %p128
        %p533 = pneg %p125
        %s534 = sand.u32 %s141, 1
        %s535 = sand.u32 %s141, 1
        %s536 = smul.addr %s535, 16
        %s537 = scalar_lea.vmem [#allocation5], %s536
        %p538 = pneg %p154
        %p539 = pneg %p151
        %p540 = pneg %p175
        %p541 = pneg %p172
        %p542 = pneg %p196
        %p543 = pneg %p193
        %p544 = scmp.lt.s32.totalorder %s29, 1
        %s545 = scalar_select %p544, %s29, 1
        %s546 = smul.addr %s545, 2
        %s547 = smul.addr %s546, 4
        %s548 = scalar_lea.vmem %s7, %s547
        %p549 = pneg %p222
        %p550 = pneg %p219
        %p551 = pneg %p243
        %p552 = pneg %p240
        %p553 = pneg %p271
        %p554 = pneg %p268
        %s555 = sand.u32 %s258, 1
        %s556 = sand.u32 %s258, 1
        %s557 = smul.addr %s556, 32
        %s558 = scalar_lea.vmem [#allocation6], %s557
        %p559 = pneg %p299
        %p560 = pneg %p296
        %s561 = sand.u32 %s286, 1
        %s562 = scalar_lea.sflag [#allocation8], %s561
        %s563 = sand.u32 %s286, 1
        %s564 = smul.addr %s563, 8
        %s565 = scalar_lea.vmem [#allocation7], %s564
        %p566 = scmp.lt.s32.totalorder %s29, 1
        %s567 = scalar_select %p566, %s29, 1
        %s568 = smul.addr %s567, 2
        %s569 = smul.addr %s568, 4
        %s570 = scalar_lea.vmem %s7, %s569
        %v571 = vld [vmem:[%s1] sm:$0xff]
        %v572 = vld [vmem:[%s1 + $0x8] sm:$0xff]
        %v573 = vld [vmem:[%s1 + $0x10] sm:$0xff]
        %v574 = vld [vmem:[%s1 + $0x18] sm:$0x7]
        %v575 = vld [vmem:[%s500] sm:$0xff]
        %v576 = vld [vmem:[%s500 + $0x8] sm:$0xff]
        %v577 = vld [vmem:[%s500 + $0x10] sm:$0xff]
        %v578 = vld [vmem:[%s500 + $0x18] sm:$0xff]
        %v579 = vld [vmem:[%s500 + $0x20] sm:$0xf]
        %v580 = vld [vmem:[%s2] sm:$0xff]
        %v581 = vld [vmem:[%s2 + $0x8] sm:$0xff]
        %v582 = vld [vmem:[%s2 + $0x10] sm:$0xff]
        %v583 = vld [vmem:[%s2 + $0x18] sm:$0x7]
        %585 = vset.pattern.permute.xlu0 0
        %586 = vperm.xlu0 %585, %v580
        %v587 = vpop.permute.xlu0 %586
        %590 = vset.pattern.permute.xlu0 0
        %591 = vperm.xlu0 %590, %v581
        %v592 = vpop.permute.xlu0 %591
        %595 = vset.pattern.permute.xlu0 0
        %596 = vperm.xlu0 %595, %v582
        %v597 = vpop.permute.xlu0 %596
        %600 = vset.pattern.permute.xlu0 0
        %601 = vperm.xlu0 %600, %v583
        %v602 = vpop.permute.xlu0 %601
        %vm604 = vcmask 293888
        %v606 = vsel %vm604, %v571, 0
        %v609 = vsel %vm604, %v572, 0
        %v612 = vsel %vm604, %v573, 0
        %v615 = vsel %vm604, %v574, 0
        %vm617 = vcmask 1043456
        %v619 = vsel %vm617, %v579, 0
        %621 = vmatprep.subr.mxu0 0.0
        %622 = vmatpush1.msra.mxu0 %v575
        %623 = vmatprep.subr.mxu0 0.0
        %624 = vmatpush1.msra.mxu0 %v576
        %625 = vmatprep.subr.mxu0 0.0
        %626 = vmatpush1.msra.mxu0 %v577
        %627 = vmatprep.subr.mxu0 0.0
        %628 = vmatpush1.msra.mxu0 %v578
        %629 = vmatprep.subr.mxu0 0.0
        %630 = vmatpush1.msra.mxu0 %v619
        %631 = vmatprep.subr.mxu0 0.0
        %632 = vmatpush1.msra.mxu0 0.0
        %633 = vmatprep.subr.mxu0 0.0
        %634 = vmatpush1.msra.mxu0 0.0
        %635 = vmatprep.subr.mxu0 0.0
        %636 = vmatpush1.msra.mxu0 0.0
        %637 = vmatprep.subr.mxu0 0.0
        %638 = vmatpush1.msra.mxu0 0.0
        %639 = vmatprep.subr.mxu0 0.0
        %640 = vmatpush1.msra.mxu0 0.0
        %641 = vmatprep.subr.mxu0 0.0
        %642 = vmatpush1.msra.mxu0 0.0
        %643 = vmatprep.subr.mxu0 0.0
        %644 = vmatpush1.msra.mxu0 0.0
        %645 = vmatprep.subr.mxu0 0.0
        %646 = vmatpush1.msra.mxu0 0.0
        %647 = vmatprep.subr.mxu0 0.0
        %648 = vmatpush1.msra.mxu0 0.0
        %649 = vmatprep.subr.mxu0 0.0
        %650 = vmatpush1.msra.mxu0 0.0
        %651 = vmatprep.subr.mxu0 0.0
        %652 = vmatpush1.msra.mxu0 0.0
        %653 = vmatprep.subr.mxu0 0.0
        %654 = vmatpush1.msra.mxu0 0.0
        %655 = vmatprep.subr.mxu0 0.0
        %656 = vmatpush1.msra.mxu0 0.0
        %657 = vmatprep.subr.mxu0 0.0
        %658 = vmatpush1.msra.mxu0 0.0
        %659 = vmatprep.subr.mxu0 0.0
        %660 = vmatpush1.msra.mxu0 0.0
        %661 = vmatprep.subr.mxu0 0.0
        %662 = vmatpush1.msra.mxu0 0.0
        %663 = vmatprep.subr.mxu0 0.0
        %664 = vmatpush1.msra.mxu0 0.0
        %665 = vmatprep.subr.mxu0 0.0
        %666 = vmatpush1.msra.mxu0 0.0
        %667 = vmatprep.subr.mxu0 0.0
        %668 = vmatpush1.msra.mxu0 0.0
        %669 = vmatprep.subr.mxu0 0.0
        %670 = vmatpush1.msra.mxu0 0.0
        %671 = vmatprep.subr.mxu0 0.0
        %672 = vmatpush1.msra.mxu0 0.0
        %673 = vmatprep.subr.mxu0 0.0
        %674 = vmatpush1.msra.mxu0 0.0
        %675 = vmatprep.subr.mxu0 0.0
        %676 = vmatpush1.msra.mxu0 0.0
        %677 = vmatprep.subr.mxu0 0.0
        %678 = vmatpush1.msra.mxu0 0.0
        %679 = vmatprep.subr.mxu0 0.0
        %680 = vmatpush1.msra.mxu0 0.0
        %681 = vmatprep.subr.mxu0 0.0
        %682 = vmatpush1.msra.mxu0 0.0
        %683 = vmatprep.subr.mxu0 0.0
        %684 = vmatpush1.msra.mxu0 0.0
        %685 = vmatprep.mubr.f32.mxu0 0.0
        %686 = vmatmul.mubr.f32.gmra.mrb[0].mxu0 %v606
        %v687 = vpop.f32.mrb[0].mxu0
        %v688 = vadd.f32 %v587, %v687
        %v689 = vpop.f32.mrb[0].mxu0
        %690 = vmatprep.mubr.f32.mxu0 0.0
        %691 = vmatmul.mubr.f32.gmra.mrb[0].mxu0 %v609
        %v692 = vpop.f32.mrb[0].mxu0
        %v693 = vadd.f32 %v592, %v692
        %v694 = vpop.f32.mrb[0].mxu0
        %695 = vmatprep.mubr.f32.mxu0 0.0
        %696 = vmatmul.mubr.f32.gmra.mrb[0].mxu0 %v612
        %v697 = vpop.f32.mrb[0].mxu0
        %v698 = vadd.f32 %v597, %v697
        %v699 = vpop.f32.mrb[0].mxu0
        %700 = vmatprep.mubr.f32.mxu0 0.0
        %701 = vmatmul.mubr.f32.gmra.mrb[0].mxu0 %v615
        %v702 = vpop.f32.mrb[0].mxu0
        %v703 = vadd.f32 %v602, %v702
        %v704 = vpop.f32.mrb[0].mxu0
        %705 = vdwg.mxu0
        %706 = vst [vmem:[%s558] sm:$0xff] %v688
        %707 = vst [vmem:[%s558 + $0x8] sm:$0xff] %v693
        %708 = vst [vmem:[%s558 + $0x10] sm:$0xff] %v698
        %709 = vst [vmem:[%s558 + $0x18] sm:$0x7] %v703
        %v710 = vld [vmem:[%s570] sm:$0xff]
        %v711 = vld [vmem:[%s5] sm:$0xff]
        %v712 = vld [vmem:[%s5 + $0x8] sm:$0xff]
        %v713 = vld [vmem:[%s5 + $0x10] sm:$0xff]
        %v714 = vld [vmem:[%s5 + $0x18] sm:$0xff]
        %v715 = vld [vmem:[%s5 + $0x20] sm:$0xff]
        %v716 = vld [vmem:[%s5 + $0x28] sm:$0xff]
        %v717 = vld [vmem:[%s5 + $0x30] sm:$0xff]
        %v718 = vld [vmem:[%s5 + $0x38] sm:$0xff]
        %v719 = vld [vmem:[%s5 + $0x40] sm:$0xff]
        %v720 = vld [vmem:[%s5 + $0x48] sm:$0xff]
        %v721 = vld [vmem:[%s5 + $0x50] sm:$0xff]
        %v722 = vld [vmem:[%s5 + $0x58] sm:$0xff]
        %v723 = vld [vmem:[%s5 + $0x60] sm:$0xff]
        %v724 = vld [vmem:[%s5 + $0x68] sm:$0xff]
        %v725 = vld [vmem:[%s5 + $0x70] sm:$0xff]
        %v726 = vld [vmem:[%s5 + $0x78] sm:$0xff]
        %v727 = vld [vmem:[%s5 + $0x80] sm:$0xff]
        %v728 = vld [vmem:[%s5 + $0x88] sm:$0xff]
        %v729 = vld [vmem:[%s5 + $0x90] sm:$0xff]
        %v730 = vld [vmem:[%s5 + $0x98] sm:$0xff]
        %v731 = vld [vmem:[%s5 + $0xa0] sm:$0xff]
        %v732 = vld [vmem:[%s5 + $0xa8] sm:$0xff]
        %v733 = vld [vmem:[%s5 + $0xb0] sm:$0xff]
        %v734 = vld [vmem:[%s5 + $0xb8] sm:$0xff]
        %v735 = vld [vmem:[%s5 + $0xc0] sm:$0xff]
        %v736 = vld [vmem:[%s5 + $0xc8] sm:$0xff]
        %v737 = vld [vmem:[%s5 + $0xd0] sm:$0xff]
        %v738 = vld [vmem:[%s5 + $0xd8] sm:$0xff]
        %v739 = vld [vmem:[%s5 + $0xe0] sm:$0xff]
        %v740 = vld [vmem:[%s5 + $0xe8] sm:$0xff]
        %v741 = vld [vmem:[%s5 + $0xf0] sm:$0xff]
        %v742 = vld [vmem:[%s5 + $0xf8] sm:$0xff]
        %v743 = vld [vmem:[%s6] sm:$0xff]
        %v744 = vld [vmem:[%s6 + $0x8] sm:$0xff]
        %v745 = vld [vmem:[%s6 + $0x10] sm:$0xff]
        %v746 = vld [vmem:[%s6 + $0x18] sm:$0xff]
        %v747 = vld [vmem:[%s6 + $0x20] sm:$0xff]
        %v748 = vld [vmem:[%s6 + $0x28] sm:$0xff]
        %v749 = vld [vmem:[%s6 + $0x30] sm:$0xff]
        %v750 = vld [vmem:[%s6 + $0x38] sm:$0xff]
        %v751 = vld [vmem:[%s6 + $0x40] sm:$0xff]
        %v752 = vld [vmem:[%s6 + $0x48] sm:$0xff]
        %v753 = vld [vmem:[%s6 + $0x50] sm:$0xff]
        %v754 = vld [vmem:[%s6 + $0x58] sm:$0xff]
        %v755 = vld [vmem:[%s6 + $0x60] sm:$0xff]
        %v756 = vld [vmem:[%s6 + $0x68] sm:$0xff]
        %v757 = vld [vmem:[%s6 + $0x70] sm:$0xff]
        %v758 = vld [vmem:[%s6 + $0x78] sm:$0xff]
        %v759 = vld [vmem:[%s6 + $0x80] sm:$0xff]
        %v760 = vld [vmem:[%s6 + $0x88] sm:$0xff]
        %v761 = vld [vmem:[%s6 + $0x90] sm:$0xff]
        %v762 = vld [vmem:[%s6 + $0x98] sm:$0xff]
        %v763 = vld [vmem:[%s6 + $0xa0] sm:$0xff]
        %v764 = vld [vmem:[%s6 + $0xa8] sm:$0xff]
        %v765 = vld [vmem:[%s6 + $0xb0] sm:$0xff]
        %v766 = vld [vmem:[%s6 + $0xb8] sm:$0xff]
        %v767 = vld [vmem:[%s6 + $0xc0] sm:$0xff]
        %v768 = vld [vmem:[%s6 + $0xc8] sm:$0xff]
        %v769 = vld [vmem:[%s6 + $0xd0] sm:$0xff]
        %v770 = vld [vmem:[%s6 + $0xd8] sm:$0xff]
        %v771 = vld [vmem:[%s6 + $0xe0] sm:$0xff]
        %v772 = vld [vmem:[%s6 + $0xe8] sm:$0xff]
        %v773 = vld [vmem:[%s6 + $0xf0] sm:$0xff]
        %v774 = vld [vmem:[%s6 + $0xf8] sm:$0xff]
        %v775 = vld [vmem:[%s558] sm:$0x1]
        %v776 = vld [vmem:[%s507] sm:$0x1]
        %v777 = vadd.f32 %v775, %v776
        %v778 = vld [vmem:[%s558 + $0x9] sm:$0x1]
        %v779 = vld [vmem:[%s514] sm:$0x1]
        %v780 = vadd.f32 %v778, %v779
        %v781 = vld [vmem:[%s558 + $0x12] sm:$0x1]
        %v782 = vsub.f32 0.0, %v781
        %v783 = vmul.f32 %v782, 1.442695
        %v784 = vpow.pop %v783
        %v785 = vadd.f32 %v784, 1.0
        %v786 = vrcp.pop %v785
        %788 = vset.pattern.permute.xlu0 0
        %789 = vperm.xlu0 %788, %v711
        %v790 = vpop.permute.xlu0 %789
        %793 = vset.pattern.permute.xlu0 0
        %794 = vperm.xlu0 %793, %v712
        %v795 = vpop.permute.xlu0 %794
        %798 = vset.pattern.permute.xlu0 0
        %799 = vperm.xlu0 %798, %v713
        %v800 = vpop.permute.xlu0 %799
        %803 = vset.pattern.permute.xlu0 0
        %804 = vperm.xlu0 %803, %v714
        %v805 = vpop.permute.xlu0 %804
        %808 = vset.pattern.permute.xlu0 0
        %809 = vperm.xlu0 %808, %v715
        %v810 = vpop.permute.xlu0 %809
        %813 = vset.pattern.permute.xlu0 0
        %814 = vperm.xlu0 %813, %v716
        %v815 = vpop.permute.xlu0 %814
        %818 = vset.pattern.permute.xlu0 0
        %819 = vperm.xlu0 %818, %v717
        %v820 = vpop.permute.xlu0 %819
        %823 = vset.pattern.permute.xlu0 0
        %824 = vperm.xlu0 %823, %v718
        %v825 = vpop.permute.xlu0 %824
        %828 = vset.pattern.permute.xlu0 0
        %829 = vperm.xlu0 %828, %v719
        %v830 = vpop.permute.xlu0 %829
        %833 = vset.pattern.permute.xlu0 0
        %834 = vperm.xlu0 %833, %v720
        %v835 = vpop.permute.xlu0 %834
        %838 = vset.pattern.permute.xlu0 0
        %839 = vperm.xlu0 %838, %v721
        %v840 = vpop.permute.xlu0 %839
        %843 = vset.pattern.permute.xlu0 0
        %844 = vperm.xlu0 %843, %v722
        %v845 = vpop.permute.xlu0 %844
        %848 = vset.pattern.permute.xlu0 0
        %849 = vperm.xlu0 %848, %v723
        %v850 = vpop.permute.xlu0 %849
        %853 = vset.pattern.permute.xlu0 0
        %854 = vperm.xlu0 %853, %v724
        %v855 = vpop.permute.xlu0 %854
        %858 = vset.pattern.permute.xlu0 0
        %859 = vperm.xlu0 %858, %v725
        %v860 = vpop.permute.xlu0 %859
        %863 = vset.pattern.permute.xlu0 0
        %864 = vperm.xlu0 %863, %v726
        %v865 = vpop.permute.xlu0 %864
        %868 = vset.pattern.permute.xlu0 0
        %869 = vperm.xlu0 %868, %v727
        %v870 = vpop.permute.xlu0 %869
        %873 = vset.pattern.permute.xlu0 0
        %874 = vperm.xlu0 %873, %v728
        %v875 = vpop.permute.xlu0 %874
        %878 = vset.pattern.permute.xlu0 0
        %879 = vperm.xlu0 %878, %v729
        %v880 = vpop.permute.xlu0 %879
        %883 = vset.pattern.permute.xlu0 0
        %884 = vperm.xlu0 %883, %v730
        %v885 = vpop.permute.xlu0 %884
        %888 = vset.pattern.permute.xlu0 0
        %889 = vperm.xlu0 %888, %v731
        %v890 = vpop.permute.xlu0 %889
        %893 = vset.pattern.permute.xlu0 0
        %894 = vperm.xlu0 %893, %v732
        %v895 = vpop.permute.xlu0 %894
        %898 = vset.pattern.permute.xlu0 0
        %899 = vperm.xlu0 %898, %v733
        %v900 = vpop.permute.xlu0 %899
        %903 = vset.pattern.permute.xlu0 0
        %904 = vperm.xlu0 %903, %v734
        %v905 = vpop.permute.xlu0 %904
        %908 = vset.pattern.permute.xlu0 0
        %909 = vperm.xlu0 %908, %v735
        %v910 = vpop.permute.xlu0 %909
        %913 = vset.pattern.permute.xlu0 0
        %914 = vperm.xlu0 %913, %v736
        %v915 = vpop.permute.xlu0 %914
        %918 = vset.pattern.permute.xlu0 0
        %919 = vperm.xlu0 %918, %v737
        %v920 = vpop.permute.xlu0 %919
        %923 = vset.pattern.permute.xlu0 0
        %924 = vperm.xlu0 %923, %v738
        %v925 = vpop.permute.xlu0 %924
        %928 = vset.pattern.permute.xlu0 0
        %929 = vperm.xlu0 %928, %v739
        %v930 = vpop.permute.xlu0 %929
        %933 = vset.pattern.permute.xlu0 0
        %934 = vperm.xlu0 %933, %v740
        %v935 = vpop.permute.xlu0 %934
        %938 = vset.pattern.permute.xlu0 0
        %939 = vperm.xlu0 %938, %v741
        %v940 = vpop.permute.xlu0 %939
        %943 = vset.pattern.permute.xlu0 0
        %944 = vperm.xlu0 %943, %v742
        %v945 = vpop.permute.xlu0 %944
        %v947 = vlaneseq
        %v948 = vshrl.u32 %v947, 7
        %v949 = vsub.s32 0, %v948
        %v950 = vrot.slane %v780, %v949
        %v951 = vsub.f32 %v790, %v950
        %v952 = vsub.f32 %v795, %v950
        %v953 = vsub.f32 %v800, %v950
        %v954 = vsub.f32 %v805, %v950
        %v955 = vsub.f32 %v810, %v950
        %v956 = vsub.f32 %v815, %v950
        %v957 = vsub.f32 %v820, %v950
        %v958 = vsub.f32 %v825, %v950
        %v959 = vsub.f32 %v830, %v950
        %v960 = vsub.f32 %v835, %v950
        %v961 = vsub.f32 %v840, %v950
        %v962 = vsub.f32 %v845, %v950
        %v963 = vsub.f32 %v850, %v950
        %v964 = vsub.f32 %v855, %v950
        %v965 = vsub.f32 %v860, %v950
        %v966 = vsub.f32 %v865, %v950
        %v967 = vsub.f32 %v870, %v950
        %v968 = vsub.f32 %v875, %v950
        %v969 = vsub.f32 %v880, %v950
        %v970 = vsub.f32 %v885, %v950
        %v971 = vsub.f32 %v890, %v950
        %v972 = vsub.f32 %v895, %v950
        %v973 = vsub.f32 %v900, %v950
        %v974 = vsub.f32 %v905, %v950
        %v975 = vsub.f32 %v910, %v950
        %v976 = vsub.f32 %v915, %v950
        %v977 = vsub.f32 %v920, %v950
        %v978 = vsub.f32 %v925, %v950
        %v979 = vsub.f32 %v930, %v950
        %v980 = vsub.f32 %v935, %v950
        %v981 = vsub.f32 %v940, %v950
        %v982 = vsub.f32 %v945, %v950
        %v983 = vand.u32 2147483647, %v951
        %v984 = vand.u32 2147483647, %v952
        %v985 = vand.u32 2147483647, %v953
        %v986 = vand.u32 2147483647, %v954
        %v987 = vand.u32 2147483647, %v955
        %v988 = vand.u32 2147483647, %v956
        %v989 = vand.u32 2147483647, %v957
        %v990 = vand.u32 2147483647, %v958
        %v991 = vand.u32 2147483647, %v959
        %v992 = vand.u32 2147483647, %v960
        %v993 = vand.u32 2147483647, %v961
        %v994 = vand.u32 2147483647, %v962
        %v995 = vand.u32 2147483647, %v963
        %v996 = vand.u32 2147483647, %v964
        %v997 = vand.u32 2147483647, %v965
        %v998 = vand.u32 2147483647, %v966
        %v999 = vand.u32 2147483647, %v967
        %v1000 = vand.u32 2147483647, %v968
        %v1001 = vand.u32 2147483647, %v969
        %v1002 = vand.u32 2147483647, %v970
        %v1003 = vand.u32 2147483647, %v971
        %v1004 = vand.u32 2147483647, %v972
        %v1005 = vand.u32 2147483647, %v973
        %v1006 = vand.u32 2147483647, %v974
        %v1007 = vand.u32 2147483647, %v975
        %v1008 = vand.u32 2147483647, %v976
        %v1009 = vand.u32 2147483647, %v977
        %v1010 = vand.u32 2147483647, %v978
        %v1011 = vand.u32 2147483647, %v979
        %v1012 = vand.u32 2147483647, %v980
        %v1013 = vand.u32 2147483647, %v981
        %v1014 = vand.u32 2147483647, %v982
        %v1015 = vsub.f32 1.0, %v983
        %v1016 = vsub.f32 1.0, %v984
        %v1017 = vsub.f32 1.0, %v985
        %v1018 = vsub.f32 1.0, %v986
        %v1019 = vsub.f32 1.0, %v987
        %v1020 = vsub.f32 1.0, %v988
        %v1021 = vsub.f32 1.0, %v989
        %v1022 = vsub.f32 1.0, %v990
        %v1023 = vsub.f32 1.0, %v991
        %v1024 = vsub.f32 1.0, %v992
        %v1025 = vsub.f32 1.0, %v993
        %v1026 = vsub.f32 1.0, %v994
        %v1027 = vsub.f32 1.0, %v995
        %v1028 = vsub.f32 1.0, %v996
        %v1029 = vsub.f32 1.0, %v997
        %v1030 = vsub.f32 1.0, %v998
        %v1031 = vsub.f32 1.0, %v999
        %v1032 = vsub.f32 1.0, %v1000
        %v1033 = vsub.f32 1.0, %v1001
        %v1034 = vsub.f32 1.0, %v1002
        %v1035 = vsub.f32 1.0, %v1003
        %v1036 = vsub.f32 1.0, %v1004
        %v1037 = vsub.f32 1.0, %v1005
        %v1038 = vsub.f32 1.0, %v1006
        %v1039 = vsub.f32 1.0, %v1007
        %v1040 = vsub.f32 1.0, %v1008
        %v1041 = vsub.f32 1.0, %v1009
        %v1042 = vsub.f32 1.0, %v1010
        %v1043 = vsub.f32 1.0, %v1011
        %v1044 = vsub.f32 1.0, %v1012
        %v1045 = vsub.f32 1.0, %v1013
        %v1046 = vsub.f32 1.0, %v1014
        %v1047 = vmax.f32 %v1015, 0.0
        %v1048 = vmax.f32 %v1016, 0.0
        %v1049 = vmax.f32 %v1017, 0.0
        %v1050 = vmax.f32 %v1018, 0.0
        %v1051 = vmax.f32 %v1019, 0.0
        %v1052 = vmax.f32 %v1020, 0.0
        %v1053 = vmax.f32 %v1021, 0.0
        %v1054 = vmax.f32 %v1022, 0.0
        %v1055 = vmax.f32 %v1023, 0.0
        %v1056 = vmax.f32 %v1024, 0.0
        %v1057 = vmax.f32 %v1025, 0.0
        %v1058 = vmax.f32 %v1026, 0.0
        %v1059 = vmax.f32 %v1027, 0.0
        %v1060 = vmax.f32 %v1028, 0.0
        %v1061 = vmax.f32 %v1029, 0.0
        %v1062 = vmax.f32 %v1030, 0.0
        %v1063 = vmax.f32 %v1031, 0.0
        %v1064 = vmax.f32 %v1032, 0.0
        %v1065 = vmax.f32 %v1033, 0.0
        %v1066 = vmax.f32 %v1034, 0.0
        %v1067 = vmax.f32 %v1035, 0.0
        %v1068 = vmax.f32 %v1036, 0.0
        %v1069 = vmax.f32 %v1037, 0.0
        %v1070 = vmax.f32 %v1038, 0.0
        %v1071 = vmax.f32 %v1039, 0.0
        %v1072 = vmax.f32 %v1040, 0.0
        %v1073 = vmax.f32 %v1041, 0.0
        %v1074 = vmax.f32 %v1042, 0.0
        %v1075 = vmax.f32 %v1043, 0.0
        %v1076 = vmax.f32 %v1044, 0.0
        %v1077 = vmax.f32 %v1045, 0.0
        %v1078 = vmax.f32 %v1046, 0.0
        %1080 = vset.pattern.permute.xlu0 0
        %1081 = vperm.xlu0 %1080, %v743
        %v1082 = vpop.permute.xlu0 %1081
        %1085 = vset.pattern.permute.xlu0 0
        %1086 = vperm.xlu0 %1085, %v744
        %v1087 = vpop.permute.xlu0 %1086
        %1090 = vset.pattern.permute.xlu0 0
        %1091 = vperm.xlu0 %1090, %v745
        %v1092 = vpop.permute.xlu0 %1091
        %1095 = vset.pattern.permute.xlu0 0
        %1096 = vperm.xlu0 %1095, %v746
        %v1097 = vpop.permute.xlu0 %1096
        %1100 = vset.pattern.permute.xlu0 0
        %1101 = vperm.xlu0 %1100, %v747
        %v1102 = vpop.permute.xlu0 %1101
        %1105 = vset.pattern.permute.xlu0 0
        %1106 = vperm.xlu0 %1105, %v748
        %v1107 = vpop.permute.xlu0 %1106
        %1110 = vset.pattern.permute.xlu0 0
        %1111 = vperm.xlu0 %1110, %v749
        %v1112 = vpop.permute.xlu0 %1111
        %1115 = vset.pattern.permute.xlu0 0
        %1116 = vperm.xlu0 %1115, %v750
        %v1117 = vpop.permute.xlu0 %1116
        %1120 = vset.pattern.permute.xlu0 0
        %1121 = vperm.xlu0 %1120, %v751
        %v1122 = vpop.permute.xlu0 %1121
        %1125 = vset.pattern.permute.xlu0 0
        %1126 = vperm.xlu0 %1125, %v752
        %v1127 = vpop.permute.xlu0 %1126
        %1130 = vset.pattern.permute.xlu0 0
        %1131 = vperm.xlu0 %1130, %v753
        %v1132 = vpop.permute.xlu0 %1131
        %1135 = vset.pattern.permute.xlu0 0
        %1136 = vperm.xlu0 %1135, %v754
        %v1137 = vpop.permute.xlu0 %1136
        %1140 = vset.pattern.permute.xlu0 0
        %1141 = vperm.xlu0 %1140, %v755
        %v1142 = vpop.permute.xlu0 %1141
        %1145 = vset.pattern.permute.xlu0 0
        %1146 = vperm.xlu0 %1145, %v756
        %v1147 = vpop.permute.xlu0 %1146
        %1150 = vset.pattern.permute.xlu0 0
        %1151 = vperm.xlu0 %1150, %v757
        %v1152 = vpop.permute.xlu0 %1151
        %1155 = vset.pattern.permute.xlu0 0
        %1156 = vperm.xlu0 %1155, %v758
        %v1157 = vpop.permute.xlu0 %1156
        %1160 = vset.pattern.permute.xlu0 0
        %1161 = vperm.xlu0 %1160, %v759
        %v1162 = vpop.permute.xlu0 %1161
        %1165 = vset.pattern.permute.xlu0 0
        %1166 = vperm.xlu0 %1165, %v760
        %v1167 = vpop.permute.xlu0 %1166
        %1170 = vset.pattern.permute.xlu0 0
        %1171 = vperm.xlu0 %1170, %v761
        %v1172 = vpop.permute.xlu0 %1171
        %1175 = vset.pattern.permute.xlu0 0
        %1176 = vperm.xlu0 %1175, %v762
        %v1177 = vpop.permute.xlu0 %1176
        %1180 = vset.pattern.permute.xlu0 0
        %1181 = vperm.xlu0 %1180, %v763
        %v1182 = vpop.permute.xlu0 %1181
        %1185 = vset.pattern.permute.xlu0 0
        %1186 = vperm.xlu0 %1185, %v764
        %v1187 = vpop.permute.xlu0 %1186
        %1190 = vset.pattern.permute.xlu0 0
        %1191 = vperm.xlu0 %1190, %v765
        %v1192 = vpop.permute.xlu0 %1191
        %1195 = vset.pattern.permute.xlu0 0
        %1196 = vperm.xlu0 %1195, %v766
        %v1197 = vpop.permute.xlu0 %1196
        %1200 = vset.pattern.permute.xlu0 0
        %1201 = vperm.xlu0 %1200, %v767
        %v1202 = vpop.permute.xlu0 %1201
        %1205 = vset.pattern.permute.xlu0 0
        %1206 = vperm.xlu0 %1205, %v768
        %v1207 = vpop.permute.xlu0 %1206
        %1210 = vset.pattern.permute.xlu0 0
        %1211 = vperm.xlu0 %1210, %v769
        %v1212 = vpop.permute.xlu0 %1211
        %1215 = vset.pattern.permute.xlu0 0
        %1216 = vperm.xlu0 %1215, %v770
        %v1217 = vpop.permute.xlu0 %1216
        %1220 = vset.pattern.permute.xlu0 0
        %1221 = vperm.xlu0 %1220, %v771
        %v1222 = vpop.permute.xlu0 %1221
        %1225 = vset.pattern.permute.xlu0 0
        %1226 = vperm.xlu0 %1225, %v772
        %v1227 = vpop.permute.xlu0 %1226
        %1230 = vset.pattern.permute.xlu0 0
        %1231 = vperm.xlu0 %1230, %v773
        %v1232 = vpop.permute.xlu0 %1231
        %1235 = vset.pattern.permute.xlu0 0
        %1236 = vperm.xlu0 %1235, %v774
        %v1237 = vpop.permute.xlu0 %1236
        %v1239 = vlaneseq
        %v1240 = vshrl.u32 %v1239, 7
        %v1241 = vsub.s32 0, %v1240
        %v1242 = vrot.slane %v777, %v1241
        %v1243 = vsub.f32 %v1082, %v1242
        %v1244 = vsub.f32 %v1087, %v1242
        %v1245 = vsub.f32 %v1092, %v1242
        %v1246 = vsub.f32 %v1097, %v1242
        %v1247 = vsub.f32 %v1102, %v1242
        %v1248 = vsub.f32 %v1107, %v1242
        %v1249 = vsub.f32 %v1112, %v1242
        %v1250 = vsub.f32 %v1117, %v1242
        %v1251 = vsub.f32 %v1122, %v1242
        %v1252 = vsub.f32 %v1127, %v1242
        %v1253 = vsub.f32 %v1132, %v1242
        %v1254 = vsub.f32 %v1137, %v1242
        %v1255 = vsub.f32 %v1142, %v1242
        %v1256 = vsub.f32 %v1147, %v1242
        %v1257 = vsub.f32 %v1152, %v1242
        %v1258 = vsub.f32 %v1157, %v1242
        %v1259 = vsub.f32 %v1162, %v1242
        %v1260 = vsub.f32 %v1167, %v1242
        %v1261 = vsub.f32 %v1172, %v1242
        %v1262 = vsub.f32 %v1177, %v1242
        %v1263 = vsub.f32 %v1182, %v1242
        %v1264 = vsub.f32 %v1187, %v1242
        %v1265 = vsub.f32 %v1192, %v1242
        %v1266 = vsub.f32 %v1197, %v1242
        %v1267 = vsub.f32 %v1202, %v1242
        %v1268 = vsub.f32 %v1207, %v1242
        %v1269 = vsub.f32 %v1212, %v1242
        %v1270 = vsub.f32 %v1217, %v1242
        %v1271 = vsub.f32 %v1222, %v1242
        %v1272 = vsub.f32 %v1227, %v1242
        %v1273 = vsub.f32 %v1232, %v1242
        %v1274 = vsub.f32 %v1237, %v1242
        %v1275 = vand.u32 2147483647, %v1243
        %v1276 = vand.u32 2147483647, %v1244
        %v1277 = vand.u32 2147483647, %v1245
        %v1278 = vand.u32 2147483647, %v1246
        %v1279 = vand.u32 2147483647, %v1247
        %v1280 = vand.u32 2147483647, %v1248
        %v1281 = vand.u32 2147483647, %v1249
        %v1282 = vand.u32 2147483647, %v1250
        %v1283 = vand.u32 2147483647, %v1251
        %v1284 = vand.u32 2147483647, %v1252
        %v1285 = vand.u32 2147483647, %v1253
        %v1286 = vand.u32 2147483647, %v1254
        %v1287 = vand.u32 2147483647, %v1255
        %v1288 = vand.u32 2147483647, %v1256
        %v1289 = vand.u32 2147483647, %v1257
        %v1290 = vand.u32 2147483647, %v1258
        %v1291 = vand.u32 2147483647, %v1259
        %v1292 = vand.u32 2147483647, %v1260
        %v1293 = vand.u32 2147483647, %v1261
        %v1294 = vand.u32 2147483647, %v1262
        %v1295 = vand.u32 2147483647, %v1263
        %v1296 = vand.u32 2147483647, %v1264
        %v1297 = vand.u32 2147483647, %v1265
        %v1298 = vand.u32 2147483647, %v1266
        %v1299 = vand.u32 2147483647, %v1267
        %v1300 = vand.u32 2147483647, %v1268
        %v1301 = vand.u32 2147483647, %v1269
        %v1302 = vand.u32 2147483647, %v1270
        %v1303 = vand.u32 2147483647, %v1271
        %v1304 = vand.u32 2147483647, %v1272
        %v1305 = vand.u32 2147483647, %v1273
        %v1306 = vand.u32 2147483647, %v1274
        %v1307 = vsub.f32 1.0, %v1275
        %v1308 = vsub.f32 1.0, %v1276
        %v1309 = vsub.f32 1.0, %v1277
        %v1310 = vsub.f32 1.0, %v1278
        %v1311 = vsub.f32 1.0, %v1279
        %v1312 = vsub.f32 1.0, %v1280
        %v1313 = vsub.f32 1.0, %v1281
        %v1314 = vsub.f32 1.0, %v1282
        %v1315 = vsub.f32 1.0, %v1283
        %v1316 = vsub.f32 1.0, %v1284
        %v1317 = vsub.f32 1.0, %v1285
        %v1318 = vsub.f32 1.0, %v1286
        %v1319 = vsub.f32 1.0, %v1287
        %v1320 = vsub.f32 1.0, %v1288
        %v1321 = vsub.f32 1.0, %v1289
        %v1322 = vsub.f32 1.0, %v1290
        %v1323 = vsub.f32 1.0, %v1291
        %v1324 = vsub.f32 1.0, %v1292
        %v1325 = vsub.f32 1.0, %v1293
        %v1326 = vsub.f32 1.0, %v1294
        %v1327 = vsub.f32 1.0, %v1295
        %v1328 = vsub.f32 1.0, %v1296
        %v1329 = vsub.f32 1.0, %v1297
        %v1330 = vsub.f32 1.0, %v1298
        %v1331 = vsub.f32 1.0, %v1299
        %v1332 = vsub.f32 1.0, %v1300
        %v1333 = vsub.f32 1.0, %v1301
        %v1334 = vsub.f32 1.0, %v1302
        %v1335 = vsub.f32 1.0, %v1303
        %v1336 = vsub.f32 1.0, %v1304
        %v1337 = vsub.f32 1.0, %v1305
        %v1338 = vsub.f32 1.0, %v1306
        %v1339 = vmax.f32 %v1307, 0.0
        %v1340 = vmax.f32 %v1308, 0.0
        %v1341 = vmax.f32 %v1309, 0.0
        %v1342 = vmax.f32 %v1310, 0.0
        %v1343 = vmax.f32 %v1311, 0.0
        %v1344 = vmax.f32 %v1312, 0.0
        %v1345 = vmax.f32 %v1313, 0.0
        %v1346 = vmax.f32 %v1314, 0.0
        %v1347 = vmax.f32 %v1315, 0.0
        %v1348 = vmax.f32 %v1316, 0.0
        %v1349 = vmax.f32 %v1317, 0.0
        %v1350 = vmax.f32 %v1318, 0.0
        %v1351 = vmax.f32 %v1319, 0.0
        %v1352 = vmax.f32 %v1320, 0.0
        %v1353 = vmax.f32 %v1321, 0.0
        %v1354 = vmax.f32 %v1322, 0.0
        %v1355 = vmax.f32 %v1323, 0.0
        %v1356 = vmax.f32 %v1324, 0.0
        %v1357 = vmax.f32 %v1325, 0.0
        %v1358 = vmax.f32 %v1326, 0.0
        %v1359 = vmax.f32 %v1327, 0.0
        %v1360 = vmax.f32 %v1328, 0.0
        %v1361 = vmax.f32 %v1329, 0.0
        %v1362 = vmax.f32 %v1330, 0.0
        %v1363 = vmax.f32 %v1331, 0.0
        %v1364 = vmax.f32 %v1332, 0.0
        %v1365 = vmax.f32 %v1333, 0.0
        %v1366 = vmax.f32 %v1334, 0.0
        %v1367 = vmax.f32 %v1335, 0.0
        %v1368 = vmax.f32 %v1336, 0.0
        %v1369 = vmax.f32 %v1337, 0.0
        %v1370 = vmax.f32 %v1338, 0.0
        %v1371 = vmul.f32 %v1047, %v1339
        %v1372 = vmul.f32 %v1048, %v1340
        %v1373 = vmul.f32 %v1049, %v1341
        %v1374 = vmul.f32 %v1050, %v1342
        %v1375 = vmul.f32 %v1051, %v1343
        %v1376 = vmul.f32 %v1052, %v1344
        %v1377 = vmul.f32 %v1053, %v1345
        %v1378 = vmul.f32 %v1054, %v1346
        %v1379 = vmul.f32 %v1055, %v1347
        %v1380 = vmul.f32 %v1056, %v1348
        %v1381 = vmul.f32 %v1057, %v1349
        %v1382 = vmul.f32 %v1058, %v1350
        %v1383 = vmul.f32 %v1059, %v1351
        %v1384 = vmul.f32 %v1060, %v1352
        %v1385 = vmul.f32 %v1061, %v1353
        %v1386 = vmul.f32 %v1062, %v1354
        %v1387 = vmul.f32 %v1063, %v1355
        %v1388 = vmul.f32 %v1064, %v1356
        %v1389 = vmul.f32 %v1065, %v1357
        %v1390 = vmul.f32 %v1066, %v1358
        %v1391 = vmul.f32 %v1067, %v1359
        %v1392 = vmul.f32 %v1068, %v1360
        %v1393 = vmul.f32 %v1069, %v1361
        %v1394 = vmul.f32 %v1070, %v1362
        %v1395 = vmul.f32 %v1071, %v1363
        %v1396 = vmul.f32 %v1072, %v1364
        %v1397 = vmul.f32 %v1073, %v1365
        %v1398 = vmul.f32 %v1074, %v1366
        %v1399 = vmul.f32 %v1075, %v1367
        %v1400 = vmul.f32 %v1076, %v1368
        %v1401 = vmul.f32 %v1077, %v1369
        %v1402 = vmul.f32 %v1078, %v1370
        %v1404 = vcombine.high %v710, %v710
        %1406 = vmatprep.subr.mxu0 0.0
        %1407 = vmatpush1.msra.mxu0 %v1371
        %1408 = vmatprep.subr.mxu0 0.0
        %1409 = vmatpush1.msra.mxu0 %v1372
        %1410 = vmatprep.subr.mxu0 0.0
        %1411 = vmatpush1.msra.mxu0 %v1373
        %1412 = vmatprep.subr.mxu0 0.0
        %1413 = vmatpush1.msra.mxu0 %v1374
        %1414 = vmatprep.subr.mxu0 0.0
        %1415 = vmatpush1.msra.mxu0 %v1375
        %1416 = vmatprep.subr.mxu0 0.0
        %1417 = vmatpush1.msra.mxu0 %v1376
        %1418 = vmatprep.subr.mxu0 0.0
        %1419 = vmatpush1.msra.mxu0 %v1377
        %1420 = vmatprep.subr.mxu0 0.0
        %1421 = vmatpush1.msra.mxu0 %v1378
        %1422 = vmatprep.subr.mxu0 0.0
        %1423 = vmatpush1.msra.mxu0 %v1379
        %1424 = vmatprep.subr.mxu0 0.0
        %1425 = vmatpush1.msra.mxu0 %v1380
        %1426 = vmatprep.subr.mxu0 0.0
        %1427 = vmatpush1.msra.mxu0 %v1381
        %1428 = vmatprep.subr.mxu0 0.0
        %1429 = vmatpush1.msra.mxu0 %v1382
        %1430 = vmatprep.subr.mxu0 0.0
        %1431 = vmatpush1.msra.mxu0 %v1383
        %1432 = vmatprep.subr.mxu0 0.0
        %1433 = vmatpush1.msra.mxu0 %v1384
        %1434 = vmatprep.subr.mxu0 0.0
        %1435 = vmatpush1.msra.mxu0 %v1385
        %1436 = vmatprep.subr.mxu0 0.0
        %1437 = vmatpush1.msra.mxu0 %v1386
        %1438 = vmatprep.subr.mxu0 0.0
        %1439 = vmatpush1.msra.mxu0 %v1387
        %1440 = vmatprep.subr.mxu0 0.0
        %1441 = vmatpush1.msra.mxu0 %v1388
        %1442 = vmatprep.subr.mxu0 0.0
        %1443 = vmatpush1.msra.mxu0 %v1389
        %1444 = vmatprep.subr.mxu0 0.0
        %1445 = vmatpush1.msra.mxu0 %v1390
        %1446 = vmatprep.subr.mxu0 0.0
        %1447 = vmatpush1.msra.mxu0 %v1391
        %1448 = vmatprep.subr.mxu0 0.0
        %1449 = vmatpush1.msra.mxu0 %v1392
        %1450 = vmatprep.subr.mxu0 0.0
        %1451 = vmatpush1.msra.mxu0 %v1393
        %1452 = vmatprep.subr.mxu0 0.0
        %1453 = vmatpush1.msra.mxu0 %v1394
        %1454 = vmatprep.subr.mxu0 0.0
        %1455 = vmatpush1.msra.mxu0 %v1395
        %1456 = vmatprep.subr.mxu0 0.0
        %1457 = vmatpush1.msra.mxu0 %v1396
        %1458 = vmatprep.subr.mxu0 0.0
        %1459 = vmatpush1.msra.mxu0 %v1397
        %1460 = vmatprep.subr.mxu0 0.0
        %1461 = vmatpush1.msra.mxu0 %v1398
        %1462 = vmatprep.subr.mxu0 0.0
        %1463 = vmatpush1.msra.mxu0 %v1399
        %1464 = vmatprep.subr.mxu0 0.0
        %1465 = vmatpush1.msra.mxu0 %v1400
        %1466 = vmatprep.subr.mxu0 0.0
        %1467 = vmatpush1.msra.mxu0 %v1401
        %1468 = vmatprep.subr.mxu0 0.0
        %1469 = vmatpush1.msra.mxu0 %v1402
        %1470 = vmatprep.mubr.f32.mxu0 %v1404
        %1471 = vmatmul.mubr.f32.gmra.mrb[0].mxu0 %v710
        %v1472 = vpop.f32.mrb[0].mxu0
        %v1473 = vadd.f32 0.0, %v1472
        %v1474 = vpop.f32.mrb[0].mxu0
        %1475 = vdwg.mxu0
        %v1476 = vlaneseq
        %v1477 = vshrl.u32 %v1476, 7
        %v1478 = vsub.s32 0, %v1477
        %v1479 = vrot.slane %v786, %v1478
        %v1480 = vmul.f32 %v1473, %v1479
        %1481 = vst [vmem:[#allocation2] sm:$0xf] %v1480
        %v1482 = vld [vmem:[%s558 + $0x1] sm:$0x1]
        %v1483 = vld [vmem:[%s507 + $0x1] sm:$0x1]
        %v1484 = vadd.f32 %v1482, %v1483
        %v1485 = vld [vmem:[%s558 + $0xa] sm:$0x1]
        %v1486 = vld [vmem:[%s514 + $0x1] sm:$0x1]
        %v1487 = vadd.f32 %v1485, %v1486
        %v1488 = vld [vmem:[%s558 + $0x13] sm:$0x1]
        %v1489 = vsub.f32 0.0, %v1488
        %v1490 = vmul.f32 %v1489, 1.442695
        %v1491 = vpow.pop %v1490
        %v1492 = vadd.f32 %v1491, 1.0
        %v1493 = vrcp.pop %v1492
        %v1494 = vlaneseq
        %v1495 = vshrl.u32 %v1494, 7
        %v1496 = vsub.s32 0, %v1495
        %v1497 = vrot.slane %v1487, %v1496
        %v1498 = vsub.f32 %v790, %v1497
        %v1499 = vsub.f32 %v795, %v1497
        %v1500 = vsub.f32 %v800, %v1497
        %v1501 = vsub.f32 %v805, %v1497
        %v1502 = vsub.f32 %v810, %v1497
        %v1503 = vsub.f32 %v815, %v1497
        %v1504 = vsub.f32 %v820, %v1497
        %v1505 = vsub.f32 %v825, %v1497
        %v1506 = vsub.f32 %v830, %v1497
        %v1507 = vsub.f32 %v835, %v1497
        %v1508 = vsub.f32 %v840, %v1497
        %v1509 = vsub.f32 %v845, %v1497
        %v1510 = vsub.f32 %v850, %v1497
        %v1511 = vsub.f32 %v855, %v1497
        %v1512 = vsub.f32 %v860, %v1497
        %v1513 = vsub.f32 %v865, %v1497
        %v1514 = vsub.f32 %v870, %v1497
        %v1515 = vsub.f32 %v875, %v1497
        %v1516 = vsub.f32 %v880, %v1497
        %v1517 = vsub.f32 %v885, %v1497
        %v1518 = vsub.f32 %v890, %v1497
        %v1519 = vsub.f32 %v895, %v1497
        %v1520 = vsub.f32 %v900, %v1497
        %v1521 = vsub.f32 %v905, %v1497
        %v1522 = vsub.f32 %v910, %v1497
        %v1523 = vsub.f32 %v915, %v1497
        %v1524 = vsub.f32 %v920, %v1497
        %v1525 = vsub.f32 %v925, %v1497
        %v1526 = vsub.f32 %v930, %v1497
        %v1527 = vsub.f32 %v935, %v1497
        %v1528 = vsub.f32 %v940, %v1497
        %v1529 = vsub.f32 %v945, %v1497
        %v1530 = vand.u32 2147483647, %v1498
        %v1531 = vand.u32 2147483647, %v1499
        %v1532 = vand.u32 2147483647, %v1500
        %v1533 = vand.u32 2147483647, %v1501
        %v1534 = vand.u32 2147483647, %v1502
        %v1535 = vand.u32 2147483647, %v1503
        %v1536 = vand.u32 2147483647, %v1504
        %v1537 = vand.u32 2147483647, %v1505
        %v1538 = vand.u32 2147483647, %v1506
        %v1539 = vand.u32 2147483647, %v1507
        %v1540 = vand.u32 2147483647, %v1508
        %v1541 = vand.u32 2147483647, %v1509
        %v1542 = vand.u32 2147483647, %v1510
        %v1543 = vand.u32 2147483647, %v1511
        %v1544 = vand.u32 2147483647, %v1512
        %v1545 = vand.u32 2147483647, %v1513
        %v1546 = vand.u32 2147483647, %v1514
        %v1547 = vand.u32 2147483647, %v1515
        %v1548 = vand.u32 2147483647, %v1516
        %v1549 = vand.u32 2147483647, %v1517
        %v1550 = vand.u32 2147483647, %v1518
        %v1551 = vand.u32 2147483647, %v1519
        %v1552 = vand.u32 2147483647, %v1520
        %v1553 = vand.u32 2147483647, %v1521
        %v1554 = vand.u32 2147483647, %v1522
        %v1555 = vand.u32 2147483647, %v1523
        %v1556 = vand.u32 2147483647, %v1524
        %v1557 = vand.u32 2147483647, %v1525
        %v1558 = vand.u32 2147483647, %v1526
        %v1559 = vand.u32 2147483647, %v1527
        %v1560 = vand.u32 2147483647, %v1528
        %v1561 = vand.u32 2147483647, %v1529
        %v1562 = vsub.f32 1.0, %v1530
        %v1563 = vsub.f32 1.0, %v1531
        %v1564 = vsub.f32 1.0, %v1532
        %v1565 = vsub.f32 1.0, %v1533
        %v1566 = vsub.f32 1.0, %v1534
        %v1567 = vsub.f32 1.0, %v1535
        %v1568 = vsub.f32 1.0, %v1536
        %v1569 = vsub.f32 1.0, %v1537
        %v1570 = vsub.f32 1.0, %v1538
        %v1571 = vsub.f32 1.0, %v1539
        %v1572 = vsub.f32 1.0, %v1540
        %v1573 = vsub.f32 1.0, %v1541
        %v1574 = vsub.f32 1.0, %v1542
        %v1575 = vsub.f32 1.0, %v1543
        %v1576 = vsub.f32 1.0, %v1544
        %v1577 = vsub.f32 1.0, %v1545
        %v1578 = vsub.f32 1.0, %v1546
        %v1579 = vsub.f32 1.0, %v1547
        %v1580 = vsub.f32 1.0, %v1548
        %v1581 = vsub.f32 1.0, %v1549
        %v1582 = vsub.f32 1.0, %v1550
        %v1583 = vsub.f32 1.0, %v1551
        %v1584 = vsub.f32 1.0, %v1552
        %v1585 = vsub.f32 1.0, %v1553
        %v1586 = vsub.f32 1.0, %v1554
        %v1587 = vsub.f32 1.0, %v1555
        %v1588 = vsub.f32 1.0, %v1556
        %v1589 = vsub.f32 1.0, %v1557
        %v1590 = vsub.f32 1.0, %v1558
        %v1591 = vsub.f32 1.0, %v1559
        %v1592 = vsub.f32 1.0, %v1560
        %v1593 = vsub.f32 1.0, %v1561
        %v1594 = vmax.f32 %v1562, 0.0
        %v1595 = vmax.f32 %v1563, 0.0
        %v1596 = vmax.f32 %v1564, 0.0
        %v1597 = vmax.f32 %v1565, 0.0
        %v1598 = vmax.f32 %v1566, 0.0
        %v1599 = vmax.f32 %v1567, 0.0
        %v1600 = vmax.f32 %v1568, 0.0
        %v1601 = vmax.f32 %v1569, 0.0
        %v1602 = vmax.f32 %v1570, 0.0
        %v1603 = vmax.f32 %v1571, 0.0
        %v1604 = vmax.f32 %v1572, 0.0
        %v1605 = vmax.f32 %v1573, 0.0
        %v1606 = vmax.f32 %v1574, 0.0
        %v1607 = vmax.f32 %v1575, 0.0
        %v1608 = vmax.f32 %v1576, 0.0
        %v1609 = vmax.f32 %v1577, 0.0
        %v1610 = vmax.f32 %v1578, 0.0
        %v1611 = vmax.f32 %v1579, 0.0
        %v1612 = vmax.f32 %v1580, 0.0
        %v1613 = vmax.f32 %v1581, 0.0
        %v1614 = vmax.f32 %v1582, 0.0
        %v1615 = vmax.f32 %v1583, 0.0
        %v1616 = vmax.f32 %v1584, 0.0
        %v1617 = vmax.f32 %v1585, 0.0
        %v1618 = vmax.f32 %v1586, 0.0
        %v1619 = vmax.f32 %v1587, 0.0
        %v1620 = vmax.f32 %v1588, 0.0
        %v1621 = vmax.f32 %v1589, 0.0
        %v1622 = vmax.f32 %v1590, 0.0
        %v1623 = vmax.f32 %v1591, 0.0
        %v1624 = vmax.f32 %v1592, 0.0
        %v1625 = vmax.f32 %v1593, 0.0
        %v1626 = vlaneseq
        %v1627 = vshrl.u32 %v1626, 7
        %v1628 = vsub.s32 0, %v1627
        %v1629 = vrot.slane %v1484, %v1628
        %v1630 = vsub.f32 %v1082, %v1629
        %v1631 = vsub.f32 %v1087, %v1629
        %v1632 = vsub.f32 %v1092, %v1629
        %v1633 = vsub.f32 %v1097, %v1629
        %v1634 = vsub.f32 %v1102, %v1629
        %v1635 = vsub.f32 %v1107, %v1629
        %v1636 = vsub.f32 %v1112, %v1629
        %v1637 = vsub.f32 %v1117, %v1629
        %v1638 = vsub.f32 %v1122, %v1629
        %v1639 = vsub.f32 %v1127, %v1629
        %v1640 = vsub.f32 %v1132, %v1629
        %v1641 = vsub.f32 %v1137, %v1629
        %v1642 = vsub.f32 %v1142, %v1629
        %v1643 = vsub.f32 %v1147, %v1629
        %v1644 = vsub.f32 %v1152, %v1629
        %v1645 = vsub.f32 %v1157, %v1629
        %v1646 = vsub.f32 %v1162, %v1629
        %v1647 = vsub.f32 %v1167, %v1629
        %v1648 = vsub.f32 %v1172, %v1629
        %v1649 = vsub.f32 %v1177, %v1629
        %v1650 = vsub.f32 %v1182, %v1629
        %v1651 = vsub.f32 %v1187, %v1629
        %v1652 = vsub.f32 %v1192, %v1629
        %v1653 = vsub.f32 %v1197, %v1629
        %v1654 = vsub.f32 %v1202, %v1629
        %v1655 = vsub.f32 %v1207, %v1629
        %v1656 = vsub.f32 %v1212, %v1629
        %v1657 = vsub.f32 %v1217, %v1629
        %v1658 = vsub.f32 %v1222, %v1629
        %v1659 = vsub.f32 %v1227, %v1629
        %v1660 = vsub.f32 %v1232, %v1629
        %v1661 = vsub.f32 %v1237, %v1629
        %v1662 = vand.u32 2147483647, %v1630
        %v1663 = vand.u32 2147483647, %v1631
        %v1664 = vand.u32 2147483647, %v1632
        %v1665 = vand.u32 2147483647, %v1633
        %v1666 = vand.u32 2147483647, %v1634
        %v1667 = vand.u32 2147483647, %v1635
        %v1668 = vand.u32 2147483647, %v1636
        %v1669 = vand.u32 2147483647, %v1637
        %v1670 = vand.u32 2147483647, %v1638
        %v1671 = vand.u32 2147483647, %v1639
        %v1672 = vand.u32 2147483647, %v1640
        %v1673 = vand.u32 2147483647, %v1641
        %v1674 = vand.u32 2147483647, %v1642
        %v1675 = vand.u32 2147483647, %v1643
        %v1676 = vand.u32 2147483647, %v1644
        %v1677 = vand.u32 2147483647, %v1645
        %v1678 = vand.u32 2147483647, %v1646
        %v1679 = vand.u32 2147483647, %v1647
        %v1680 = vand.u32 2147483647, %v1648
        %v1681 = vand.u32 2147483647, %v1649
        %v1682 = vand.u32 2147483647, %v1650
        %v1683 = vand.u32 2147483647, %v1651
        %v1684 = vand.u32 2147483647, %v1652
        %v1685 = vand.u32 2147483647, %v1653
        %v1686 = vand.u32 2147483647, %v1654
        %v1687 = vand.u32 2147483647, %v1655
        %v1688 = vand.u32 2147483647, %v1656
        %v1689 = vand.u32 2147483647, %v1657
        %v1690 = vand.u32 2147483647, %v1658
        %v1691 = vand.u32 2147483647, %v1659
        %v1692 = vand.u32 2147483647, %v1660
        %v1693 = vand.u32 2147483647, %v1661
        %v1694 = vsub.f32 1.0, %v1662
        %v1695 = vsub.f32 1.0, %v1663
        %v1696 = vsub.f32 1.0, %v1664
        %v1697 = vsub.f32 1.0, %v1665
        %v1698 = vsub.f32 1.0, %v1666
        %v1699 = vsub.f32 1.0, %v1667
        %v1700 = vsub.f32 1.0, %v1668
        %v1701 = vsub.f32 1.0, %v1669
        %v1702 = vsub.f32 1.0, %v1670
        %v1703 = vsub.f32 1.0, %v1671
        %v1704 = vsub.f32 1.0, %v1672
        %v1705 = vsub.f32 1.0, %v1673
        %v1706 = vsub.f32 1.0, %v1674
        %v1707 = vsub.f32 1.0, %v1675
        %v1708 = vsub.f32 1.0, %v1676
        %v1709 = vsub.f32 1.0, %v1677
        %v1710 = vsub.f32 1.0, %v1678
        %v1711 = vsub.f32 1.0, %v1679
        %v1712 = vsub.f32 1.0, %v1680
        %v1713 = vsub.f32 1.0, %v1681
        %v1714 = vsub.f32 1.0, %v1682
        %v1715 = vsub.f32 1.0, %v1683
        %v1716 = vsub.f32 1.0, %v1684
        %v1717 = vsub.f32 1.0, %v1685
        %v1718 = vsub.f32 1.0, %v1686
        %v1719 = vsub.f32 1.0, %v1687
        %v1720 = vsub.f32 1.0, %v1688
        %v1721 = vsub.f32 1.0, %v1689
        %v1722 = vsub.f32 1.0, %v1690
        %v1723 = vsub.f32 1.0, %v1691
        %v1724 = vsub.f32 1.0, %v1692
        %v1725 = vsub.f32 1.0, %v1693
        %v1726 = vmax.f32 %v1694, 0.0
        %v1727 = vmax.f32 %v1695, 0.0
        %v1728 = vmax.f32 %v1696, 0.0
        %v1729 = vmax.f32 %v1697, 0.0
        %v1730 = vmax.f32 %v1698, 0.0
        %v1731 = vmax.f32 %v1699, 0.0
        %v1732 = vmax.f32 %v1700, 0.0
        %v1733 = vmax.f32 %v1701, 0.0
        %v1734 = vmax.f32 %v1702, 0.0
        %v1735 = vmax.f32 %v1703, 0.0
        %v1736 = vmax.f32 %v1704, 0.0
        %v1737 = vmax.f32 %v1705, 0.0
        %v1738 = vmax.f32 %v1706, 0.0
        %v1739 = vmax.f32 %v1707, 0.0
        %v1740 = vmax.f32 %v1708, 0.0
        %v1741 = vmax.f32 %v1709, 0.0
        %v1742 = vmax.f32 %v1710, 0.0
        %v1743 = vmax.f32 %v1711, 0.0
        %v1744 = vmax.f32 %v1712, 0.0
        %v1745 = vmax.f32 %v1713, 0.0
        %v1746 = vmax.f32 %v1714, 0.0
        %v1747 = vmax.f32 %v1715, 0.0
        %v1748 = vmax.f32 %v1716, 0.0
        %v1749 = vmax.f32 %v1717, 0.0
        %v1750 = vmax.f32 %v1718, 0.0
        %v1751 = vmax.f32 %v1719, 0.0
        %v1752 = vmax.f32 %v1720, 0.0
        %v1753 = vmax.f32 %v1721, 0.0
        %v1754 = vmax.f32 %v1722, 0.0
        %v1755 = vmax.f32 %v1723, 0.0
        %v1756 = vmax.f32 %v1724, 0.0
        %v1757 = vmax.f32 %v1725, 0.0
        %v1758 = vmul.f32 %v1594, %v1726
        %v1759 = vmul.f32 %v1595, %v1727
        %v1760 = vmul.f32 %v1596, %v1728
        %v1761 = vmul.f32 %v1597, %v1729
        %v1762 = vmul.f32 %v1598, %v1730
        %v1763 = vmul.f32 %v1599, %v1731
        %v1764 = vmul.f32 %v1600, %v1732
        %v1765 = vmul.f32 %v1601, %v1733
        %v1766 = vmul.f32 %v1602, %v1734
        %v1767 = vmul.f32 %v1603, %v1735
        %v1768 = vmul.f32 %v1604, %v1736
        %v1769 = vmul.f32 %v1605, %v1737
        %v1770 = vmul.f32 %v1606, %v1738
        %v1771 = vmul.f32 %v1607, %v1739
        %v1772 = vmul.f32 %v1608, %v1740
        %v1773 = vmul.f32 %v1609, %v1741
        %v1774 = vmul.f32 %v1610, %v1742
        %v1775 = vmul.f32 %v1611, %v1743
        %v1776 = vmul.f32 %v1612, %v1744
        %v1777 = vmul.f32 %v1613, %v1745
        %v1778 = vmul.f32 %v1614, %v1746
        %v1779 = vmul.f32 %v1615, %v1747
        %v1780 = vmul.f32 %v1616, %v1748
        %v1781 = vmul.f32 %v1617, %v1749
        %v1782 = vmul.f32 %v1618, %v1750
        %v1783 = vmul.f32 %v1619, %v1751
        %v1784 = vmul.f32 %v1620, %v1752
        %v1785 = vmul.f32 %v1621, %v1753
        %v1786 = vmul.f32 %v1622, %v1754
        %v1787 = vmul.f32 %v1623, %v1755
        %v1788 = vmul.f32 %v1624, %v1756
        %v1789 = vmul.f32 %v1625, %v1757
        %1790 = vmatprep.subr.mxu0 0.0
        %1791 = vmatpush1.msra.mxu0 %v1758
        %1792 = vmatprep.subr.mxu0 0.0
        %1793 = vmatpush1.msra.mxu0 %v1759
        %1794 = vmatprep.subr.mxu0 0.0
        %1795 = vmatpush1.msra.mxu0 %v1760
        %1796 = vmatprep.subr.mxu0 0.0
        %1797 = vmatpush1.msra.mxu0 %v1761
        %1798 = vmatprep.subr.mxu0 0.0
        %1799 = vmatpush1.msra.mxu0 %v1762
        %1800 = vmatprep.subr.mxu0 0.0
        %1801 = vmatpush1.msra.mxu0 %v1763
        %1802 = vmatprep.subr.mxu0 0.0
        %1803 = vmatpush1.msra.mxu0 %v1764
        %1804 = vmatprep.subr.mxu0 0.0
        %1805 = vmatpush1.msra.mxu0 %v1765
        %1806 = vmatprep.subr.mxu0 0.0
        %1807 = vmatpush1.msra.mxu0 %v1766
        %1808 = vmatprep.subr.mxu0 0.0
        %1809 = vmatpush1.msra.mxu0 %v1767
        %1810 = vmatprep.subr.mxu0 0.0
        %1811 = vmatpush1.msra.mxu0 %v1768
        %1812 = vmatprep.subr.mxu0 0.0
        %1813 = vmatpush1.msra.mxu0 %v1769
        %1814 = vmatprep.subr.mxu0 0.0
        %1815 = vmatpush1.msra.mxu0 %v1770
        %1816 = vmatprep.subr.mxu0 0.0
        %1817 = vmatpush1.msra.mxu0 %v1771
        %1818 = vmatprep.subr.mxu0 0.0
        %1819 = vmatpush1.msra.mxu0 %v1772
        %1820 = vmatprep.subr.mxu0 0.0
        %1821 = vmatpush1.msra.mxu0 %v1773
        %1822 = vmatprep.subr.mxu0 0.0
        %1823 = vmatpush1.msra.mxu0 %v1774
        %1824 = vmatprep.subr.mxu0 0.0
        %1825 = vmatpush1.msra.mxu0 %v1775
        %1826 = vmatprep.subr.mxu0 0.0
        %1827 = vmatpush1.msra.mxu0 %v1776
        %1828 = vmatprep.subr.mxu0 0.0
        %1829 = vmatpush1.msra.mxu0 %v1777
        %1830 = vmatprep.subr.mxu0 0.0
        %1831 = vmatpush1.msra.mxu0 %v1778
        %1832 = vmatprep.subr.mxu0 0.0
        %1833 = vmatpush1.msra.mxu0 %v1779
        %1834 = vmatprep.subr.mxu0 0.0
        %1835 = vmatpush1.msra.mxu0 %v1780
        %1836 = vmatprep.subr.mxu0 0.0
        %1837 = vmatpush1.msra.mxu0 %v1781
        %1838 = vmatprep.subr.mxu0 0.0
        %1839 = vmatpush1.msra.mxu0 %v1782
        %1840 = vmatprep.subr.mxu0 0.0
        %1841 = vmatpush1.msra.mxu0 %v1783
        %1842 = vmatprep.subr.mxu0 0.0
        %1843 = vmatpush1.msra.mxu0 %v1784
        %1844 = vmatprep.subr.mxu0 0.0
        %1845 = vmatpush1.msra.mxu0 %v1785
        %1846 = vmatprep.subr.mxu0 0.0
        %1847 = vmatpush1.msra.mxu0 %v1786
        %1848 = vmatprep.subr.mxu0 0.0
        %1849 = vmatpush1.msra.mxu0 %v1787
        %1850 = vmatprep.subr.mxu0 0.0
        %1851 = vmatpush1.msra.mxu0 %v1788
        %1852 = vmatprep.subr.mxu0 0.0
        %1853 = vmatpush1.msra.mxu0 %v1789
        %1854 = vmatprep.mubr.f32.mxu0 %v1404
        %1855 = vmatmul.mubr.f32.gmra.mrb[0].mxu0 %v710
        %v1856 = vpop.f32.mrb[0].mxu0
        %v1857 = vadd.f32 0.0, %v1856
        %v1858 = vpop.f32.mrb[0].mxu0
        %1859 = vdwg.mxu0
        %v1860 = vlaneseq
        %v1861 = vshrl.u32 %v1860, 7
        %v1862 = vsub.s32 0, %v1861
        %v1863 = vrot.slane %v1493, %v1862
        %v1864 = vmul.f32 %v1857, %v1863
        %1865 = vst [vmem:[#allocation2 + $0x4] sm:$0xf] %v1864
        %v1866 = vld [vmem:[%s558 + $0x2] sm:$0x1]
        %v1867 = vld [vmem:[%s507 + $0x2] sm:$0x1]
        %v1868 = vadd.f32 %v1866, %v1867
        %v1869 = vld [vmem:[%s558 + $0xb] sm:$0x1]
        %v1870 = vld [vmem:[%s514 + $0x2] sm:$0x1]
        %v1871 = vadd.f32 %v1869, %v1870
        %v1872 = vld [vmem:[%s558 + $0x14] sm:$0x1]
        %v1873 = vsub.f32 0.0, %v1872
        %v1874 = vmul.f32 %v1873, 1.442695
        %v1875 = vpow.pop %v1874
        %v1876 = vadd.f32 %v1875, 1.0
        %v1877 = vrcp.pop %v1876
        %v1878 = vlaneseq
        %v1879 = vshrl.u32 %v1878, 7
        %v1880 = vsub.s32 0, %v1879
        %v1881 = vrot.slane %v1871, %v1880
        %v1882 = vsub.f32 %v790, %v1881
        %v1883 = vsub.f32 %v795, %v1881
        %v1884 = vsub.f32 %v800, %v1881
        %v1885 = vsub.f32 %v805, %v1881
        %v1886 = vsub.f32 %v810, %v1881
        %v1887 = vsub.f32 %v815, %v1881
        %v1888 = vsub.f32 %v820, %v1881
        %v1889 = vsub.f32 %v825, %v1881
        %v1890 = vsub.f32 %v830, %v1881
        %v1891 = vsub.f32 %v835, %v1881
        %v1892 = vsub.f32 %v840, %v1881
        %v1893 = vsub.f32 %v845, %v1881
        %v1894 = vsub.f32 %v850, %v1881
        %v1895 = vsub.f32 %v855, %v1881
        %v1896 = vsub.f32 %v860, %v1881
        %v1897 = vsub.f32 %v865, %v1881
        %v1898 = vsub.f32 %v870, %v1881
        %v1899 = vsub.f32 %v875, %v1881
        %v1900 = vsub.f32 %v880, %v1881
        %v1901 = vsub.f32 %v885, %v1881
        %v1902 = vsub.f32 %v890, %v1881
        %v1903 = vsub.f32 %v895, %v1881
        %v1904 = vsub.f32 %v900, %v1881
        %v1905 = vsub.f32 %v905, %v1881
        %v1906 = vsub.f32 %v910, %v1881
        %v1907 = vsub.f32 %v915, %v1881
        %v1908 = vsub.f32 %v920, %v1881
        %v1909 = vsub.f32 %v925, %v1881
        %v1910 = vsub.f32 %v930, %v1881
        %v1911 = vsub.f32 %v935, %v1881
        %v1912 = vsub.f32 %v940, %v1881
        %v1913 = vsub.f32 %v945, %v1881
        %v1914 = vand.u32 2147483647, %v1882
        %v1915 = vand.u32 2147483647, %v1883
        %v1916 = vand.u32 2147483647, %v1884
        %v1917 = vand.u32 2147483647, %v1885
        %v1918 = vand.u32 2147483647, %v1886
        %v1919 = vand.u32 2147483647, %v1887
        %v1920 = vand.u32 2147483647, %v1888
        %v1921 = vand.u32 2147483647, %v1889
        %v1922 = vand.u32 2147483647, %v1890
        %v1923 = vand.u32 2147483647, %v1891
        %v1924 = vand.u32 2147483647, %v1892
        %v1925 = vand.u32 2147483647, %v1893
        %v1926 = vand.u32 2147483647, %v1894
        %v1927 = vand.u32 2147483647, %v1895
        %v1928 = vand.u32 2147483647, %v1896
        %v1929 = vand.u32 2147483647, %v1897
        %v1930 = vand.u32 2147483647, %v1898
        %v1931 = vand.u32 2147483647, %v1899
        %v1932 = vand.u32 2147483647, %v1900
        %v1933 = vand.u32 2147483647, %v1901
        %v1934 = vand.u32 2147483647, %v1902
        %v1935 = vand.u32 2147483647, %v1903
        %v1936 = vand.u32 2147483647, %v1904
        %v1937 = vand.u32 2147483647, %v1905
        %v1938 = vand.u32 2147483647, %v1906
        %v1939 = vand.u32 2147483647, %v1907
        %v1940 = vand.u32 2147483647, %v1908
        %v1941 = vand.u32 2147483647, %v1909
        %v1942 = vand.u32 2147483647, %v1910
        %v1943 = vand.u32 2147483647, %v1911
        %v1944 = vand.u32 2147483647, %v1912
        %v1945 = vand.u32 2147483647, %v1913
        %v1946 = vsub.f32 1.0, %v1914
        %v1947 = vsub.f32 1.0, %v1915
        %v1948 = vsub.f32 1.0, %v1916
        %v1949 = vsub.f32 1.0, %v1917
        %v1950 = vsub.f32 1.0, %v1918
        %v1951 = vsub.f32 1.0, %v1919
        %v1952 = vsub.f32 1.0, %v1920
        %v1953 = vsub.f32 1.0, %v1921
        %v1954 = vsub.f32 1.0, %v1922
        %v1955 = vsub.f32 1.0, %v1923
        %v1956 = vsub.f32 1.0, %v1924
        %v1957 = vsub.f32 1.0, %v1925
        %v1958 = vsub.f32 1.0, %v1926
        %v1959 = vsub.f32 1.0, %v1927
        %v1960 = vsub.f32 1.0, %v1928
        %v1961 = vsub.f32 1.0, %v1929
        %v1962 = vsub.f32 1.0, %v1930
        %v1963 = vsub.f32 1.0, %v1931
        %v1964 = vsub.f32 1.0, %v1932
        %v1965 = vsub.f32 1.0, %v1933
        %v1966 = vsub.f32 1.0, %v1934
        %v1967 = vsub.f32 1.0, %v1935
        %v1968 = vsub.f32 1.0, %v1936
        %v1969 = vsub.f32 1.0, %v1937
        %v1970 = vsub.f32 1.0, %v1938
        %v1971 = vsub.f32 1.0, %v1939
        %v1972 = vsub.f32 1.0, %v1940
        %v1973 = vsub.f32 1.0, %v1941
        %v1974 = vsub.f32 1.0, %v1942
        %v1975 = vsub.f32 1.0, %v1943
        %v1976 = vsub.f32 1.0, %v1944
        %v1977 = vsub.f32 1.0, %v1945
        %v1978 = vmax.f32 %v1946, 0.0
        %v1979 = vmax.f32 %v1947, 0.0
        %v1980 = vmax.f32 %v1948, 0.0
        %v1981 = vmax.f32 %v1949, 0.0
        %v1982 = vmax.f32 %v1950, 0.0
        %v1983 = vmax.f32 %v1951, 0.0
        %v1984 = vmax.f32 %v1952, 0.0
        %v1985 = vmax.f32 %v1953, 0.0
        %v1986 = vmax.f32 %v1954, 0.0
        %v1987 = vmax.f32 %v1955, 0.0
        %v1988 = vmax.f32 %v1956, 0.0
        %v1989 = vmax.f32 %v1957, 0.0
        %v1990 = vmax.f32 %v1958, 0.0
        %v1991 = vmax.f32 %v1959, 0.0
        %v1992 = vmax.f32 %v1960, 0.0
        %v1993 = vmax.f32 %v1961, 0.0
        %v1994 = vmax.f32 %v1962, 0.0
        %v1995 = vmax.f32 %v1963, 0.0
        %v1996 = vmax.f32 %v1964, 0.0
        %v1997 = vmax.f32 %v1965, 0.0
        %v1998 = vmax.f32 %v1966, 0.0
        %v1999 = vmax.f32 %v1967, 0.0
        %v2000 = vmax.f32 %v1968, 0.0
        %v2001 = vmax.f32 %v1969, 0.0
        %v2002 = vmax.f32 %v1970, 0.0
        %v2003 = vmax.f32 %v1971, 0.0
        %v2004 = vmax.f32 %v1972, 0.0
        %v2005 = vmax.f32 %v1973, 0.0
        %v2006 = vmax.f32 %v1974, 0.0
        %v2007 = vmax.f32 %v1975, 0.0
        %v2008 = vmax.f32 %v1976, 0.0
        %v2009 = vmax.f32 %v1977, 0.0
        %v2010 = vlaneseq
        %v2011 = vshrl.u32 %v2010, 7
        %v2012 = vsub.s32 0, %v2011
        %v2013 = vrot.slane %v1868, %v2012
        %v2014 = vsub.f32 %v1082, %v2013
        %v2015 = vsub.f32 %v1087, %v2013
        %v2016 = vsub.f32 %v1092, %v2013
        %v2017 = vsub.f32 %v1097, %v2013
        %v2018 = vsub.f32 %v1102, %v2013
        %v2019 = vsub.f32 %v1107, %v2013
        %v2020 = vsub.f32 %v1112, %v2013
        %v2021 = vsub.f32 %v1117, %v2013
        %v2022 = vsub.f32 %v1122, %v2013
        %v2023 = vsub.f32 %v1127, %v2013
        %v2024 = vsub.f32 %v1132, %v2013
        %v2025 = vsub.f32 %v1137, %v2013
        %v2026 = vsub.f32 %v1142, %v2013
        %v2027 = vsub.f32 %v1147, %v2013
        %v2028 = vsub.f32 %v1152, %v2013
        %v2029 = vsub.f32 %v1157, %v2013
        %v2030 = vsub.f32 %v1162, %v2013
        %v2031 = vsub.f32 %v1167, %v2013
        %v2032 = vsub.f32 %v1172, %v2013
        %v2033 = vsub.f32 %v1177, %v2013
        %v2034 = vsub.f32 %v1182, %v2013
        %v2035 = vsub.f32 %v1187, %v2013
        %v2036 = vsub.f32 %v1192, %v2013
        %v2037 = vsub.f32 %v1197, %v2013
        %v2038 = vsub.f32 %v1202, %v2013
        %v2039 = vsub.f32 %v1207, %v2013
        %v2040 = vsub.f32 %v1212, %v2013
        %v2041 = vsub.f32 %v1217, %v2013
        %v2042 = vsub.f32 %v1222, %v2013
        %v2043 = vsub.f32 %v1227, %v2013
        %v2044 = vsub.f32 %v1232, %v2013
        %v2045 = vsub.f32 %v1237, %v2013
        %v2046 = vand.u32 2147483647, %v2014
        %v2047 = vand.u32 2147483647, %v2015
        %v2048 = vand.u32 2147483647, %v2016
        %v2049 = vand.u32 2147483647, %v2017
        %v2050 = vand.u32 2147483647, %v2018
        %v2051 = vand.u32 2147483647, %v2019
        %v2052 = vand.u32 2147483647, %v2020
        %v2053 = vand.u32 2147483647, %v2021
        %v2054 = vand.u32 2147483647, %v2022
        %v2055 = vand.u32 2147483647, %v2023
        %v2056 = vand.u32 2147483647, %v2024
        %v2057 = vand.u32 2147483647, %v2025
        %v2058 = vand.u32 2147483647, %v2026
        %v2059 = vand.u32 2147483647, %v2027
        %v2060 = vand.u32 2147483647, %v2028
        %v2061 = vand.u32 2147483647, %v2029
        %v2062 = vand.u32 2147483647, %v2030
        %v2063 = vand.u32 2147483647, %v2031
        %v2064 = vand.u32 2147483647, %v2032
        %v2065 = vand.u32 2147483647, %v2033
        %v2066 = vand.u32 2147483647, %v2034
        %v2067 = vand.u32 2147483647, %v2035
        %v2068 = vand.u32 2147483647, %v2036
        %v2069 = vand.u32 2147483647, %v2037
        %v2070 = vand.u32 2147483647, %v2038
        %v2071 = vand.u32 2147483647, %v2039
        %v2072 = vand.u32 2147483647, %v2040
        %v2073 = vand.u32 2147483647, %v2041
        %v2074 = vand.u32 2147483647, %v2042
        %v2075 = vand.u32 2147483647, %v2043
        %v2076 = vand.u32 2147483647, %v2044
        %v2077 = vand.u32 2147483647, %v2045
        %v2078 = vsub.f32 1.0, %v2046
        %v2079 = vsub.f32 1.0, %v2047
        %v2080 = vsub.f32 1.0, %v2048
        %v2081 = vsub.f32 1.0, %v2049
        %v2082 = vsub.f32 1.0, %v2050
        %v2083 = vsub.f32 1.0, %v2051
        %v2084 = vsub.f32 1.0, %v2052
        %v2085 = vsub.f32 1.0, %v2053
        %v2086 = vsub.f32 1.0, %v2054
        %v2087 = vsub.f32 1.0, %v2055
        %v2088 = vsub.f32 1.0, %v2056
        %v2089 = vsub.f32 1.0, %v2057
        %v2090 = vsub.f32 1.0, %v2058
        %v2091 = vsub.f32 1.0, %v2059
        %v2092 = vsub.f32 1.0, %v2060
        %v2093 = vsub.f32 1.0, %v2061
        %v2094 = vsub.f32 1.0, %v2062
        %v2095 = vsub.f32 1.0, %v2063
        %v2096 = vsub.f32 1.0, %v2064
        %v2097 = vsub.f32 1.0, %v2065
        %v2098 = vsub.f32 1.0, %v2066
        %v2099 = vsub.f32 1.0, %v2067
        %v2100 = vsub.f32 1.0, %v2068
        %v2101 = vsub.f32 1.0, %v2069
        %v2102 = vsub.f32 1.0, %v2070
        %v2103 = vsub.f32 1.0, %v2071
        %v2104 = vsub.f32 1.0, %v2072
        %v2105 = vsub.f32 1.0, %v2073
        %v2106 = vsub.f32 1.0, %v2074
        %v2107 = vsub.f32 1.0, %v2075
        %v2108 = vsub.f32 1.0, %v2076
        %v2109 = vsub.f32 1.0, %v2077
        %v2110 = vmax.f32 %v2078, 0.0
        %v2111 = vmax.f32 %v2079, 0.0
        %v2112 = vmax.f32 %v2080, 0.0
        %v2113 = vmax.f32 %v2081, 0.0
        %v2114 = vmax.f32 %v2082, 0.0
        %v2115 = vmax.f32 %v2083, 0.0
        %v2116 = vmax.f32 %v2084, 0.0
        %v2117 = vmax.f32 %v2085, 0.0
        %v2118 = vmax.f32 %v2086, 0.0
        %v2119 = vmax.f32 %v2087, 0.0
        %v2120 = vmax.f32 %v2088, 0.0
        %v2121 = vmax.f32 %v2089, 0.0
        %v2122 = vmax.f32 %v2090, 0.0
        %v2123 = vmax.f32 %v2091, 0.0
        %v2124 = vmax.f32 %v2092, 0.0
        %v2125 = vmax.f32 %v2093, 0.0
        %v2126 = vmax.f32 %v2094, 0.0
        %v2127 = vmax.f32 %v2095, 0.0
        %v2128 = vmax.f32 %v2096, 0.0
        %v2129 = vmax.f32 %v2097, 0.0
        %v2130 = vmax.f32 %v2098, 0.0
        %v2131 = vmax.f32 %v2099, 0.0
        %v2132 = vmax.f32 %v2100, 0.0
        %v2133 = vmax.f32 %v2101, 0.0
        %v2134 = vmax.f32 %v2102, 0.0
        %v2135 = vmax.f32 %v2103, 0.0
        %v2136 = vmax.f32 %v2104, 0.0
        %v2137 = vmax.f32 %v2105, 0.0
        %v2138 = vmax.f32 %v2106, 0.0
        %v2139 = vmax.f32 %v2107, 0.0
        %v2140 = vmax.f32 %v2108, 0.0
        %v2141 = vmax.f32 %v2109, 0.0
        %v2142 = vmul.f32 %v1978, %v2110
        %v2143 = vmul.f32 %v1979, %v2111
        %v2144 = vmul.f32 %v1980, %v2112
        %v2145 = vmul.f32 %v1981, %v2113
        %v2146 = vmul.f32 %v1982, %v2114
        %v2147 = vmul.f32 %v1983, %v2115
        %v2148 = vmul.f32 %v1984, %v2116
        %v2149 = vmul.f32 %v1985, %v2117
        %v2150 = vmul.f32 %v1986, %v2118
        %v2151 = vmul.f32 %v1987, %v2119
        %v2152 = vmul.f32 %v1988, %v2120
        %v2153 = vmul.f32 %v1989, %v2121
        %v2154 = vmul.f32 %v1990, %v2122
        %v2155 = vmul.f32 %v1991, %v2123
        %v2156 = vmul.f32 %v1992, %v2124
        %v2157 = vmul.f32 %v1993, %v2125
        %v2158 = vmul.f32 %v1994, %v2126
        %v2159 = vmul.f32 %v1995, %v2127
        %v2160 = vmul.f32 %v1996, %v2128
        %v2161 = vmul.f32 %v1997, %v2129
        %v2162 = vmul.f32 %v1998, %v2130
        %v2163 = vmul.f32 %v1999, %v2131
        %v2164 = vmul.f32 %v2000, %v2132
        %v2165 = vmul.f32 %v2001, %v2133
        %v2166 = vmul.f32 %v2002, %v2134
        %v2167 = vmul.f32 %v2003, %v2135
        %v2168 = vmul.f32 %v2004, %v2136
        %v2169 = vmul.f32 %v2005, %v2137
        %v2170 = vmul.f32 %v2006, %v2138
        %v2171 = vmul.f32 %v2007, %v2139
        %v2172 = vmul.f32 %v2008, %v2140
        %v2173 = vmul.f32 %v2009, %v2141
        %2174 = vmatprep.subr.mxu0 0.0
        %2175 = vmatpush1.msra.mxu0 %v2142
        %2176 = vmatprep.subr.mxu0 0.0
        %2177 = vmatpush1.msra.mxu0 %v2143
        %2178 = vmatprep.subr.mxu0 0.0
        %2179 = vmatpush1.msra.mxu0 %v2144
        %2180 = vmatprep.subr.mxu0 0.0
        %2181 = vmatpush1.msra.mxu0 %v2145
        %2182 = vmatprep.subr.mxu0 0.0
        %2183 = vmatpush1.msra.mxu0 %v2146
        %2184 = vmatprep.subr.mxu0 0.0
        %2185 = vmatpush1.msra.mxu0 %v2147
        %2186 = vmatprep.subr.mxu0 0.0
        %2187 = vmatpush1.msra.mxu0 %v2148
        %2188 = vmatprep.subr.mxu0 0.0
        %2189 = vmatpush1.msra.mxu0 %v2149
        %2190 = vmatprep.subr.mxu0 0.0
        %2191 = vmatpush1.msra.mxu0 %v2150
        %2192 = vmatprep.subr.mxu0 0.0
        %2193 = vmatpush1.msra.mxu0 %v2151
        %2194 = vmatprep.subr.mxu0 0.0
        %2195 = vmatpush1.msra.mxu0 %v2152
        %2196 = vmatprep.subr.mxu0 0.0
        %2197 = vmatpush1.msra.mxu0 %v2153
        %2198 = vmatprep.subr.mxu0 0.0
        %2199 = vmatpush1.msra.mxu0 %v2154
        %2200 = vmatprep.subr.mxu0 0.0
        %2201 = vmatpush1.msra.mxu0 %v2155
        %2202 = vmatprep.subr.mxu0 0.0
        %2203 = vmatpush1.msra.mxu0 %v2156
        %2204 = vmatprep.subr.mxu0 0.0
        %2205 = vmatpush1.msra.mxu0 %v2157
        %2206 = vmatprep.subr.mxu0 0.0
        %2207 = vmatpush1.msra.mxu0 %v2158
        %2208 = vmatprep.subr.mxu0 0.0
        %2209 = vmatpush1.msra.mxu0 %v2159
        %2210 = vmatprep.subr.mxu0 0.0
        %2211 = vmatpush1.msra.mxu0 %v2160
        %2212 = vmatprep.subr.mxu0 0.0
        %2213 = vmatpush1.msra.mxu0 %v2161
        %2214 = vmatprep.subr.mxu0 0.0
        %2215 = vmatpush1.msra.mxu0 %v2162
        %2216 = vmatprep.subr.mxu0 0.0
        %2217 = vmatpush1.msra.mxu0 %v2163
        %2218 = vmatprep.subr.mxu0 0.0
        %2219 = vmatpush1.msra.mxu0 %v2164
        %2220 = vmatprep.subr.mxu0 0.0
        %2221 = vmatpush1.msra.mxu0 %v2165
        %2222 = vmatprep.subr.mxu0 0.0
        %2223 = vmatpush1.msra.mxu0 %v2166
        %2224 = vmatprep.subr.mxu0 0.0
        %2225 = vmatpush1.msra.mxu0 %v2167
        %2226 = vmatprep.subr.mxu0 0.0
        %2227 = vmatpush1.msra.mxu0 %v2168
        %2228 = vmatprep.subr.mxu0 0.0
        %2229 = vmatpush1.msra.mxu0 %v2169
        %2230 = vmatprep.subr.mxu0 0.0
        %2231 = vmatpush1.msra.mxu0 %v2170
        %2232 = vmatprep.subr.mxu0 0.0
        %2233 = vmatpush1.msra.mxu0 %v2171
        %2234 = vmatprep.subr.mxu0 0.0
        %2235 = vmatpush1.msra.mxu0 %v2172
        %2236 = vmatprep.subr.mxu0 0.0
        %2237 = vmatpush1.msra.mxu0 %v2173
        %2238 = vmatprep.mubr.f32.mxu0 %v1404
        %2239 = vmatmul.mubr.f32.gmra.mrb[0].mxu0 %v710
        %v2240 = vpop.f32.mrb[0].mxu0
        %v2241 = vadd.f32 0.0, %v2240
        %v2242 = vpop.f32.mrb[0].mxu0
        %2243 = vdwg.mxu0
        %v2244 = vlaneseq
        %v2245 = vshrl.u32 %v2244, 7
        %v2246 = vsub.s32 0, %v2245
        %v2247 = vrot.slane %v1877, %v2246
        %v2248 = vmul.f32 %v2241, %v2247
        %2249 = vst [vmem:[#allocation2 + $0x8] sm:$0xf] %v2248
        %v2250 = vld [vmem:[%s558 + $0x3] sm:$0x1]
        %v2251 = vld [vmem:[%s507 + $0x3] sm:$0x1]
        %v2252 = vadd.f32 %v2250, %v2251
        %v2253 = vld [vmem:[%s558 + $0xc] sm:$0x1]
        %v2254 = vld [vmem:[%s514 + $0x3] sm:$0x1]
        %v2255 = vadd.f32 %v2253, %v2254
        %v2256 = vld [vmem:[%s558 + $0x15] sm:$0x1]
        %v2257 = vsub.f32 0.0, %v2256
        %v2258 = vmul.f32 %v2257, 1.442695
        %v2259 = vpow.pop %v2258
        %v2260 = vadd.f32 %v2259, 1.0
        %v2261 = vrcp.pop %v2260
        %v2262 = vlaneseq
        %v2263 = vshrl.u32 %v2262, 7
        %v2264 = vsub.s32 0, %v2263
        %v2265 = vrot.slane %v2255, %v2264
        %v2266 = vsub.f32 %v790, %v2265
        %v2267 = vsub.f32 %v795, %v2265
        %v2268 = vsub.f32 %v800, %v2265
        %v2269 = vsub.f32 %v805, %v2265
        %v2270 = vsub.f32 %v810, %v2265
        %v2271 = vsub.f32 %v815, %v2265
        %v2272 = vsub.f32 %v820, %v2265
        %v2273 = vsub.f32 %v825, %v2265
        %v2274 = vsub.f32 %v830, %v2265
        %v2275 = vsub.f32 %v835, %v2265
        %v2276 = vsub.f32 %v840, %v2265
        %v2277 = vsub.f32 %v845, %v2265
        %v2278 = vsub.f32 %v850, %v2265
        %v2279 = vsub.f32 %v855, %v2265
        %v2280 = vsub.f32 %v860, %v2265
        %v2281 = vsub.f32 %v865, %v2265
        %v2282 = vsub.f32 %v870, %v2265
        %v2283 = vsub.f32 %v875, %v2265
        %v2284 = vsub.f32 %v880, %v2265
        %v2285 = vsub.f32 %v885, %v2265
        %v2286 = vsub.f32 %v890, %v2265
        %v2287 = vsub.f32 %v895, %v2265
        %v2288 = vsub.f32 %v900, %v2265
        %v2289 = vsub.f32 %v905, %v2265
        %v2290 = vsub.f32 %v910, %v2265
        %v2291 = vsub.f32 %v915, %v2265
        %v2292 = vsub.f32 %v920, %v2265
        %v2293 = vsub.f32 %v925, %v2265
        %v2294 = vsub.f32 %v930, %v2265
        %v2295 = vsub.f32 %v935, %v2265
        %v2296 = vsub.f32 %v940, %v2265
        %v2297 = vsub.f32 %v945, %v2265
        %v2298 = vand.u32 2147483647, %v2266
        %v2299 = vand.u32 2147483647, %v2267
        %v2300 = vand.u32 2147483647, %v2268
        %v2301 = vand.u32 2147483647, %v2269
        %v2302 = vand.u32 2147483647, %v2270
        %v2303 = vand.u32 2147483647, %v2271
        %v2304 = vand.u32 2147483647, %v2272
        %v2305 = vand.u32 2147483647, %v2273
        %v2306 = vand.u32 2147483647, %v2274
        %v2307 = vand.u32 2147483647, %v2275
        %v2308 = vand.u32 2147483647, %v2276
        %v2309 = vand.u32 2147483647, %v2277
        %v2310 = vand.u32 2147483647, %v2278
        %v2311 = vand.u32 2147483647, %v2279
        %v2312 = vand.u32 2147483647, %v2280
        %v2313 = vand.u32 2147483647, %v2281
        %v2314 = vand.u32 2147483647, %v2282
        %v2315 = vand.u32 2147483647, %v2283
        %v2316 = vand.u32 2147483647, %v2284
        %v2317 = vand.u32 2147483647, %v2285
        %v2318 = vand.u32 2147483647, %v2286
        %v2319 = vand.u32 2147483647, %v2287
        %v2320 = vand.u32 2147483647, %v2288
        %v2321 = vand.u32 2147483647, %v2289
        %v2322 = vand.u32 2147483647, %v2290
        %v2323 = vand.u32 2147483647, %v2291
        %v2324 = vand.u32 2147483647, %v2292
        %v2325 = vand.u32 2147483647, %v2293
        %v2326 = vand.u32 2147483647, %v2294
        %v2327 = vand.u32 2147483647, %v2295
        %v2328 = vand.u32 2147483647, %v2296
        %v2329 = vand.u32 2147483647, %v2297
        %v2330 = vsub.f32 1.0, %v2298
        %v2331 = vsub.f32 1.0, %v2299
        %v2332 = vsub.f32 1.0, %v2300
        %v2333 = vsub.f32 1.0, %v2301
        %v2334 = vsub.f32 1.0, %v2302
        %v2335 = vsub.f32 1.0, %v2303
        %v2336 = vsub.f32 1.0, %v2304
        %v2337 = vsub.f32 1.0, %v2305
        %v2338 = vsub.f32 1.0, %v2306
        %v2339 = vsub.f32 1.0, %v2307
        %v2340 = vsub.f32 1.0, %v2308
        %v2341 = vsub.f32 1.0, %v2309
        %v2342 = vsub.f32 1.0, %v2310
        %v2343 = vsub.f32 1.0, %v2311
        %v2344 = vsub.f32 1.0, %v2312
        %v2345 = vsub.f32 1.0, %v2313
        %v2346 = vsub.f32 1.0, %v2314
        %v2347 = vsub.f32 1.0, %v2315
        %v2348 = vsub.f32 1.0, %v2316
        %v2349 = vsub.f32 1.0, %v2317
        %v2350 = vsub.f32 1.0, %v2318
        %v2351 = vsub.f32 1.0, %v2319
        %v2352 = vsub.f32 1.0, %v2320
        %v2353 = vsub.f32 1.0, %v2321
        %v2354 = vsub.f32 1.0, %v2322
        %v2355 = vsub.f32 1.0, %v2323
        %v2356 = vsub.f32 1.0, %v2324
        %v2357 = vsub.f32 1.0, %v2325
        %v2358 = vsub.f32 1.0, %v2326
        %v2359 = vsub.f32 1.0, %v2327
        %v2360 = vsub.f32 1.0, %v2328
        %v2361 = vsub.f32 1.0, %v2329
        %v2362 = vmax.f32 %v2330, 0.0
        %v2363 = vmax.f32 %v2331, 0.0
        %v2364 = vmax.f32 %v2332, 0.0
        %v2365 = vmax.f32 %v2333, 0.0
        %v2366 = vmax.f32 %v2334, 0.0
        %v2367 = vmax.f32 %v2335, 0.0
        %v2368 = vmax.f32 %v2336, 0.0
        %v2369 = vmax.f32 %v2337, 0.0
        %v2370 = vmax.f32 %v2338, 0.0
        %v2371 = vmax.f32 %v2339, 0.0
        %v2372 = vmax.f32 %v2340, 0.0
        %v2373 = vmax.f32 %v2341, 0.0
        %v2374 = vmax.f32 %v2342, 0.0
        %v2375 = vmax.f32 %v2343, 0.0
        %v2376 = vmax.f32 %v2344, 0.0
        %v2377 = vmax.f32 %v2345, 0.0
        %v2378 = vmax.f32 %v2346, 0.0
        %v2379 = vmax.f32 %v2347, 0.0
        %v2380 = vmax.f32 %v2348, 0.0
        %v2381 = vmax.f32 %v2349, 0.0
        %v2382 = vmax.f32 %v2350, 0.0
        %v2383 = vmax.f32 %v2351, 0.0
        %v2384 = vmax.f32 %v2352, 0.0
        %v2385 = vmax.f32 %v2353, 0.0
        %v2386 = vmax.f32 %v2354, 0.0
        %v2387 = vmax.f32 %v2355, 0.0
        %v2388 = vmax.f32 %v2356, 0.0
        %v2389 = vmax.f32 %v2357, 0.0
        %v2390 = vmax.f32 %v2358, 0.0
        %v2391 = vmax.f32 %v2359, 0.0
        %v2392 = vmax.f32 %v2360, 0.0
        %v2393 = vmax.f32 %v2361, 0.0
        %v2394 = vlaneseq
        %v2395 = vshrl.u32 %v2394, 7
        %v2396 = vsub.s32 0, %v2395
        %v2397 = vrot.slane %v2252, %v2396
        %v2398 = vsub.f32 %v1082, %v2397
        %v2399 = vsub.f32 %v1087, %v2397
        %v2400 = vsub.f32 %v1092, %v2397
        %v2401 = vsub.f32 %v1097, %v2397
        %v2402 = vsub.f32 %v1102, %v2397
        %v2403 = vsub.f32 %v1107, %v2397
        %v2404 = vsub.f32 %v1112, %v2397
        %v2405 = vsub.f32 %v1117, %v2397
        %v2406 = vsub.f32 %v1122, %v2397
        %v2407 = vsub.f32 %v1127, %v2397
        %v2408 = vsub.f32 %v1132, %v2397
        %v2409 = vsub.f32 %v1137, %v2397
        %v2410 = vsub.f32 %v1142, %v2397
        %v2411 = vsub.f32 %v1147, %v2397
        %v2412 = vsub.f32 %v1152, %v2397
        %v2413 = vsub.f32 %v1157, %v2397
        %v2414 = vsub.f32 %v1162, %v2397
        %v2415 = vsub.f32 %v1167, %v2397
        %v2416 = vsub.f32 %v1172, %v2397
        %v2417 = vsub.f32 %v1177, %v2397
        %v2418 = vsub.f32 %v1182, %v2397
        %v2419 = vsub.f32 %v1187, %v2397
        %v2420 = vsub.f32 %v1192, %v2397
        %v2421 = vsub.f32 %v1197, %v2397
        %v2422 = vsub.f32 %v1202, %v2397
        %v2423 = vsub.f32 %v1207, %v2397
        %v2424 = vsub.f32 %v1212, %v2397
        %v2425 = vsub.f32 %v1217, %v2397
        %v2426 = vsub.f32 %v1222, %v2397
        %v2427 = vsub.f32 %v1227, %v2397
        %v2428 = vsub.f32 %v1232, %v2397
        %v2429 = vsub.f32 %v1237, %v2397
        %v2430 = vand.u32 2147483647, %v2398
        %v2431 = vand.u32 2147483647, %v2399
        %v2432 = vand.u32 2147483647, %v2400
        %v2433 = vand.u32 2147483647, %v2401
        %v2434 = vand.u32 2147483647, %v2402
        %v2435 = vand.u32 2147483647, %v2403
        %v2436 = vand.u32 2147483647, %v2404
        %v2437 = vand.u32 2147483647, %v2405
        %v2438 = vand.u32 2147483647, %v2406
        %v2439 = vand.u32 2147483647, %v2407
        %v2440 = vand.u32 2147483647, %v2408
        %v2441 = vand.u32 2147483647, %v2409
        %v2442 = vand.u32 2147483647, %v2410
        %v2443 = vand.u32 2147483647, %v2411
        %v2444 = vand.u32 2147483647, %v2412
        %v2445 = vand.u32 2147483647, %v2413
        %v2446 = vand.u32 2147483647, %v2414
        %v2447 = vand.u32 2147483647, %v2415
        %v2448 = vand.u32 2147483647, %v2416
        %v2449 = vand.u32 2147483647, %v2417
        %v2450 = vand.u32 2147483647, %v2418
        %v2451 = vand.u32 2147483647, %v2419
        %v2452 = vand.u32 2147483647, %v2420
        %v2453 = vand.u32 2147483647, %v2421
        %v2454 = vand.u32 2147483647, %v2422
        %v2455 = vand.u32 2147483647, %v2423
        %v2456 = vand.u32 2147483647, %v2424
        %v2457 = vand.u32 2147483647, %v2425
        %v2458 = vand.u32 2147483647, %v2426
        %v2459 = vand.u32 2147483647, %v2427
        %v2460 = vand.u32 2147483647, %v2428
        %v2461 = vand.u32 2147483647, %v2429
        %v2462 = vsub.f32 1.0, %v2430
        %v2463 = vsub.f32 1.0, %v2431
        %v2464 = vsub.f32 1.0, %v2432
        %v2465 = vsub.f32 1.0, %v2433
        %v2466 = vsub.f32 1.0, %v2434
        %v2467 = vsub.f32 1.0, %v2435
        %v2468 = vsub.f32 1.0, %v2436
        %v2469 = vsub.f32 1.0, %v2437
        %v2470 = vsub.f32 1.0, %v2438
        %v2471 = vsub.f32 1.0, %v2439
        %v2472 = vsub.f32 1.0, %v2440
        %v2473 = vsub.f32 1.0, %v2441
        %v2474 = vsub.f32 1.0, %v2442
        %v2475 = vsub.f32 1.0, %v2443
        %v2476 = vsub.f32 1.0, %v2444
        %v2477 = vsub.f32 1.0, %v2445
        %v2478 = vsub.f32 1.0, %v2446
        %v2479 = vsub.f32 1.0, %v2447
        %v2480 = vsub.f32 1.0, %v2448
        %v2481 = vsub.f32 1.0, %v2449
        %v2482 = vsub.f32 1.0, %v2450
        %v2483 = vsub.f32 1.0, %v2451
        %v2484 = vsub.f32 1.0, %v2452
        %v2485 = vsub.f32 1.0, %v2453
        %v2486 = vsub.f32 1.0, %v2454
        %v2487 = vsub.f32 1.0, %v2455
        %v2488 = vsub.f32 1.0, %v2456
        %v2489 = vsub.f32 1.0, %v2457
        %v2490 = vsub.f32 1.0, %v2458
        %v2491 = vsub.f32 1.0, %v2459
        %v2492 = vsub.f32 1.0, %v2460
        %v2493 = vsub.f32 1.0, %v2461
        %v2494 = vmax.f32 %v2462, 0.0
        %v2495 = vmax.f32 %v2463, 0.0
        %v2496 = vmax.f32 %v2464, 0.0
        %v2497 = vmax.f32 %v2465, 0.0
        %v2498 = vmax.f32 %v2466, 0.0
        %v2499 = vmax.f32 %v2467, 0.0
        %v2500 = vmax.f32 %v2468, 0.0
        %v2501 = vmax.f32 %v2469, 0.0
        %v2502 = vmax.f32 %v2470, 0.0
        %v2503 = vmax.f32 %v2471, 0.0
        %v2504 = vmax.f32 %v2472, 0.0
        %v2505 = vmax.f32 %v2473, 0.0
        %v2506 = vmax.f32 %v2474, 0.0
        %v2507 = vmax.f32 %v2475, 0.0
        %v2508 = vmax.f32 %v2476, 0.0
        %v2509 = vmax.f32 %v2477, 0.0
        %v2510 = vmax.f32 %v2478, 0.0
        %v2511 = vmax.f32 %v2479, 0.0
        %v2512 = vmax.f32 %v2480, 0.0
        %v2513 = vmax.f32 %v2481, 0.0
        %v2514 = vmax.f32 %v2482, 0.0
        %v2515 = vmax.f32 %v2483, 0.0
        %v2516 = vmax.f32 %v2484, 0.0
        %v2517 = vmax.f32 %v2485, 0.0
        %v2518 = vmax.f32 %v2486, 0.0
        %v2519 = vmax.f32 %v2487, 0.0
        %v2520 = vmax.f32 %v2488, 0.0
        %v2521 = vmax.f32 %v2489, 0.0
        %v2522 = vmax.f32 %v2490, 0.0
        %v2523 = vmax.f32 %v2491, 0.0
        %v2524 = vmax.f32 %v2492, 0.0
        %v2525 = vmax.f32 %v2493, 0.0
        %v2526 = vmul.f32 %v2362, %v2494
        %v2527 = vmul.f32 %v2363, %v2495
        %v2528 = vmul.f32 %v2364, %v2496
        %v2529 = vmul.f32 %v2365, %v2497
        %v2530 = vmul.f32 %v2366, %v2498
        %v2531 = vmul.f32 %v2367, %v2499
        %v2532 = vmul.f32 %v2368, %v2500
        %v2533 = vmul.f32 %v2369, %v2501
        %v2534 = vmul.f32 %v2370, %v2502
        %v2535 = vmul.f32 %v2371, %v2503
        %v2536 = vmul.f32 %v2372, %v2504
        %v2537 = vmul.f32 %v2373, %v2505
        %v2538 = vmul.f32 %v2374, %v2506
        %v2539 = vmul.f32 %v2375, %v2507
        %v2540 = vmul.f32 %v2376, %v2508
        %v2541 = vmul.f32 %v2377, %v2509
        %v2542 = vmul.f32 %v2378, %v2510
        %v2543 = vmul.f32 %v2379, %v2511
        %v2544 = vmul.f32 %v2380, %v2512
        %v2545 = vmul.f32 %v2381, %v2513
        %v2546 = vmul.f32 %v2382, %v2514
        %v2547 = vmul.f32 %v2383, %v2515
        %v2548 = vmul.f32 %v2384, %v2516
        %v2549 = vmul.f32 %v2385, %v2517
        %v2550 = vmul.f32 %v2386, %v2518
        %v2551 = vmul.f32 %v2387, %v2519
        %v2552 = vmul.f32 %v2388, %v2520
        %v2553 = vmul.f32 %v2389, %v2521
        %v2554 = vmul.f32 %v2390, %v2522
        %v2555 = vmul.f32 %v2391, %v2523
        %v2556 = vmul.f32 %v2392, %v2524
        %v2557 = vmul.f32 %v2393, %v2525
        %2558 = vmatprep.subr.mxu0 0.0
        %2559 = vmatpush1.msra.mxu0 %v2526
        %2560 = vmatprep.subr.mxu0 0.0
        %2561 = vmatpush1.msra.mxu0 %v2527
        %2562 = vmatprep.subr.mxu0 0.0
        %2563 = vmatpush1.msra.mxu0 %v2528
        %2564 = vmatprep.subr.mxu0 0.0
        %2565 = vmatpush1.msra.mxu0 %v2529
        %2566 = vmatprep.subr.mxu0 0.0
        %2567 = vmatpush1.msra.mxu0 %v2530
        %2568 = vmatprep.subr.mxu0 0.0
        %2569 = vmatpush1.msra.mxu0 %v2531
        %2570 = vmatprep.subr.mxu0 0.0
        %2571 = vmatpush1.msra.mxu0 %v2532
        %2572 = vmatprep.subr.mxu0 0.0
        %2573 = vmatpush1.msra.mxu0 %v2533
        %2574 = vmatprep.subr.mxu0 0.0
        %2575 = vmatpush1.msra.mxu0 %v2534
        %2576 = vmatprep.subr.mxu0 0.0
        %2577 = vmatpush1.msra.mxu0 %v2535
        %2578 = vmatprep.subr.mxu0 0.0
        %2579 = vmatpush1.msra.mxu0 %v2536
        %2580 = vmatprep.subr.mxu0 0.0
        %2581 = vmatpush1.msra.mxu0 %v2537
        %2582 = vmatprep.subr.mxu0 0.0
        %2583 = vmatpush1.msra.mxu0 %v2538
        %2584 = vmatprep.subr.mxu0 0.0
        %2585 = vmatpush1.msra.mxu0 %v2539
        %2586 = vmatprep.subr.mxu0 0.0
        %2587 = vmatpush1.msra.mxu0 %v2540
        %2588 = vmatprep.subr.mxu0 0.0
        %2589 = vmatpush1.msra.mxu0 %v2541
        %2590 = vmatprep.subr.mxu0 0.0
        %2591 = vmatpush1.msra.mxu0 %v2542
        %2592 = vmatprep.subr.mxu0 0.0
        %2593 = vmatpush1.msra.mxu0 %v2543
        %2594 = vmatprep.subr.mxu0 0.0
        %2595 = vmatpush1.msra.mxu0 %v2544
        %2596 = vmatprep.subr.mxu0 0.0
        %2597 = vmatpush1.msra.mxu0 %v2545
        %2598 = vmatprep.subr.mxu0 0.0
        %2599 = vmatpush1.msra.mxu0 %v2546
        %2600 = vmatprep.subr.mxu0 0.0
        %2601 = vmatpush1.msra.mxu0 %v2547
        %2602 = vmatprep.subr.mxu0 0.0
        %2603 = vmatpush1.msra.mxu0 %v2548
        %2604 = vmatprep.subr.mxu0 0.0
        %2605 = vmatpush1.msra.mxu0 %v2549
        %2606 = vmatprep.subr.mxu0 0.0
        %2607 = vmatpush1.msra.mxu0 %v2550
        %2608 = vmatprep.subr.mxu0 0.0
        %2609 = vmatpush1.msra.mxu0 %v2551
        %2610 = vmatprep.subr.mxu0 0.0
        %2611 = vmatpush1.msra.mxu0 %v2552
        %2612 = vmatprep.subr.mxu0 0.0
        %2613 = vmatpush1.msra.mxu0 %v2553
        %2614 = vmatprep.subr.mxu0 0.0
        %2615 = vmatpush1.msra.mxu0 %v2554
        %2616 = vmatprep.subr.mxu0 0.0
        %2617 = vmatpush1.msra.mxu0 %v2555
        %2618 = vmatprep.subr.mxu0 0.0
        %2619 = vmatpush1.msra.mxu0 %v2556
        %2620 = vmatprep.subr.mxu0 0.0
        %2621 = vmatpush1.msra.mxu0 %v2557
        %2622 = vmatprep.mubr.f32.mxu0 %v1404
        %2623 = vmatmul.mubr.f32.gmra.mrb[0].mxu0 %v710
        %v2624 = vpop.f32.mrb[0].mxu0
        %v2625 = vadd.f32 0.0, %v2624
        %v2626 = vpop.f32.mrb[0].mxu0
        %2627 = vdwg.mxu0
        %v2628 = vlaneseq
        %v2629 = vshrl.u32 %v2628, 7
        %v2630 = vsub.s32 0, %v2629
        %v2631 = vrot.slane %v2261, %v2630
        %v2632 = vmul.f32 %v2625, %v2631
        %2633 = vst [vmem:[#allocation2 + $0xc] sm:$0xf] %v2632
        %v2634 = vld [vmem:[%s558 + $0x4] sm:$0x1]
        %v2635 = vld [vmem:[%s507 + $0x4] sm:$0x1]
        %v2636 = vadd.f32 %v2634, %v2635
        %v2637 = vld [vmem:[%s558 + $0xd] sm:$0x1]
        %v2638 = vld [vmem:[%s514 + $0x4] sm:$0x1]
        %v2639 = vadd.f32 %v2637, %v2638
        %v2640 = vld [vmem:[%s558 + $0x16] sm:$0x1]
        %v2641 = vsub.f32 0.0, %v2640
        %v2642 = vmul.f32 %v2641, 1.442695
        %v2643 = vpow.pop %v2642
        %v2644 = vadd.f32 %v2643, 1.0
        %v2645 = vrcp.pop %v2644
        %v2646 = vlaneseq
        %v2647 = vshrl.u32 %v2646, 7
        %v2648 = vsub.s32 0, %v2647
        %v2649 = vrot.slane %v2639, %v2648
        %v2650 = vsub.f32 %v790, %v2649
        %v2651 = vsub.f32 %v795, %v2649
        %v2652 = vsub.f32 %v800, %v2649
        %v2653 = vsub.f32 %v805, %v2649
        %v2654 = vsub.f32 %v810, %v2649
        %v2655 = vsub.f32 %v815, %v2649
        %v2656 = vsub.f32 %v820, %v2649
        %v2657 = vsub.f32 %v825, %v2649
        %v2658 = vsub.f32 %v830, %v2649
        %v2659 = vsub.f32 %v835, %v2649
        %v2660 = vsub.f32 %v840, %v2649
        %v2661 = vsub.f32 %v845, %v2649
        %v2662 = vsub.f32 %v850, %v2649
        %v2663 = vsub.f32 %v855, %v2649
        %v2664 = vsub.f32 %v860, %v2649
        %v2665 = vsub.f32 %v865, %v2649
        %v2666 = vsub.f32 %v870, %v2649
        %v2667 = vsub.f32 %v875, %v2649
        %v2668 = vsub.f32 %v880, %v2649
        %v2669 = vsub.f32 %v885, %v2649
        %v2670 = vsub.f32 %v890, %v2649
        %v2671 = vsub.f32 %v895, %v2649
        %v2672 = vsub.f32 %v900, %v2649
        %v2673 = vsub.f32 %v905, %v2649
        %v2674 = vsub.f32 %v910, %v2649
        %v2675 = vsub.f32 %v915, %v2649
        %v2676 = vsub.f32 %v920, %v2649
        %v2677 = vsub.f32 %v925, %v2649
        %v2678 = vsub.f32 %v930, %v2649
        %v2679 = vsub.f32 %v935, %v2649
        %v2680 = vsub.f32 %v940, %v2649
        %v2681 = vsub.f32 %v945, %v2649
        %v2682 = vand.u32 2147483647, %v2650
        %v2683 = vand.u32 2147483647, %v2651
        %v2684 = vand.u32 2147483647, %v2652
        %v2685 = vand.u32 2147483647, %v2653
        %v2686 = vand.u32 2147483647, %v2654
        %v2687 = vand.u32 2147483647, %v2655
        %v2688 = vand.u32 2147483647, %v2656
        %v2689 = vand.u32 2147483647, %v2657
        %v2690 = vand.u32 2147483647, %v2658
        %v2691 = vand.u32 2147483647, %v2659
        %v2692 = vand.u32 2147483647, %v2660
        %v2693 = vand.u32 2147483647, %v2661
        %v2694 = vand.u32 2147483647, %v2662
        %v2695 = vand.u32 2147483647, %v2663
        %v2696 = vand.u32 2147483647, %v2664
        %v2697 = vand.u32 2147483647, %v2665
        %v2698 = vand.u32 2147483647, %v2666
        %v2699 = vand.u32 2147483647, %v2667
        %v2700 = vand.u32 2147483647, %v2668
        %v2701 = vand.u32 2147483647, %v2669
        %v2702 = vand.u32 2147483647, %v2670
        %v2703 = vand.u32 2147483647, %v2671
        %v2704 = vand.u32 2147483647, %v2672
        %v2705 = vand.u32 2147483647, %v2673
        %v2706 = vand.u32 2147483647, %v2674
        %v2707 = vand.u32 2147483647, %v2675
        %v2708 = vand.u32 2147483647, %v2676
        %v2709 = vand.u32 2147483647, %v2677
        %v2710 = vand.u32 2147483647, %v2678
        %v2711 = vand.u32 2147483647, %v2679
        %v2712 = vand.u32 2147483647, %v2680
        %v2713 = vand.u32 2147483647, %v2681
        %v2714 = vsub.f32 1.0, %v2682
        %v2715 = vsub.f32 1.0, %v2683
        %v2716 = vsub.f32 1.0, %v2684
        %v2717 = vsub.f32 1.0, %v2685
        %v2718 = vsub.f32 1.0, %v2686
        %v2719 = vsub.f32 1.0, %v2687
        %v2720 = vsub.f32 1.0, %v2688
        %v2721 = vsub.f32 1.0, %v2689
        %v2722 = vsub.f32 1.0, %v2690
        %v2723 = vsub.f32 1.0, %v2691
        %v2724 = vsub.f32 1.0, %v2692
        %v2725 = vsub.f32 1.0, %v2693
        %v2726 = vsub.f32 1.0, %v2694
        %v2727 = vsub.f32 1.0, %v2695
        %v2728 = vsub.f32 1.0, %v2696
        %v2729 = vsub.f32 1.0, %v2697
        %v2730 = vsub.f32 1.0, %v2698
        %v2731 = vsub.f32 1.0, %v2699
        %v2732 = vsub.f32 1.0, %v2700
        %v2733 = vsub.f32 1.0, %v2701
        %v2734 = vsub.f32 1.0, %v2702
        %v2735 = vsub.f32 1.0, %v2703
        %v2736 = vsub.f32 1.0, %v2704
        %v2737 = vsub.f32 1.0, %v2705
        %v2738 = vsub.f32 1.0, %v2706
        %v2739 = vsub.f32 1.0, %v2707
        %v2740 = vsub.f32 1.0, %v2708
        %v2741 = vsub.f32 1.0, %v2709
        %v2742 = vsub.f32 1.0, %v2710
        %v2743 = vsub.f32 1.0, %v2711
        %v2744 = vsub.f32 1.0, %v2712
        %v2745 = vsub.f32 1.0, %v2713
        %v2746 = vmax.f32 %v2714, 0.0
        %v2747 = vmax.f32 %v2715, 0.0
        %v2748 = vmax.f32 %v2716, 0.0
        %v2749 = vmax.f32 %v2717, 0.0
        %v2750 = vmax.f32 %v2718, 0.0
        %v2751 = vmax.f32 %v2719, 0.0
        %v2752 = vmax.f32 %v2720, 0.0
        %v2753 = vmax.f32 %v2721, 0.0
        %v2754 = vmax.f32 %v2722, 0.0
        %v2755 = vmax.f32 %v2723, 0.0
        %v2756 = vmax.f32 %v2724, 0.0
        %v2757 = vmax.f32 %v2725, 0.0
        %v2758 = vmax.f32 %v2726, 0.0
        %v2759 = vmax.f32 %v2727, 0.0
        %v2760 = vmax.f32 %v2728, 0.0
        %v2761 = vmax.f32 %v2729, 0.0
        %v2762 = vmax.f32 %v2730, 0.0
        %v2763 = vmax.f32 %v2731, 0.0
        %v2764 = vmax.f32 %v2732, 0.0
        %v2765 = vmax.f32 %v2733, 0.0
        %v2766 = vmax.f32 %v2734, 0.0
        %v2767 = vmax.f32 %v2735, 0.0
        %v2768 = vmax.f32 %v2736, 0.0
        %v2769 = vmax.f32 %v2737, 0.0
        %v2770 = vmax.f32 %v2738, 0.0
        %v2771 = vmax.f32 %v2739, 0.0
        %v2772 = vmax.f32 %v2740, 0.0
        %v2773 = vmax.f32 %v2741, 0.0
        %v2774 = vmax.f32 %v2742, 0.0
        %v2775 = vmax.f32 %v2743, 0.0
        %v2776 = vmax.f32 %v2744, 0.0
        %v2777 = vmax.f32 %v2745, 0.0
        %v2778 = vlaneseq
        %v2779 = vshrl.u32 %v2778, 7
        %v2780 = vsub.s32 0, %v2779
        %v2781 = vrot.slane %v2636, %v2780
        %v2782 = vsub.f32 %v1082, %v2781
        %v2783 = vsub.f32 %v1087, %v2781
        %v2784 = vsub.f32 %v1092, %v2781
        %v2785 = vsub.f32 %v1097, %v2781
        %v2786 = vsub.f32 %v1102, %v2781
        %v2787 = vsub.f32 %v1107, %v2781
        %v2788 = vsub.f32 %v1112, %v2781
        %v2789 = vsub.f32 %v1117, %v2781
        %v2790 = vsub.f32 %v1122, %v2781
        %v2791 = vsub.f32 %v1127, %v2781
        %v2792 = vsub.f32 %v1132, %v2781
        %v2793 = vsub.f32 %v1137, %v2781
        %v2794 = vsub.f32 %v1142, %v2781
        %v2795 = vsub.f32 %v1147, %v2781
        %v2796 = vsub.f32 %v1152, %v2781
        %v2797 = vsub.f32 %v1157, %v2781
        %v2798 = vsub.f32 %v1162, %v2781
        %v2799 = vsub.f32 %v1167, %v2781
        %v2800 = vsub.f32 %v1172, %v2781
        %v2801 = vsub.f32 %v1177, %v2781
        %v2802 = vsub.f32 %v1182, %v2781
        %v2803 = vsub.f32 %v1187, %v2781
        %v2804 = vsub.f32 %v1192, %v2781
        %v2805 = vsub.f32 %v1197, %v2781
        %v2806 = vsub.f32 %v1202, %v2781
        %v2807 = vsub.f32 %v1207, %v2781
        %v2808 = vsub.f32 %v1212, %v2781
        %v2809 = vsub.f32 %v1217, %v2781
        %v2810 = vsub.f32 %v1222, %v2781
        %v2811 = vsub.f32 %v1227, %v2781
        %v2812 = vsub.f32 %v1232, %v2781
        %v2813 = vsub.f32 %v1237, %v2781
        %v2814 = vand.u32 2147483647, %v2782
        %v2815 = vand.u32 2147483647, %v2783
        %v2816 = vand.u32 2147483647, %v2784
        %v2817 = vand.u32 2147483647, %v2785
        %v2818 = vand.u32 2147483647, %v2786
        %v2819 = vand.u32 2147483647, %v2787
        %v2820 = vand.u32 2147483647, %v2788
        %v2821 = vand.u32 2147483647, %v2789
        %v2822 = vand.u32 2147483647, %v2790
        %v2823 = vand.u32 2147483647, %v2791
        %v2824 = vand.u32 2147483647, %v2792
        %v2825 = vand.u32 2147483647, %v2793
        %v2826 = vand.u32 2147483647, %v2794
        %v2827 = vand.u32 2147483647, %v2795
        %v2828 = vand.u32 2147483647, %v2796
        %v2829 = vand.u32 2147483647, %v2797
        %v2830 = vand.u32 2147483647, %v2798
        %v2831 = vand.u32 2147483647, %v2799
        %v2832 = vand.u32 2147483647, %v2800
        %v2833 = vand.u32 2147483647, %v2801
        %v2834 = vand.u32 2147483647, %v2802
        %v2835 = vand.u32 2147483647, %v2803
        %v2836 = vand.u32 2147483647, %v2804
        %v2837 = vand.u32 2147483647, %v2805
        %v2838 = vand.u32 2147483647, %v2806
        %v2839 = vand.u32 2147483647, %v2807
        %v2840 = vand.u32 2147483647, %v2808
        %v2841 = vand.u32 2147483647, %v2809
        %v2842 = vand.u32 2147483647, %v2810
        %v2843 = vand.u32 2147483647, %v2811
        %v2844 = vand.u32 2147483647, %v2812
        %v2845 = vand.u32 2147483647, %v2813
        %v2846 = vsub.f32 1.0, %v2814
        %v2847 = vsub.f32 1.0, %v2815
        %v2848 = vsub.f32 1.0, %v2816
        %v2849 = vsub.f32 1.0, %v2817
        %v2850 = vsub.f32 1.0, %v2818
        %v2851 = vsub.f32 1.0, %v2819
        %v2852 = vsub.f32 1.0, %v2820
        %v2853 = vsub.f32 1.0, %v2821
        %v2854 = vsub.f32 1.0, %v2822
        %v2855 = vsub.f32 1.0, %v2823
        %v2856 = vsub.f32 1.0, %v2824
        %v2857 = vsub.f32 1.0, %v2825
        %v2858 = vsub.f32 1.0, %v2826
        %v2859 = vsub.f32 1.0, %v2827
        %v2860 = vsub.f32 1.0, %v2828
        %v2861 = vsub.f32 1.0, %v2829
        %v2862 = vsub.f32 1.0, %v2830
        %v2863 = vsub.f32 1.0, %v2831
        %v2864 = vsub.f32 1.0, %v2832
        %v2865 = vsub.f32 1.0, %v2833
        %v2866 = vsub.f32 1.0, %v2834
        %v2867 = vsub.f32 1.0, %v2835
        %v2868 = vsub.f32 1.0, %v2836
        %v2869 = vsub.f32 1.0, %v2837
        %v2870 = vsub.f32 1.0, %v2838
        %v2871 = vsub.f32 1.0, %v2839
        %v2872 = vsub.f32 1.0, %v2840
        %v2873 = vsub.f32 1.0, %v2841
        %v2874 = vsub.f32 1.0, %v2842
        %v2875 = vsub.f32 1.0, %v2843
        %v2876 = vsub.f32 1.0, %v2844
        %v2877 = vsub.f32 1.0, %v2845
        %v2878 = vmax.f32 %v2846, 0.0
        %v2879 = vmax.f32 %v2847, 0.0
        %v2880 = vmax.f32 %v2848, 0.0
        %v2881 = vmax.f32 %v2849, 0.0
        %v2882 = vmax.f32 %v2850, 0.0
        %v2883 = vmax.f32 %v2851, 0.0
        %v2884 = vmax.f32 %v2852, 0.0
        %v2885 = vmax.f32 %v2853, 0.0
        %v2886 = vmax.f32 %v2854, 0.0
        %v2887 = vmax.f32 %v2855, 0.0
        %v2888 = vmax.f32 %v2856, 0.0
        %v2889 = vmax.f32 %v2857, 0.0
        %v2890 = vmax.f32 %v2858, 0.0
        %v2891 = vmax.f32 %v2859, 0.0
        %v2892 = vmax.f32 %v2860, 0.0
        %v2893 = vmax.f32 %v2861, 0.0
        %v2894 = vmax.f32 %v2862, 0.0
        %v2895 = vmax.f32 %v2863, 0.0
        %v2896 = vmax.f32 %v2864, 0.0
        %v2897 = vmax.f32 %v2865, 0.0
        %v2898 = vmax.f32 %v2866, 0.0
        %v2899 = vmax.f32 %v2867, 0.0
        %v2900 = vmax.f32 %v2868, 0.0
        %v2901 = vmax.f32 %v2869, 0.0
        %v2902 = vmax.f32 %v2870, 0.0
        %v2903 = vmax.f32 %v2871, 0.0
        %v2904 = vmax.f32 %v2872, 0.0
        %v2905 = vmax.f32 %v2873, 0.0
        %v2906 = vmax.f32 %v2874, 0.0
        %v2907 = vmax.f32 %v2875, 0.0
        %v2908 = vmax.f32 %v2876, 0.0
        %v2909 = vmax.f32 %v2877, 0.0
        %v2910 = vmul.f32 %v2746, %v2878
        %v2911 = vmul.f32 %v2747, %v2879
        %v2912 = vmul.f32 %v2748, %v2880
        %v2913 = vmul.f32 %v2749, %v2881
        %v2914 = vmul.f32 %v2750, %v2882
        %v2915 = vmul.f32 %v2751, %v2883
        %v2916 = vmul.f32 %v2752, %v2884
        %v2917 = vmul.f32 %v2753, %v2885
        %v2918 = vmul.f32 %v2754, %v2886
        %v2919 = vmul.f32 %v2755, %v2887
        %v2920 = vmul.f32 %v2756, %v2888
        %v2921 = vmul.f32 %v2757, %v2889
        %v2922 = vmul.f32 %v2758, %v2890
        %v2923 = vmul.f32 %v2759, %v2891
        %v2924 = vmul.f32 %v2760, %v2892
        %v2925 = vmul.f32 %v2761, %v2893
        %v2926 = vmul.f32 %v2762, %v2894
        %v2927 = vmul.f32 %v2763, %v2895
        %v2928 = vmul.f32 %v2764, %v2896
        %v2929 = vmul.f32 %v2765, %v2897
        %v2930 = vmul.f32 %v2766, %v2898
        %v2931 = vmul.f32 %v2767, %v2899
        %v2932 = vmul.f32 %v2768, %v2900
        %v2933 = vmul.f32 %v2769, %v2901
        %v2934 = vmul.f32 %v2770, %v2902
        %v2935 = vmul.f32 %v2771, %v2903
        %v2936 = vmul.f32 %v2772, %v2904
        %v2937 = vmul.f32 %v2773, %v2905
        %v2938 = vmul.f32 %v2774, %v2906
        %v2939 = vmul.f32 %v2775, %v2907
        %v2940 = vmul.f32 %v2776, %v2908
        %v2941 = vmul.f32 %v2777, %v2909
        %2942 = vmatprep.subr.mxu0 0.0
        %2943 = vmatpush1.msra.mxu0 %v2910
        %2944 = vmatprep.subr.mxu0 0.0
        %2945 = vmatpush1.msra.mxu0 %v2911
        %2946 = vmatprep.subr.mxu0 0.0
        %2947 = vmatpush1.msra.mxu0 %v2912
        %2948 = vmatprep.subr.mxu0 0.0
        %2949 = vmatpush1.msra.mxu0 %v2913
        %2950 = vmatprep.subr.mxu0 0.0
        %2951 = vmatpush1.msra.mxu0 %v2914
        %2952 = vmatprep.subr.mxu0 0.0
        %2953 = vmatpush1.msra.mxu0 %v2915
        %2954 = vmatprep.subr.mxu0 0.0
        %2955 = vmatpush1.msra.mxu0 %v2916
        %2956 = vmatprep.subr.mxu0 0.0
        %2957 = vmatpush1.msra.mxu0 %v2917
        %2958 = vmatprep.subr.mxu0 0.0
        %2959 = vmatpush1.msra.mxu0 %v2918
        %2960 = vmatprep.subr.mxu0 0.0
        %2961 = vmatpush1.msra.mxu0 %v2919
        %2962 = vmatprep.subr.mxu0 0.0
        %2963 = vmatpush1.msra.mxu0 %v2920
        %2964 = vmatprep.subr.mxu0 0.0
        %2965 = vmatpush1.msra.mxu0 %v2921
        %2966 = vmatprep.subr.mxu0 0.0
        %2967 = vmatpush1.msra.mxu0 %v2922
        %2968 = vmatprep.subr.mxu0 0.0
        %2969 = vmatpush1.msra.mxu0 %v2923
        %2970 = vmatprep.subr.mxu0 0.0
        %2971 = vmatpush1.msra.mxu0 %v2924
        %2972 = vmatprep.subr.mxu0 0.0
        %2973 = vmatpush1.msra.mxu0 %v2925
        %2974 = vmatprep.subr.mxu0 0.0
        %2975 = vmatpush1.msra.mxu0 %v2926
        %2976 = vmatprep.subr.mxu0 0.0
        %2977 = vmatpush1.msra.mxu0 %v2927
        %2978 = vmatprep.subr.mxu0 0.0
        %2979 = vmatpush1.msra.mxu0 %v2928
        %2980 = vmatprep.subr.mxu0 0.0
        %2981 = vmatpush1.msra.mxu0 %v2929
        %2982 = vmatprep.subr.mxu0 0.0
        %2983 = vmatpush1.msra.mxu0 %v2930
        %2984 = vmatprep.subr.mxu0 0.0
        %2985 = vmatpush1.msra.mxu0 %v2931
        %2986 = vmatprep.subr.mxu0 0.0
        %2987 = vmatpush1.msra.mxu0 %v2932
        %2988 = vmatprep.subr.mxu0 0.0
        %2989 = vmatpush1.msra.mxu0 %v2933
        %2990 = vmatprep.subr.mxu0 0.0
        %2991 = vmatpush1.msra.mxu0 %v2934
        %2992 = vmatprep.subr.mxu0 0.0
        %2993 = vmatpush1.msra.mxu0 %v2935
        %2994 = vmatprep.subr.mxu0 0.0
        %2995 = vmatpush1.msra.mxu0 %v2936
        %2996 = vmatprep.subr.mxu0 0.0
        %2997 = vmatpush1.msra.mxu0 %v2937
        %2998 = vmatprep.subr.mxu0 0.0
        %2999 = vmatpush1.msra.mxu0 %v2938
        %3000 = vmatprep.subr.mxu0 0.0
        %3001 = vmatpush1.msra.mxu0 %v2939
        %3002 = vmatprep.subr.mxu0 0.0
        %3003 = vmatpush1.msra.mxu0 %v2940
        %3004 = vmatprep.subr.mxu0 0.0
        %3005 = vmatpush1.msra.mxu0 %v2941
        %3006 = vmatprep.mubr.f32.mxu0 %v1404
        %3007 = vmatmul.mubr.f32.gmra.mrb[0].mxu0 %v710
        %v3008 = vpop.f32.mrb[0].mxu0
        %v3009 = vadd.f32 0.0, %v3008
        %v3010 = vpop.f32.mrb[0].mxu0
        %3011 = vdwg.mxu0
        %v3012 = vlaneseq
        %v3013 = vshrl.u32 %v3012, 7
        %v3014 = vsub.s32 0, %v3013
        %v3015 = vrot.slane %v2645, %v3014
        %v3016 = vmul.f32 %v3009, %v3015
        %3017 = vst [vmem:[#allocation2 + $0x10] sm:$0xf] %v3016
        %v3018 = vld [vmem:[%s558 + $0x5] sm:$0x1]
        %v3019 = vld [vmem:[%s507 + $0x5] sm:$0x1]
        %v3020 = vadd.f32 %v3018, %v3019
        %v3021 = vld [vmem:[%s558 + $0xe] sm:$0x1]
        %v3022 = vld [vmem:[%s514 + $0x5] sm:$0x1]
        %v3023 = vadd.f32 %v3021, %v3022
        %v3024 = vld [vmem:[%s558 + $0x17] sm:$0x1]
        %v3025 = vsub.f32 0.0, %v3024
        %v3026 = vmul.f32 %v3025, 1.442695
        %v3027 = vpow.pop %v3026
        %v3028 = vadd.f32 %v3027, 1.0
        %v3029 = vrcp.pop %v3028
        %v3030 = vlaneseq
        %v3031 = vshrl.u32 %v3030, 7
        %v3032 = vsub.s32 0, %v3031
        %v3033 = vrot.slane %v3023, %v3032
        %v3034 = vsub.f32 %v790, %v3033
        %v3035 = vsub.f32 %v795, %v3033
        %v3036 = vsub.f32 %v800, %v3033
        %v3037 = vsub.f32 %v805, %v3033
        %v3038 = vsub.f32 %v810, %v3033
        %v3039 = vsub.f32 %v815, %v3033
        %v3040 = vsub.f32 %v820, %v3033
        %v3041 = vsub.f32 %v825, %v3033
        %v3042 = vsub.f32 %v830, %v3033
        %v3043 = vsub.f32 %v835, %v3033
        %v3044 = vsub.f32 %v840, %v3033
        %v3045 = vsub.f32 %v845, %v3033
        %v3046 = vsub.f32 %v850, %v3033
        %v3047 = vsub.f32 %v855, %v3033
        %v3048 = vsub.f32 %v860, %v3033
        %v3049 = vsub.f32 %v865, %v3033
        %v3050 = vsub.f32 %v870, %v3033
        %v3051 = vsub.f32 %v875, %v3033
        %v3052 = vsub.f32 %v880, %v3033
        %v3053 = vsub.f32 %v885, %v3033
        %v3054 = vsub.f32 %v890, %v3033
        %v3055 = vsub.f32 %v895, %v3033
        %v3056 = vsub.f32 %v900, %v3033
        %v3057 = vsub.f32 %v905, %v3033
        %v3058 = vsub.f32 %v910, %v3033
        %v3059 = vsub.f32 %v915, %v3033
        %v3060 = vsub.f32 %v920, %v3033
        %v3061 = vsub.f32 %v925, %v3033
        %v3062 = vsub.f32 %v930, %v3033
        %v3063 = vsub.f32 %v935, %v3033
        %v3064 = vsub.f32 %v940, %v3033
        %v3065 = vsub.f32 %v945, %v3033
        %v3066 = vand.u32 2147483647, %v3034
        %v3067 = vand.u32 2147483647, %v3035
        %v3068 = vand.u32 2147483647, %v3036
        %v3069 = vand.u32 2147483647, %v3037
        %v3070 = vand.u32 2147483647, %v3038
        %v3071 = vand.u32 2147483647, %v3039
        %v3072 = vand.u32 2147483647, %v3040
        %v3073 = vand.u32 2147483647, %v3041
        %v3074 = vand.u32 2147483647, %v3042
        %v3075 = vand.u32 2147483647, %v3043
        %v3076 = vand.u32 2147483647, %v3044
        %v3077 = vand.u32 2147483647, %v3045
        %v3078 = vand.u32 2147483647, %v3046
        %v3079 = vand.u32 2147483647, %v3047
        %v3080 = vand.u32 2147483647, %v3048
        %v3081 = vand.u32 2147483647, %v3049
        %v3082 = vand.u32 2147483647, %v3050
        %v3083 = vand.u32 2147483647, %v3051
        %v3084 = vand.u32 2147483647, %v3052
        %v3085 = vand.u32 2147483647, %v3053
        %v3086 = vand.u32 2147483647, %v3054
        %v3087 = vand.u32 2147483647, %v3055
        %v3088 = vand.u32 2147483647, %v3056
        %v3089 = vand.u32 2147483647, %v3057
        %v3090 = vand.u32 2147483647, %v3058
        %v3091 = vand.u32 2147483647, %v3059
        %v3092 = vand.u32 2147483647, %v3060
        %v3093 = vand.u32 2147483647, %v3061
        %v3094 = vand.u32 2147483647, %v3062
        %v3095 = vand.u32 2147483647, %v3063
        %v3096 = vand.u32 2147483647, %v3064
        %v3097 = vand.u32 2147483647, %v3065
        %v3098 = vsub.f32 1.0, %v3066
        %v3099 = vsub.f32 1.0, %v3067
        %v3100 = vsub.f32 1.0, %v3068
        %v3101 = vsub.f32 1.0, %v3069
        %v3102 = vsub.f32 1.0, %v3070
        %v3103 = vsub.f32 1.0, %v3071
        %v3104 = vsub.f32 1.0, %v3072
        %v3105 = vsub.f32 1.0, %v3073
        %v3106 = vsub.f32 1.0, %v3074
        %v3107 = vsub.f32 1.0, %v3075
        %v3108 = vsub.f32 1.0, %v3076
        %v3109 = vsub.f32 1.0, %v3077
        %v3110 = vsub.f32 1.0, %v3078
        %v3111 = vsub.f32 1.0, %v3079
        %v3112 = vsub.f32 1.0, %v3080
        %v3113 = vsub.f32 1.0, %v3081
        %v3114 = vsub.f32 1.0, %v3082
        %v3115 = vsub.f32 1.0, %v3083
        %v3116 = vsub.f32 1.0, %v3084
        %v3117 = vsub.f32 1.0, %v3085
        %v3118 = vsub.f32 1.0, %v3086
        %v3119 = vsub.f32 1.0, %v3087
        %v3120 = vsub.f32 1.0, %v3088
        %v3121 = vsub.f32 1.0, %v3089
        %v3122 = vsub.f32 1.0, %v3090
        %v3123 = vsub.f32 1.0, %v3091
        %v3124 = vsub.f32 1.0, %v3092
        %v3125 = vsub.f32 1.0, %v3093
        %v3126 = vsub.f32 1.0, %v3094
        %v3127 = vsub.f32 1.0, %v3095
        %v3128 = vsub.f32 1.0, %v3096
        %v3129 = vsub.f32 1.0, %v3097
        %v3130 = vmax.f32 %v3098, 0.0
        %v3131 = vmax.f32 %v3099, 0.0
        %v3132 = vmax.f32 %v3100, 0.0
        %v3133 = vmax.f32 %v3101, 0.0
        %v3134 = vmax.f32 %v3102, 0.0
        %v3135 = vmax.f32 %v3103, 0.0
        %v3136 = vmax.f32 %v3104, 0.0
        %v3137 = vmax.f32 %v3105, 0.0
        %v3138 = vmax.f32 %v3106, 0.0
        %v3139 = vmax.f32 %v3107, 0.0
        %v3140 = vmax.f32 %v3108, 0.0
        %v3141 = vmax.f32 %v3109, 0.0
        %v3142 = vmax.f32 %v3110, 0.0
        %v3143 = vmax.f32 %v3111, 0.0
        %v3144 = vmax.f32 %v3112, 0.0
        %v3145 = vmax.f32 %v3113, 0.0
        %v3146 = vmax.f32 %v3114, 0.0
        %v3147 = vmax.f32 %v3115, 0.0
        %v3148 = vmax.f32 %v3116, 0.0
        %v3149 = vmax.f32 %v3117, 0.0
        %v3150 = vmax.f32 %v3118, 0.0
        %v3151 = vmax.f32 %v3119, 0.0
        %v3152 = vmax.f32 %v3120, 0.0
        %v3153 = vmax.f32 %v3121, 0.0
        %v3154 = vmax.f32 %v3122, 0.0
        %v3155 = vmax.f32 %v3123, 0.0
        %v3156 = vmax.f32 %v3124, 0.0
        %v3157 = vmax.f32 %v3125, 0.0
        %v3158 = vmax.f32 %v3126, 0.0
        %v3159 = vmax.f32 %v3127, 0.0
        %v3160 = vmax.f32 %v3128, 0.0
        %v3161 = vmax.f32 %v3129, 0.0
        %v3162 = vlaneseq
        %v3163 = vshrl.u32 %v3162, 7
        %v3164 = vsub.s32 0, %v3163
        %v3165 = vrot.slane %v3020, %v3164
        %v3166 = vsub.f32 %v1082, %v3165
        %v3167 = vsub.f32 %v1087, %v3165
        %v3168 = vsub.f32 %v1092, %v3165
        %v3169 = vsub.f32 %v1097, %v3165
        %v3170 = vsub.f32 %v1102, %v3165
        %v3171 = vsub.f32 %v1107, %v3165
        %v3172 = vsub.f32 %v1112, %v3165
        %v3173 = vsub.f32 %v1117, %v3165
        %v3174 = vsub.f32 %v1122, %v3165
        %v3175 = vsub.f32 %v1127, %v3165
        %v3176 = vsub.f32 %v1132, %v3165
        %v3177 = vsub.f32 %v1137, %v3165
        %v3178 = vsub.f32 %v1142, %v3165
        %v3179 = vsub.f32 %v1147, %v3165
        %v3180 = vsub.f32 %v1152, %v3165
        %v3181 = vsub.f32 %v1157, %v3165
        %v3182 = vsub.f32 %v1162, %v3165
        %v3183 = vsub.f32 %v1167, %v3165
        %v3184 = vsub.f32 %v1172, %v3165
        %v3185 = vsub.f32 %v1177, %v3165
        %v3186 = vsub.f32 %v1182, %v3165
        %v3187 = vsub.f32 %v1187, %v3165
        %v3188 = vsub.f32 %v1192, %v3165
        %v3189 = vsub.f32 %v1197, %v3165
        %v3190 = vsub.f32 %v1202, %v3165
        %v3191 = vsub.f32 %v1207, %v3165
        %v3192 = vsub.f32 %v1212, %v3165
        %v3193 = vsub.f32 %v1217, %v3165
        %v3194 = vsub.f32 %v1222, %v3165
        %v3195 = vsub.f32 %v1227, %v3165
        %v3196 = vsub.f32 %v1232, %v3165
        %v3197 = vsub.f32 %v1237, %v3165
        %v3198 = vand.u32 2147483647, %v3166
        %v3199 = vand.u32 2147483647, %v3167
        %v3200 = vand.u32 2147483647, %v3168
        %v3201 = vand.u32 2147483647, %v3169
        %v3202 = vand.u32 2147483647, %v3170
        %v3203 = vand.u32 2147483647, %v3171
        %v3204 = vand.u32 2147483647, %v3172
        %v3205 = vand.u32 2147483647, %v3173
        %v3206 = vand.u32 2147483647, %v3174
        %v3207 = vand.u32 2147483647, %v3175
        %v3208 = vand.u32 2147483647, %v3176
        %v3209 = vand.u32 2147483647, %v3177
        %v3210 = vand.u32 2147483647, %v3178
        %v3211 = vand.u32 2147483647, %v3179
        %v3212 = vand.u32 2147483647, %v3180
        %v3213 = vand.u32 2147483647, %v3181
        %v3214 = vand.u32 2147483647, %v3182
        %v3215 = vand.u32 2147483647, %v3183
        %v3216 = vand.u32 2147483647, %v3184
        %v3217 = vand.u32 2147483647, %v3185
        %v3218 = vand.u32 2147483647, %v3186
        %v3219 = vand.u32 2147483647, %v3187
        %v3220 = vand.u32 2147483647, %v3188
        %v3221 = vand.u32 2147483647, %v3189
        %v3222 = vand.u32 2147483647, %v3190
        %v3223 = vand.u32 2147483647, %v3191
        %v3224 = vand.u32 2147483647, %v3192
        %v3225 = vand.u32 2147483647, %v3193
        %v3226 = vand.u32 2147483647, %v3194
        %v3227 = vand.u32 2147483647, %v3195
        %v3228 = vand.u32 2147483647, %v3196
        %v3229 = vand.u32 2147483647, %v3197
        %v3230 = vsub.f32 1.0, %v3198
        %v3231 = vsub.f32 1.0, %v3199
        %v3232 = vsub.f32 1.0, %v3200
        %v3233 = vsub.f32 1.0, %v3201
        %v3234 = vsub.f32 1.0, %v3202
        %v3235 = vsub.f32 1.0, %v3203
        %v3236 = vsub.f32 1.0, %v3204
        %v3237 = vsub.f32 1.0, %v3205
        %v3238 = vsub.f32 1.0, %v3206
        %v3239 = vsub.f32 1.0, %v3207
        %v3240 = vsub.f32 1.0, %v3208
        %v3241 = vsub.f32 1.0, %v3209
        %v3242 = vsub.f32 1.0, %v3210
        %v3243 = vsub.f32 1.0, %v3211
        %v3244 = vsub.f32 1.0, %v3212
        %v3245 = vsub.f32 1.0, %v3213
        %v3246 = vsub.f32 1.0, %v3214
        %v3247 = vsub.f32 1.0, %v3215
        %v3248 = vsub.f32 1.0, %v3216
        %v3249 = vsub.f32 1.0, %v3217
        %v3250 = vsub.f32 1.0, %v3218
        %v3251 = vsub.f32 1.0, %v3219
        %v3252 = vsub.f32 1.0, %v3220
        %v3253 = vsub.f32 1.0, %v3221
        %v3254 = vsub.f32 1.0, %v3222
        %v3255 = vsub.f32 1.0, %v3223
        %v3256 = vsub.f32 1.0, %v3224
        %v3257 = vsub.f32 1.0, %v3225
        %v3258 = vsub.f32 1.0, %v3226
        %v3259 = vsub.f32 1.0, %v3227
        %v3260 = vsub.f32 1.0, %v3228
        %v3261 = vsub.f32 1.0, %v3229
        %v3262 = vmax.f32 %v3230, 0.0
        %v3263 = vmax.f32 %v3231, 0.0
        %v3264 = vmax.f32 %v3232, 0.0
        %v3265 = vmax.f32 %v3233, 0.0
        %v3266 = vmax.f32 %v3234, 0.0
        %v3267 = vmax.f32 %v3235, 0.0
        %v3268 = vmax.f32 %v3236, 0.0
        %v3269 = vmax.f32 %v3237, 0.0
        %v3270 = vmax.f32 %v3238, 0.0
        %v3271 = vmax.f32 %v3239, 0.0
        %v3272 = vmax.f32 %v3240, 0.0
        %v3273 = vmax.f32 %v3241, 0.0
        %v3274 = vmax.f32 %v3242, 0.0
        %v3275 = vmax.f32 %v3243, 0.0
        %v3276 = vmax.f32 %v3244, 0.0
        %v3277 = vmax.f32 %v3245, 0.0
        %v3278 = vmax.f32 %v3246, 0.0
        %v3279 = vmax.f32 %v3247, 0.0
        %v3280 = vmax.f32 %v3248, 0.0
        %v3281 = vmax.f32 %v3249, 0.0
        %v3282 = vmax.f32 %v3250, 0.0
        %v3283 = vmax.f32 %v3251, 0.0
        %v3284 = vmax.f32 %v3252, 0.0
        %v3285 = vmax.f32 %v3253, 0.0
        %v3286 = vmax.f32 %v3254, 0.0
        %v3287 = vmax.f32 %v3255, 0.0
        %v3288 = vmax.f32 %v3256, 0.0
        %v3289 = vmax.f32 %v3257, 0.0
        %v3290 = vmax.f32 %v3258, 0.0
        %v3291 = vmax.f32 %v3259, 0.0
        %v3292 = vmax.f32 %v3260, 0.0
        %v3293 = vmax.f32 %v3261, 0.0
        %v3294 = vmul.f32 %v3130, %v3262
        %v3295 = vmul.f32 %v3131, %v3263
        %v3296 = vmul.f32 %v3132, %v3264
        %v3297 = vmul.f32 %v3133, %v3265
        %v3298 = vmul.f32 %v3134, %v3266
        %v3299 = vmul.f32 %v3135, %v3267
        %v3300 = vmul.f32 %v3136, %v3268
        %v3301 = vmul.f32 %v3137, %v3269
        %v3302 = vmul.f32 %v3138, %v3270
        %v3303 = vmul.f32 %v3139, %v3271
        %v3304 = vmul.f32 %v3140, %v3272
        %v3305 = vmul.f32 %v3141, %v3273
        %v3306 = vmul.f32 %v3142, %v3274
        %v3307 = vmul.f32 %v3143, %v3275
        %v3308 = vmul.f32 %v3144, %v3276
        %v3309 = vmul.f32 %v3145, %v3277
        %v3310 = vmul.f32 %v3146, %v3278
        %v3311 = vmul.f32 %v3147, %v3279
        %v3312 = vmul.f32 %v3148, %v3280
        %v3313 = vmul.f32 %v3149, %v3281
        %v3314 = vmul.f32 %v3150, %v3282
        %v3315 = vmul.f32 %v3151, %v3283
        %v3316 = vmul.f32 %v3152, %v3284
        %v3317 = vmul.f32 %v3153, %v3285
        %v3318 = vmul.f32 %v3154, %v3286
        %v3319 = vmul.f32 %v3155, %v3287
        %v3320 = vmul.f32 %v3156, %v3288
        %v3321 = vmul.f32 %v3157, %v3289
        %v3322 = vmul.f32 %v3158, %v3290
        %v3323 = vmul.f32 %v3159, %v3291
        %v3324 = vmul.f32 %v3160, %v3292
        %v3325 = vmul.f32 %v3161, %v3293
        %3326 = vmatprep.subr.mxu0 0.0
        %3327 = vmatpush1.msra.mxu0 %v3294
        %3328 = vmatprep.subr.mxu0 0.0
        %3329 = vmatpush1.msra.mxu0 %v3295
        %3330 = vmatprep.subr.mxu0 0.0
        %3331 = vmatpush1.msra.mxu0 %v3296
        %3332 = vmatprep.subr.mxu0 0.0
        %3333 = vmatpush1.msra.mxu0 %v3297
        %3334 = vmatprep.subr.mxu0 0.0
        %3335 = vmatpush1.msra.mxu0 %v3298
        %3336 = vmatprep.subr.mxu0 0.0
        %3337 = vmatpush1.msra.mxu0 %v3299
        %3338 = vmatprep.subr.mxu0 0.0
        %3339 = vmatpush1.msra.mxu0 %v3300
        %3340 = vmatprep.subr.mxu0 0.0
        %3341 = vmatpush1.msra.mxu0 %v3301
        %3342 = vmatprep.subr.mxu0 0.0
        %3343 = vmatpush1.msra.mxu0 %v3302
        %3344 = vmatprep.subr.mxu0 0.0
        %3345 = vmatpush1.msra.mxu0 %v3303
        %3346 = vmatprep.subr.mxu0 0.0
        %3347 = vmatpush1.msra.mxu0 %v3304
        %3348 = vmatprep.subr.mxu0 0.0
        %3349 = vmatpush1.msra.mxu0 %v3305
        %3350 = vmatprep.subr.mxu0 0.0
        %3351 = vmatpush1.msra.mxu0 %v3306
        %3352 = vmatprep.subr.mxu0 0.0
        %3353 = vmatpush1.msra.mxu0 %v3307
        %3354 = vmatprep.subr.mxu0 0.0
        %3355 = vmatpush1.msra.mxu0 %v3308
        %3356 = vmatprep.subr.mxu0 0.0
        %3357 = vmatpush1.msra.mxu0 %v3309
        %3358 = vmatprep.subr.mxu0 0.0
        %3359 = vmatpush1.msra.mxu0 %v3310
        %3360 = vmatprep.subr.mxu0 0.0
        %3361 = vmatpush1.msra.mxu0 %v3311
        %3362 = vmatprep.subr.mxu0 0.0
        %3363 = vmatpush1.msra.mxu0 %v3312
        %3364 = vmatprep.subr.mxu0 0.0
        %3365 = vmatpush1.msra.mxu0 %v3313
        %3366 = vmatprep.subr.mxu0 0.0
        %3367 = vmatpush1.msra.mxu0 %v3314
        %3368 = vmatprep.subr.mxu0 0.0
        %3369 = vmatpush1.msra.mxu0 %v3315
        %3370 = vmatprep.subr.mxu0 0.0
        %3371 = vmatpush1.msra.mxu0 %v3316
        %3372 = vmatprep.subr.mxu0 0.0
        %3373 = vmatpush1.msra.mxu0 %v3317
        %3374 = vmatprep.subr.mxu0 0.0
        %3375 = vmatpush1.msra.mxu0 %v3318
        %3376 = vmatprep.subr.mxu0 0.0
        %3377 = vmatpush1.msra.mxu0 %v3319
        %3378 = vmatprep.subr.mxu0 0.0
        %3379 = vmatpush1.msra.mxu0 %v3320
        %3380 = vmatprep.subr.mxu0 0.0
        %3381 = vmatpush1.msra.mxu0 %v3321
        %3382 = vmatprep.subr.mxu0 0.0
        %3383 = vmatpush1.msra.mxu0 %v3322
        %3384 = vmatprep.subr.mxu0 0.0
        %3385 = vmatpush1.msra.mxu0 %v3323
        %3386 = vmatprep.subr.mxu0 0.0
        %3387 = vmatpush1.msra.mxu0 %v3324
        %3388 = vmatprep.subr.mxu0 0.0
        %3389 = vmatpush1.msra.mxu0 %v3325
        %3390 = vmatprep.mubr.f32.mxu0 %v1404
        %3391 = vmatmul.mubr.f32.gmra.mrb[0].mxu0 %v710
        %v3392 = vpop.f32.mrb[0].mxu0
        %v3393 = vadd.f32 0.0, %v3392
        %v3394 = vpop.f32.mrb[0].mxu0
        %3395 = vdwg.mxu0
        %v3396 = vlaneseq
        %v3397 = vshrl.u32 %v3396, 7
        %v3398 = vsub.s32 0, %v3397
        %v3399 = vrot.slane %v3029, %v3398
        %v3400 = vmul.f32 %v3393, %v3399
        %3401 = vst [vmem:[#allocation2 + $0x14] sm:$0xf] %v3400
        %v3402 = vld [vmem:[%s558 + $0x6] sm:$0x1]
        %v3403 = vld [vmem:[%s507 + $0x6] sm:$0x1]
        %v3404 = vadd.f32 %v3402, %v3403
        %v3405 = vld [vmem:[%s558 + $0xf] sm:$0x1]
        %v3406 = vld [vmem:[%s514 + $0x6] sm:$0x1]
        %v3407 = vadd.f32 %v3405, %v3406
        %v3408 = vld [vmem:[%s558 + $0x18] sm:$0x1]
        %v3409 = vsub.f32 0.0, %v3408
        %v3410 = vmul.f32 %v3409, 1.442695
        %v3411 = vpow.pop %v3410
        %v3412 = vadd.f32 %v3411, 1.0
        %v3413 = vrcp.pop %v3412
        %v3414 = vlaneseq
        %v3415 = vshrl.u32 %v3414, 7
        %v3416 = vsub.s32 0, %v3415
        %v3417 = vrot.slane %v3407, %v3416
        %v3418 = vsub.f32 %v790, %v3417
        %v3419 = vsub.f32 %v795, %v3417
        %v3420 = vsub.f32 %v800, %v3417
        %v3421 = vsub.f32 %v805, %v3417
        %v3422 = vsub.f32 %v810, %v3417
        %v3423 = vsub.f32 %v815, %v3417
        %v3424 = vsub.f32 %v820, %v3417
        %v3425 = vsub.f32 %v825, %v3417
        %v3426 = vsub.f32 %v830, %v3417
        %v3427 = vsub.f32 %v835, %v3417
        %v3428 = vsub.f32 %v840, %v3417
        %v3429 = vsub.f32 %v845, %v3417
        %v3430 = vsub.f32 %v850, %v3417
        %v3431 = vsub.f32 %v855, %v3417
        %v3432 = vsub.f32 %v860, %v3417
        %v3433 = vsub.f32 %v865, %v3417
        %v3434 = vsub.f32 %v870, %v3417
        %v3435 = vsub.f32 %v875, %v3417
        %v3436 = vsub.f32 %v880, %v3417
        %v3437 = vsub.f32 %v885, %v3417
        %v3438 = vsub.f32 %v890, %v3417
        %v3439 = vsub.f32 %v895, %v3417
        %v3440 = vsub.f32 %v900, %v3417
        %v3441 = vsub.f32 %v905, %v3417
        %v3442 = vsub.f32 %v910, %v3417
        %v3443 = vsub.f32 %v915, %v3417
        %v3444 = vsub.f32 %v920, %v3417
        %v3445 = vsub.f32 %v925, %v3417
        %v3446 = vsub.f32 %v930, %v3417
        %v3447 = vsub.f32 %v935, %v3417
        %v3448 = vsub.f32 %v940, %v3417
        %v3449 = vsub.f32 %v945, %v3417
        %v3450 = vand.u32 2147483647, %v3418
        %v3451 = vand.u32 2147483647, %v3419
        %v3452 = vand.u32 2147483647, %v3420
        %v3453 = vand.u32 2147483647, %v3421
        %v3454 = vand.u32 2147483647, %v3422
        %v3455 = vand.u32 2147483647, %v3423
        %v3456 = vand.u32 2147483647, %v3424
        %v3457 = vand.u32 2147483647, %v3425
        %v3458 = vand.u32 2147483647, %v3426
        %v3459 = vand.u32 2147483647, %v3427
        %v3460 = vand.u32 2147483647, %v3428
        %v3461 = vand.u32 2147483647, %v3429
        %v3462 = vand.u32 2147483647, %v3430
        %v3463 = vand.u32 2147483647, %v3431
        %v3464 = vand.u32 2147483647, %v3432
        %v3465 = vand.u32 2147483647, %v3433
        %v3466 = vand.u32 2147483647, %v3434
        %v3467 = vand.u32 2147483647, %v3435
        %v3468 = vand.u32 2147483647, %v3436
        %v3469 = vand.u32 2147483647, %v3437
        %v3470 = vand.u32 2147483647, %v3438
        %v3471 = vand.u32 2147483647, %v3439
        %v3472 = vand.u32 2147483647, %v3440
        %v3473 = vand.u32 2147483647, %v3441
        %v3474 = vand.u32 2147483647, %v3442
        %v3475 = vand.u32 2147483647, %v3443
        %v3476 = vand.u32 2147483647, %v3444
        %v3477 = vand.u32 2147483647, %v3445
        %v3478 = vand.u32 2147483647, %v3446
        %v3479 = vand.u32 2147483647, %v3447
        %v3480 = vand.u32 2147483647, %v3448
        %v3481 = vand.u32 2147483647, %v3449
        %v3482 = vsub.f32 1.0, %v3450
        %v3483 = vsub.f32 1.0, %v3451
        %v3484 = vsub.f32 1.0, %v3452
        %v3485 = vsub.f32 1.0, %v3453
        %v3486 = vsub.f32 1.0, %v3454
        %v3487 = vsub.f32 1.0, %v3455
        %v3488 = vsub.f32 1.0, %v3456
        %v3489 = vsub.f32 1.0, %v3457
        %v3490 = vsub.f32 1.0, %v3458
        %v3491 = vsub.f32 1.0, %v3459
        %v3492 = vsub.f32 1.0, %v3460
        %v3493 = vsub.f32 1.0, %v3461
        %v3494 = vsub.f32 1.0, %v3462
        %v3495 = vsub.f32 1.0, %v3463
        %v3496 = vsub.f32 1.0, %v3464
        %v3497 = vsub.f32 1.0, %v3465
        %v3498 = vsub.f32 1.0, %v3466
        %v3499 = vsub.f32 1.0, %v3467
        %v3500 = vsub.f32 1.0, %v3468
        %v3501 = vsub.f32 1.0, %v3469
        %v3502 = vsub.f32 1.0, %v3470
        %v3503 = vsub.f32 1.0, %v3471
        %v3504 = vsub.f32 1.0, %v3472
        %v3505 = vsub.f32 1.0, %v3473
        %v3506 = vsub.f32 1.0, %v3474
        %v3507 = vsub.f32 1.0, %v3475
        %v3508 = vsub.f32 1.0, %v3476
        %v3509 = vsub.f32 1.0, %v3477
        %v3510 = vsub.f32 1.0, %v3478
        %v3511 = vsub.f32 1.0, %v3479
        %v3512 = vsub.f32 1.0, %v3480
        %v3513 = vsub.f32 1.0, %v3481
        %v3514 = vmax.f32 %v3482, 0.0
        %v3515 = vmax.f32 %v3483, 0.0
        %v3516 = vmax.f32 %v3484, 0.0
        %v3517 = vmax.f32 %v3485, 0.0
        %v3518 = vmax.f32 %v3486, 0.0
        %v3519 = vmax.f32 %v3487, 0.0
        %v3520 = vmax.f32 %v3488, 0.0
        %v3521 = vmax.f32 %v3489, 0.0
        %v3522 = vmax.f32 %v3490, 0.0
        %v3523 = vmax.f32 %v3491, 0.0
        %v3524 = vmax.f32 %v3492, 0.0
        %v3525 = vmax.f32 %v3493, 0.0
        %v3526 = vmax.f32 %v3494, 0.0
        %v3527 = vmax.f32 %v3495, 0.0
        %v3528 = vmax.f32 %v3496, 0.0
        %v3529 = vmax.f32 %v3497, 0.0
        %v3530 = vmax.f32 %v3498, 0.0
        %v3531 = vmax.f32 %v3499, 0.0
        %v3532 = vmax.f32 %v3500, 0.0
        %v3533 = vmax.f32 %v3501, 0.0
        %v3534 = vmax.f32 %v3502, 0.0
        %v3535 = vmax.f32 %v3503, 0.0
        %v3536 = vmax.f32 %v3504, 0.0
        %v3537 = vmax.f32 %v3505, 0.0
        %v3538 = vmax.f32 %v3506, 0.0
        %v3539 = vmax.f32 %v3507, 0.0
        %v3540 = vmax.f32 %v3508, 0.0
        %v3541 = vmax.f32 %v3509, 0.0
        %v3542 = vmax.f32 %v3510, 0.0
        %v3543 = vmax.f32 %v3511, 0.0
        %v3544 = vmax.f32 %v3512, 0.0
        %v3545 = vmax.f32 %v3513, 0.0
        %v3546 = vlaneseq
        %v3547 = vshrl.u32 %v3546, 7
        %v3548 = vsub.s32 0, %v3547
        %v3549 = vrot.slane %v3404, %v3548
        %v3550 = vsub.f32 %v1082, %v3549
        %v3551 = vsub.f32 %v1087, %v3549
        %v3552 = vsub.f32 %v1092, %v3549
        %v3553 = vsub.f32 %v1097, %v3549
        %v3554 = vsub.f32 %v1102, %v3549
        %v3555 = vsub.f32 %v1107, %v3549
        %v3556 = vsub.f32 %v1112, %v3549
        %v3557 = vsub.f32 %v1117, %v3549
        %v3558 = vsub.f32 %v1122, %v3549
        %v3559 = vsub.f32 %v1127, %v3549
        %v3560 = vsub.f32 %v1132, %v3549
        %v3561 = vsub.f32 %v1137, %v3549
        %v3562 = vsub.f32 %v1142, %v3549
        %v3563 = vsub.f32 %v1147, %v3549
        %v3564 = vsub.f32 %v1152, %v3549
        %v3565 = vsub.f32 %v1157, %v3549
        %v3566 = vsub.f32 %v1162, %v3549
        %v3567 = vsub.f32 %v1167, %v3549
        %v3568 = vsub.f32 %v1172, %v3549
        %v3569 = vsub.f32 %v1177, %v3549
        %v3570 = vsub.f32 %v1182, %v3549
        %v3571 = vsub.f32 %v1187, %v3549
        %v3572 = vsub.f32 %v1192, %v3549
        %v3573 = vsub.f32 %v1197, %v3549
        %v3574 = vsub.f32 %v1202, %v3549
        %v3575 = vsub.f32 %v1207, %v3549
        %v3576 = vsub.f32 %v1212, %v3549
        %v3577 = vsub.f32 %v1217, %v3549
        %v3578 = vsub.f32 %v1222, %v3549
        %v3579 = vsub.f32 %v1227, %v3549
        %v3580 = vsub.f32 %v1232, %v3549
        %v3581 = vsub.f32 %v1237, %v3549
        %v3582 = vand.u32 2147483647, %v3550
        %v3583 = vand.u32 2147483647, %v3551
        %v3584 = vand.u32 2147483647, %v3552
        %v3585 = vand.u32 2147483647, %v3553
        %v3586 = vand.u32 2147483647, %v3554
        %v3587 = vand.u32 2147483647, %v3555
        %v3588 = vand.u32 2147483647, %v3556
        %v3589 = vand.u32 2147483647, %v3557
        %v3590 = vand.u32 2147483647, %v3558
        %v3591 = vand.u32 2147483647, %v3559
        %v3592 = vand.u32 2147483647, %v3560
        %v3593 = vand.u32 2147483647, %v3561
        %v3594 = vand.u32 2147483647, %v3562
        %v3595 = vand.u32 2147483647, %v3563
        %v3596 = vand.u32 2147483647, %v3564
        %v3597 = vand.u32 2147483647, %v3565
        %v3598 = vand.u32 2147483647, %v3566
        %v3599 = vand.u32 2147483647, %v3567
        %v3600 = vand.u32 2147483647, %v3568
        %v3601 = vand.u32 2147483647, %v3569
        %v3602 = vand.u32 2147483647, %v3570
        %v3603 = vand.u32 2147483647, %v3571
        %v3604 = vand.u32 2147483647, %v3572
        %v3605 = vand.u32 2147483647, %v3573
        %v3606 = vand.u32 2147483647, %v3574
        %v3607 = vand.u32 2147483647, %v3575
        %v3608 = vand.u32 2147483647, %v3576
        %v3609 = vand.u32 2147483647, %v3577
        %v3610 = vand.u32 2147483647, %v3578
        %v3611 = vand.u32 2147483647, %v3579
        %v3612 = vand.u32 2147483647, %v3580
        %v3613 = vand.u32 2147483647, %v3581
        %v3614 = vsub.f32 1.0, %v3582
        %v3615 = vsub.f32 1.0, %v3583
        %v3616 = vsub.f32 1.0, %v3584
        %v3617 = vsub.f32 1.0, %v3585
        %v3618 = vsub.f32 1.0, %v3586
        %v3619 = vsub.f32 1.0, %v3587
        %v3620 = vsub.f32 1.0, %v3588
        %v3621 = vsub.f32 1.0, %v3589
        %v3622 = vsub.f32 1.0, %v3590
        %v3623 = vsub.f32 1.0, %v3591
        %v3624 = vsub.f32 1.0, %v3592
        %v3625 = vsub.f32 1.0, %v3593
        %v3626 = vsub.f32 1.0, %v3594
        %v3627 = vsub.f32 1.0, %v3595
        %v3628 = vsub.f32 1.0, %v3596
        %v3629 = vsub.f32 1.0, %v3597
        %v3630 = vsub.f32 1.0, %v3598
        %v3631 = vsub.f32 1.0, %v3599
        %v3632 = vsub.f32 1.0, %v3600
        %v3633 = vsub.f32 1.0, %v3601
        %v3634 = vsub.f32 1.0, %v3602
        %v3635 = vsub.f32 1.0, %v3603
        %v3636 = vsub.f32 1.0, %v3604
        %v3637 = vsub.f32 1.0, %v3605
        %v3638 = vsub.f32 1.0, %v3606
        %v3639 = vsub.f32 1.0, %v3607
        %v3640 = vsub.f32 1.0, %v3608
        %v3641 = vsub.f32 1.0, %v3609
        %v3642 = vsub.f32 1.0, %v3610
        %v3643 = vsub.f32 1.0, %v3611
        %v3644 = vsub.f32 1.0, %v3612
        %v3645 = vsub.f32 1.0, %v3613
        %v3646 = vmax.f32 %v3614, 0.0
        %v3647 = vmax.f32 %v3615, 0.0
        %v3648 = vmax.f32 %v3616, 0.0
        %v3649 = vmax.f32 %v3617, 0.0
        %v3650 = vmax.f32 %v3618, 0.0
        %v3651 = vmax.f32 %v3619, 0.0
        %v3652 = vmax.f32 %v3620, 0.0
        %v3653 = vmax.f32 %v3621, 0.0
        %v3654 = vmax.f32 %v3622, 0.0
        %v3655 = vmax.f32 %v3623, 0.0
        %v3656 = vmax.f32 %v3624, 0.0
        %v3657 = vmax.f32 %v3625, 0.0
        %v3658 = vmax.f32 %v3626, 0.0
        %v3659 = vmax.f32 %v3627, 0.0
        %v3660 = vmax.f32 %v3628, 0.0
        %v3661 = vmax.f32 %v3629, 0.0
        %v3662 = vmax.f32 %v3630, 0.0
        %v3663 = vmax.f32 %v3631, 0.0
        %v3664 = vmax.f32 %v3632, 0.0
        %v3665 = vmax.f32 %v3633, 0.0
        %v3666 = vmax.f32 %v3634, 0.0
        %v3667 = vmax.f32 %v3635, 0.0
        %v3668 = vmax.f32 %v3636, 0.0
        %v3669 = vmax.f32 %v3637, 0.0
        %v3670 = vmax.f32 %v3638, 0.0
        %v3671 = vmax.f32 %v3639, 0.0
        %v3672 = vmax.f32 %v3640, 0.0
        %v3673 = vmax.f32 %v3641, 0.0
        %v3674 = vmax.f32 %v3642, 0.0
        %v3675 = vmax.f32 %v3643, 0.0
        %v3676 = vmax.f32 %v3644, 0.0
        %v3677 = vmax.f32 %v3645, 0.0
        %v3678 = vmul.f32 %v3514, %v3646
        %v3679 = vmul.f32 %v3515, %v3647
        %v3680 = vmul.f32 %v3516, %v3648
        %v3681 = vmul.f32 %v3517, %v3649
        %v3682 = vmul.f32 %v3518, %v3650
        %v3683 = vmul.f32 %v3519, %v3651
        %v3684 = vmul.f32 %v3520, %v3652
        %v3685 = vmul.f32 %v3521, %v3653
        %v3686 = vmul.f32 %v3522, %v3654
        %v3687 = vmul.f32 %v3523, %v3655
        %v3688 = vmul.f32 %v3524, %v3656
        %v3689 = vmul.f32 %v3525, %v3657
        %v3690 = vmul.f32 %v3526, %v3658
        %v3691 = vmul.f32 %v3527, %v3659
        %v3692 = vmul.f32 %v3528, %v3660
        %v3693 = vmul.f32 %v3529, %v3661
        %v3694 = vmul.f32 %v3530, %v3662
        %v3695 = vmul.f32 %v3531, %v3663
        %v3696 = vmul.f32 %v3532, %v3664
        %v3697 = vmul.f32 %v3533, %v3665
        %v3698 = vmul.f32 %v3534, %v3666
        %v3699 = vmul.f32 %v3535, %v3667
        %v3700 = vmul.f32 %v3536, %v3668
        %v3701 = vmul.f32 %v3537, %v3669
        %v3702 = vmul.f32 %v3538, %v3670
        %v3703 = vmul.f32 %v3539, %v3671
        %v3704 = vmul.f32 %v3540, %v3672
        %v3705 = vmul.f32 %v3541, %v3673
        %v3706 = vmul.f32 %v3542, %v3674
        %v3707 = vmul.f32 %v3543, %v3675
        %v3708 = vmul.f32 %v3544, %v3676
        %v3709 = vmul.f32 %v3545, %v3677
        %3710 = vmatprep.subr.mxu0 0.0
        %3711 = vmatpush1.msra.mxu0 %v3678
        %3712 = vmatprep.subr.mxu0 0.0
        %3713 = vmatpush1.msra.mxu0 %v3679
        %3714 = vmatprep.subr.mxu0 0.0
        %3715 = vmatpush1.msra.mxu0 %v3680
        %3716 = vmatprep.subr.mxu0 0.0
        %3717 = vmatpush1.msra.mxu0 %v3681
        %3718 = vmatprep.subr.mxu0 0.0
        %3719 = vmatpush1.msra.mxu0 %v3682
        %3720 = vmatprep.subr.mxu0 0.0
        %3721 = vmatpush1.msra.mxu0 %v3683
        %3722 = vmatprep.subr.mxu0 0.0
        %3723 = vmatpush1.msra.mxu0 %v3684
        %3724 = vmatprep.subr.mxu0 0.0
        %3725 = vmatpush1.msra.mxu0 %v3685
        %3726 = vmatprep.subr.mxu0 0.0
        %3727 = vmatpush1.msra.mxu0 %v3686
        %3728 = vmatprep.subr.mxu0 0.0
        %3729 = vmatpush1.msra.mxu0 %v3687
        %3730 = vmatprep.subr.mxu0 0.0
        %3731 = vmatpush1.msra.mxu0 %v3688
        %3732 = vmatprep.subr.mxu0 0.0
        %3733 = vmatpush1.msra.mxu0 %v3689
        %3734 = vmatprep.subr.mxu0 0.0
        %3735 = vmatpush1.msra.mxu0 %v3690
        %3736 = vmatprep.subr.mxu0 0.0
        %3737 = vmatpush1.msra.mxu0 %v3691
        %3738 = vmatprep.subr.mxu0 0.0
        %3739 = vmatpush1.msra.mxu0 %v3692
        %3740 = vmatprep.subr.mxu0 0.0
        %3741 = vmatpush1.msra.mxu0 %v3693
        %3742 = vmatprep.subr.mxu0 0.0
        %3743 = vmatpush1.msra.mxu0 %v3694
        %3744 = vmatprep.subr.mxu0 0.0
        %3745 = vmatpush1.msra.mxu0 %v3695
        %3746 = vmatprep.subr.mxu0 0.0
        %3747 = vmatpush1.msra.mxu0 %v3696
        %3748 = vmatprep.subr.mxu0 0.0
        %3749 = vmatpush1.msra.mxu0 %v3697
        %3750 = vmatprep.subr.mxu0 0.0
        %3751 = vmatpush1.msra.mxu0 %v3698
        %3752 = vmatprep.subr.mxu0 0.0
        %3753 = vmatpush1.msra.mxu0 %v3699
        %3754 = vmatprep.subr.mxu0 0.0
        %3755 = vmatpush1.msra.mxu0 %v3700
        %3756 = vmatprep.subr.mxu0 0.0
        %3757 = vmatpush1.msra.mxu0 %v3701
        %3758 = vmatprep.subr.mxu0 0.0
        %3759 = vmatpush1.msra.mxu0 %v3702
        %3760 = vmatprep.subr.mxu0 0.0
        %3761 = vmatpush1.msra.mxu0 %v3703
        %3762 = vmatprep.subr.mxu0 0.0
        %3763 = vmatpush1.msra.mxu0 %v3704
        %3764 = vmatprep.subr.mxu0 0.0
        %3765 = vmatpush1.msra.mxu0 %v3705
        %3766 = vmatprep.subr.mxu0 0.0
        %3767 = vmatpush1.msra.mxu0 %v3706
        %3768 = vmatprep.subr.mxu0 0.0
        %3769 = vmatpush1.msra.mxu0 %v3707
        %3770 = vmatprep.subr.mxu0 0.0
        %3771 = vmatpush1.msra.mxu0 %v3708
        %3772 = vmatprep.subr.mxu0 0.0
        %3773 = vmatpush1.msra.mxu0 %v3709
        %3774 = vmatprep.mubr.f32.mxu0 %v1404
        %3775 = vmatmul.mubr.f32.gmra.mrb[0].mxu0 %v710
        %v3776 = vpop.f32.mrb[0].mxu0
        %v3777 = vadd.f32 0.0, %v3776
        %v3778 = vpop.f32.mrb[0].mxu0
        %3779 = vdwg.mxu0
        %v3780 = vlaneseq
        %v3781 = vshrl.u32 %v3780, 7
        %v3782 = vsub.s32 0, %v3781
        %v3783 = vrot.slane %v3413, %v3782
        %v3784 = vmul.f32 %v3777, %v3783
        %3785 = vst [vmem:[#allocation2 + $0x18] sm:$0xf] %v3784
        %v3786 = vld [vmem:[%s558 + $0x7] sm:$0x1]
        %v3787 = vld [vmem:[%s507 + $0x7] sm:$0x1]
        %v3788 = vadd.f32 %v3786, %v3787
        %v3789 = vld [vmem:[%s558 + $0x10] sm:$0x1]
        %v3790 = vld [vmem:[%s514 + $0x7] sm:$0x1]
        %v3791 = vadd.f32 %v3789, %v3790
        %v3792 = vld [vmem:[%s558 + $0x19] sm:$0x1]
        %v3793 = vsub.f32 0.0, %v3792
        %v3794 = vmul.f32 %v3793, 1.442695
        %v3795 = vpow.pop %v3794
        %v3796 = vadd.f32 %v3795, 1.0
        %v3797 = vrcp.pop %v3796
        %v3798 = vlaneseq
        %v3799 = vshrl.u32 %v3798, 7
        %v3800 = vsub.s32 0, %v3799
        %v3801 = vrot.slane %v3791, %v3800
        %v3802 = vsub.f32 %v790, %v3801
        %v3803 = vsub.f32 %v795, %v3801
        %v3804 = vsub.f32 %v800, %v3801
        %v3805 = vsub.f32 %v805, %v3801
        %v3806 = vsub.f32 %v810, %v3801
        %v3807 = vsub.f32 %v815, %v3801
        %v3808 = vsub.f32 %v820, %v3801
        %v3809 = vsub.f32 %v825, %v3801
        %v3810 = vsub.f32 %v830, %v3801
        %v3811 = vsub.f32 %v835, %v3801
        %v3812 = vsub.f32 %v840, %v3801
        %v3813 = vsub.f32 %v845, %v3801
        %v3814 = vsub.f32 %v850, %v3801
        %v3815 = vsub.f32 %v855, %v3801
        %v3816 = vsub.f32 %v860, %v3801
        %v3817 = vsub.f32 %v865, %v3801
        %v3818 = vsub.f32 %v870, %v3801
        %v3819 = vsub.f32 %v875, %v3801
        %v3820 = vsub.f32 %v880, %v3801
        %v3821 = vsub.f32 %v885, %v3801
        %v3822 = vsub.f32 %v890, %v3801
        %v3823 = vsub.f32 %v895, %v3801
        %v3824 = vsub.f32 %v900, %v3801
        %v3825 = vsub.f32 %v905, %v3801
        %v3826 = vsub.f32 %v910, %v3801
        %v3827 = vsub.f32 %v915, %v3801
        %v3828 = vsub.f32 %v920, %v3801
        %v3829 = vsub.f32 %v925, %v3801
        %v3830 = vsub.f32 %v930, %v3801
        %v3831 = vsub.f32 %v935, %v3801
        %v3832 = vsub.f32 %v940, %v3801
        %v3833 = vsub.f32 %v945, %v3801
        %v3834 = vand.u32 2147483647, %v3802
        %v3835 = vand.u32 2147483647, %v3803
        %v3836 = vand.u32 2147483647, %v3804
        %v3837 = vand.u32 2147483647, %v3805
        %v3838 = vand.u32 2147483647, %v3806
        %v3839 = vand.u32 2147483647, %v3807
        %v3840 = vand.u32 2147483647, %v3808
        %v3841 = vand.u32 2147483647, %v3809
        %v3842 = vand.u32 2147483647, %v3810
        %v3843 = vand.u32 2147483647, %v3811
        %v3844 = vand.u32 2147483647, %v3812
        %v3845 = vand.u32 2147483647, %v3813
        %v3846 = vand.u32 2147483647, %v3814
        %v3847 = vand.u32 2147483647, %v3815
        %v3848 = vand.u32 2147483647, %v3816
        %v3849 = vand.u32 2147483647, %v3817
        %v3850 = vand.u32 2147483647, %v3818
        %v3851 = vand.u32 2147483647, %v3819
        %v3852 = vand.u32 2147483647, %v3820
        %v3853 = vand.u32 2147483647, %v3821
        %v3854 = vand.u32 2147483647, %v3822
        %v3855 = vand.u32 2147483647, %v3823
        %v3856 = vand.u32 2147483647, %v3824
        %v3857 = vand.u32 2147483647, %v3825
        %v3858 = vand.u32 2147483647, %v3826
        %v3859 = vand.u32 2147483647, %v3827
        %v3860 = vand.u32 2147483647, %v3828
        %v3861 = vand.u32 2147483647, %v3829
        %v3862 = vand.u32 2147483647, %v3830
        %v3863 = vand.u32 2147483647, %v3831
        %v3864 = vand.u32 2147483647, %v3832
        %v3865 = vand.u32 2147483647, %v3833
        %v3866 = vsub.f32 1.0, %v3834
        %v3867 = vsub.f32 1.0, %v3835
        %v3868 = vsub.f32 1.0, %v3836
        %v3869 = vsub.f32 1.0, %v3837
        %v3870 = vsub.f32 1.0, %v3838
        %v3871 = vsub.f32 1.0, %v3839
        %v3872 = vsub.f32 1.0, %v3840
        %v3873 = vsub.f32 1.0, %v3841
        %v3874 = vsub.f32 1.0, %v3842
        %v3875 = vsub.f32 1.0, %v3843
        %v3876 = vsub.f32 1.0, %v3844
        %v3877 = vsub.f32 1.0, %v3845
        %v3878 = vsub.f32 1.0, %v3846
        %v3879 = vsub.f32 1.0, %v3847
        %v3880 = vsub.f32 1.0, %v3848
        %v3881 = vsub.f32 1.0, %v3849
        %v3882 = vsub.f32 1.0, %v3850
        %v3883 = vsub.f32 1.0, %v3851
        %v3884 = vsub.f32 1.0, %v3852
        %v3885 = vsub.f32 1.0, %v3853
        %v3886 = vsub.f32 1.0, %v3854
        %v3887 = vsub.f32 1.0, %v3855
        %v3888 = vsub.f32 1.0, %v3856
        %v3889 = vsub.f32 1.0, %v3857
        %v3890 = vsub.f32 1.0, %v3858
        %v3891 = vsub.f32 1.0, %v3859
        %v3892 = vsub.f32 1.0, %v3860
        %v3893 = vsub.f32 1.0, %v3861
        %v3894 = vsub.f32 1.0, %v3862
        %v3895 = vsub.f32 1.0, %v3863
        %v3896 = vsub.f32 1.0, %v3864
        %v3897 = vsub.f32 1.0, %v3865
        %v3898 = vmax.f32 %v3866, 0.0
        %v3899 = vmax.f32 %v3867, 0.0
        %v3900 = vmax.f32 %v3868, 0.0
        %v3901 = vmax.f32 %v3869, 0.0
        %v3902 = vmax.f32 %v3870, 0.0
        %v3903 = vmax.f32 %v3871, 0.0
        %v3904 = vmax.f32 %v3872, 0.0
        %v3905 = vmax.f32 %v3873, 0.0
        %v3906 = vmax.f32 %v3874, 0.0
        %v3907 = vmax.f32 %v3875, 0.0
        %v3908 = vmax.f32 %v3876, 0.0
        %v3909 = vmax.f32 %v3877, 0.0
        %v3910 = vmax.f32 %v3878, 0.0
        %v3911 = vmax.f32 %v3879, 0.0
        %v3912 = vmax.f32 %v3880, 0.0
        %v3913 = vmax.f32 %v3881, 0.0
        %v3914 = vmax.f32 %v3882, 0.0
        %v3915 = vmax.f32 %v3883, 0.0
        %v3916 = vmax.f32 %v3884, 0.0
        %v3917 = vmax.f32 %v3885, 0.0
        %v3918 = vmax.f32 %v3886, 0.0
        %v3919 = vmax.f32 %v3887, 0.0
        %v3920 = vmax.f32 %v3888, 0.0
        %v3921 = vmax.f32 %v3889, 0.0
        %v3922 = vmax.f32 %v3890, 0.0
        %v3923 = vmax.f32 %v3891, 0.0
        %v3924 = vmax.f32 %v3892, 0.0
        %v3925 = vmax.f32 %v3893, 0.0
        %v3926 = vmax.f32 %v3894, 0.0
        %v3927 = vmax.f32 %v3895, 0.0
        %v3928 = vmax.f32 %v3896, 0.0
        %v3929 = vmax.f32 %v3897, 0.0
        %v3930 = vlaneseq
        %v3931 = vshrl.u32 %v3930, 7
        %v3932 = vsub.s32 0, %v3931
        %v3933 = vrot.slane %v3788, %v3932
        %v3934 = vsub.f32 %v1082, %v3933
        %v3935 = vsub.f32 %v1087, %v3933
        %v3936 = vsub.f32 %v1092, %v3933
        %v3937 = vsub.f32 %v1097, %v3933
        %v3938 = vsub.f32 %v1102, %v3933
        %v3939 = vsub.f32 %v1107, %v3933
        %v3940 = vsub.f32 %v1112, %v3933
        %v3941 = vsub.f32 %v1117, %v3933
        %v3942 = vsub.f32 %v1122, %v3933
        %v3943 = vsub.f32 %v1127, %v3933
        %v3944 = vsub.f32 %v1132, %v3933
        %v3945 = vsub.f32 %v1137, %v3933
        %v3946 = vsub.f32 %v1142, %v3933
        %v3947 = vsub.f32 %v1147, %v3933
        %v3948 = vsub.f32 %v1152, %v3933
        %v3949 = vsub.f32 %v1157, %v3933
        %v3950 = vsub.f32 %v1162, %v3933
        %v3951 = vsub.f32 %v1167, %v3933
        %v3952 = vsub.f32 %v1172, %v3933
        %v3953 = vsub.f32 %v1177, %v3933
        %v3954 = vsub.f32 %v1182, %v3933
        %v3955 = vsub.f32 %v1187, %v3933
        %v3956 = vsub.f32 %v1192, %v3933
        %v3957 = vsub.f32 %v1197, %v3933
        %v3958 = vsub.f32 %v1202, %v3933
        %v3959 = vsub.f32 %v1207, %v3933
        %v3960 = vsub.f32 %v1212, %v3933
        %v3961 = vsub.f32 %v1217, %v3933
        %v3962 = vsub.f32 %v1222, %v3933
        %v3963 = vsub.f32 %v1227, %v3933
        %v3964 = vsub.f32 %v1232, %v3933
        %v3965 = vsub.f32 %v1237, %v3933
        %v3966 = vand.u32 2147483647, %v3934
        %v3967 = vand.u32 2147483647, %v3935
        %v3968 = vand.u32 2147483647, %v3936
        %v3969 = vand.u32 2147483647, %v3937
        %v3970 = vand.u32 2147483647, %v3938
        %v3971 = vand.u32 2147483647, %v3939
        %v3972 = vand.u32 2147483647, %v3940
        %v3973 = vand.u32 2147483647, %v3941
        %v3974 = vand.u32 2147483647, %v3942
        %v3975 = vand.u32 2147483647, %v3943
        %v3976 = vand.u32 2147483647, %v3944
        %v3977 = vand.u32 2147483647, %v3945
        %v3978 = vand.u32 2147483647, %v3946
        %v3979 = vand.u32 2147483647, %v3947
        %v3980 = vand.u32 2147483647, %v3948
        %v3981 = vand.u32 2147483647, %v3949
        %v3982 = vand.u32 2147483647, %v3950
        %v3983 = vand.u32 2147483647, %v3951
        %v3984 = vand.u32 2147483647, %v3952
        %v3985 = vand.u32 2147483647, %v3953
        %v3986 = vand.u32 2147483647, %v3954
        %v3987 = vand.u32 2147483647, %v3955
        %v3988 = vand.u32 2147483647, %v3956
        %v3989 = vand.u32 2147483647, %v3957
        %v3990 = vand.u32 2147483647, %v3958
        %v3991 = vand.u32 2147483647, %v3959
        %v3992 = vand.u32 2147483647, %v3960
        %v3993 = vand.u32 2147483647, %v3961
        %v3994 = vand.u32 2147483647, %v3962
        %v3995 = vand.u32 2147483647, %v3963
        %v3996 = vand.u32 2147483647, %v3964
        %v3997 = vand.u32 2147483647, %v3965
        %v3998 = vsub.f32 1.0, %v3966
        %v3999 = vsub.f32 1.0, %v3967
        %v4000 = vsub.f32 1.0, %v3968
        %v4001 = vsub.f32 1.0, %v3969
        %v4002 = vsub.f32 1.0, %v3970
        %v4003 = vsub.f32 1.0, %v3971
        %v4004 = vsub.f32 1.0, %v3972
        %v4005 = vsub.f32 1.0, %v3973
        %v4006 = vsub.f32 1.0, %v3974
        %v4007 = vsub.f32 1.0, %v3975
        %v4008 = vsub.f32 1.0, %v3976
        %v4009 = vsub.f32 1.0, %v3977
        %v4010 = vsub.f32 1.0, %v3978
        %v4011 = vsub.f32 1.0, %v3979
        %v4012 = vsub.f32 1.0, %v3980
        %v4013 = vsub.f32 1.0, %v3981
        %v4014 = vsub.f32 1.0, %v3982
        %v4015 = vsub.f32 1.0, %v3983
        %v4016 = vsub.f32 1.0, %v3984
        %v4017 = vsub.f32 1.0, %v3985
        %v4018 = vsub.f32 1.0, %v3986
        %v4019 = vsub.f32 1.0, %v3987
        %v4020 = vsub.f32 1.0, %v3988
        %v4021 = vsub.f32 1.0, %v3989
        %v4022 = vsub.f32 1.0, %v3990
        %v4023 = vsub.f32 1.0, %v3991
        %v4024 = vsub.f32 1.0, %v3992
        %v4025 = vsub.f32 1.0, %v3993
        %v4026 = vsub.f32 1.0, %v3994
        %v4027 = vsub.f32 1.0, %v3995
        %v4028 = vsub.f32 1.0, %v3996
        %v4029 = vsub.f32 1.0, %v3997
        %v4030 = vmax.f32 %v3998, 0.0
        %v4031 = vmax.f32 %v3999, 0.0
        %v4032 = vmax.f32 %v4000, 0.0
        %v4033 = vmax.f32 %v4001, 0.0
        %v4034 = vmax.f32 %v4002, 0.0
        %v4035 = vmax.f32 %v4003, 0.0
        %v4036 = vmax.f32 %v4004, 0.0
        %v4037 = vmax.f32 %v4005, 0.0
        %v4038 = vmax.f32 %v4006, 0.0
        %v4039 = vmax.f32 %v4007, 0.0
        %v4040 = vmax.f32 %v4008, 0.0
        %v4041 = vmax.f32 %v4009, 0.0
        %v4042 = vmax.f32 %v4010, 0.0
        %v4043 = vmax.f32 %v4011, 0.0
        %v4044 = vmax.f32 %v4012, 0.0
        %v4045 = vmax.f32 %v4013, 0.0
        %v4046 = vmax.f32 %v4014, 0.0
        %v4047 = vmax.f32 %v4015, 0.0
        %v4048 = vmax.f32 %v4016, 0.0
        %v4049 = vmax.f32 %v4017, 0.0
        %v4050 = vmax.f32 %v4018, 0.0
        %v4051 = vmax.f32 %v4019, 0.0
        %v4052 = vmax.f32 %v4020, 0.0
        %v4053 = vmax.f32 %v4021, 0.0
        %v4054 = vmax.f32 %v4022, 0.0
        %v4055 = vmax.f32 %v4023, 0.0
        %v4056 = vmax.f32 %v4024, 0.0
        %v4057 = vmax.f32 %v4025, 0.0
        %v4058 = vmax.f32 %v4026, 0.0
        %v4059 = vmax.f32 %v4027, 0.0
        %v4060 = vmax.f32 %v4028, 0.0
        %v4061 = vmax.f32 %v4029, 0.0
        %v4062 = vmul.f32 %v3898, %v4030
        %v4063 = vmul.f32 %v3899, %v4031
        %v4064 = vmul.f32 %v3900, %v4032
        %v4065 = vmul.f32 %v3901, %v4033
        %v4066 = vmul.f32 %v3902, %v4034
        %v4067 = vmul.f32 %v3903, %v4035
        %v4068 = vmul.f32 %v3904, %v4036
        %v4069 = vmul.f32 %v3905, %v4037
        %v4070 = vmul.f32 %v3906, %v4038
        %v4071 = vmul.f32 %v3907, %v4039
        %v4072 = vmul.f32 %v3908, %v4040
        %v4073 = vmul.f32 %v3909, %v4041
        %v4074 = vmul.f32 %v3910, %v4042
        %v4075 = vmul.f32 %v3911, %v4043
        %v4076 = vmul.f32 %v3912, %v4044
        %v4077 = vmul.f32 %v3913, %v4045
        %v4078 = vmul.f32 %v3914, %v4046
        %v4079 = vmul.f32 %v3915, %v4047
        %v4080 = vmul.f32 %v3916, %v4048
        %v4081 = vmul.f32 %v3917, %v4049
        %v4082 = vmul.f32 %v3918, %v4050
        %v4083 = vmul.f32 %v3919, %v4051
        %v4084 = vmul.f32 %v3920, %v4052
        %v4085 = vmul.f32 %v3921, %v4053
        %v4086 = vmul.f32 %v3922, %v4054
        %v4087 = vmul.f32 %v3923, %v4055
        %v4088 = vmul.f32 %v3924, %v4056
        %v4089 = vmul.f32 %v3925, %v4057
        %v4090 = vmul.f32 %v3926, %v4058
        %v4091 = vmul.f32 %v3927, %v4059
        %v4092 = vmul.f32 %v3928, %v4060
        %v4093 = vmul.f32 %v3929, %v4061
        %4094 = vmatprep.subr.mxu0 0.0
        %4095 = vmatpush1.msra.mxu0 %v4062
        %4096 = vmatprep.subr.mxu0 0.0
        %4097 = vmatpush1.msra.mxu0 %v4063
        %4098 = vmatprep.subr.mxu0 0.0
        %4099 = vmatpush1.msra.mxu0 %v4064
        %4100 = vmatprep.subr.mxu0 0.0
        %4101 = vmatpush1.msra.mxu0 %v4065
        %4102 = vmatprep.subr.mxu0 0.0
        %4103 = vmatpush1.msra.mxu0 %v4066
        %4104 = vmatprep.subr.mxu0 0.0
        %4105 = vmatpush1.msra.mxu0 %v4067
        %4106 = vmatprep.subr.mxu0 0.0
        %4107 = vmatpush1.msra.mxu0 %v4068
        %4108 = vmatprep.subr.mxu0 0.0
        %4109 = vmatpush1.msra.mxu0 %v4069
        %4110 = vmatprep.subr.mxu0 0.0
        %4111 = vmatpush1.msra.mxu0 %v4070
        %4112 = vmatprep.subr.mxu0 0.0
        %4113 = vmatpush1.msra.mxu0 %v4071
        %4114 = vmatprep.subr.mxu0 0.0
        %4115 = vmatpush1.msra.mxu0 %v4072
        %4116 = vmatprep.subr.mxu0 0.0
        %4117 = vmatpush1.msra.mxu0 %v4073
        %4118 = vmatprep.subr.mxu0 0.0
        %4119 = vmatpush1.msra.mxu0 %v4074
        %4120 = vmatprep.subr.mxu0 0.0
        %4121 = vmatpush1.msra.mxu0 %v4075
        %4122 = vmatprep.subr.mxu0 0.0
        %4123 = vmatpush1.msra.mxu0 %v4076
        %4124 = vmatprep.subr.mxu0 0.0
        %4125 = vmatpush1.msra.mxu0 %v4077
        %4126 = vmatprep.subr.mxu0 0.0
        %4127 = vmatpush1.msra.mxu0 %v4078
        %4128 = vmatprep.subr.mxu0 0.0
        %4129 = vmatpush1.msra.mxu0 %v4079
        %4130 = vmatprep.subr.mxu0 0.0
        %4131 = vmatpush1.msra.mxu0 %v4080
        %4132 = vmatprep.subr.mxu0 0.0
        %4133 = vmatpush1.msra.mxu0 %v4081
        %4134 = vmatprep.subr.mxu0 0.0
        %4135 = vmatpush1.msra.mxu0 %v4082
        %4136 = vmatprep.subr.mxu0 0.0
        %4137 = vmatpush1.msra.mxu0 %v4083
        %4138 = vmatprep.subr.mxu0 0.0
        %4139 = vmatpush1.msra.mxu0 %v4084
        %4140 = vmatprep.subr.mxu0 0.0
        %4141 = vmatpush1.msra.mxu0 %v4085
        %4142 = vmatprep.subr.mxu0 0.0
        %4143 = vmatpush1.msra.mxu0 %v4086
        %4144 = vmatprep.subr.mxu0 0.0
        %4145 = vmatpush1.msra.mxu0 %v4087
        %4146 = vmatprep.subr.mxu0 0.0
        %4147 = vmatpush1.msra.mxu0 %v4088
        %4148 = vmatprep.subr.mxu0 0.0
        %4149 = vmatpush1.msra.mxu0 %v4089
        %4150 = vmatprep.subr.mxu0 0.0
        %4151 = vmatpush1.msra.mxu0 %v4090
        %4152 = vmatprep.subr.mxu0 0.0
        %4153 = vmatpush1.msra.mxu0 %v4091
        %4154 = vmatprep.subr.mxu0 0.0
        %4155 = vmatpush1.msra.mxu0 %v4092
        %4156 = vmatprep.subr.mxu0 0.0
        %4157 = vmatpush1.msra.mxu0 %v4093
        %4158 = vmatprep.mubr.f32.mxu0 %v1404
        %4159 = vmatmul.mubr.f32.gmra.mrb[0].mxu0 %v710
        %v4160 = vpop.f32.mrb[0].mxu0
        %v4161 = vadd.f32 0.0, %v4160
        %v4162 = vpop.f32.mrb[0].mxu0
        %4163 = vdwg.mxu0
        %v4164 = vlaneseq
        %v4165 = vshrl.u32 %v4164, 7
        %v4166 = vsub.s32 0, %v4165
        %v4167 = vrot.slane %v3797, %v4166
        %v4168 = vmul.f32 %v4161, %v4167
        %4169 = vst [vmem:[#allocation2 + $0x1c] sm:$0xf] %v4168
        %v4170 = vld [vmem:[%s558 + $0x8] sm:$0x1]
        %v4171 = vld [vmem:[%s507 + $0x8] sm:$0x1]
        %v4172 = vadd.f32 %v4170, %v4171
        %v4173 = vld [vmem:[%s558 + $0x11] sm:$0x1]
        %v4174 = vld [vmem:[%s514 + $0x8] sm:$0x1]
        %v4175 = vadd.f32 %v4173, %v4174
        %v4176 = vld [vmem:[%s558 + $0x1a] sm:$0x1]
        %v4177 = vsub.f32 0.0, %v4176
        %v4178 = vmul.f32 %v4177, 1.442695
        %v4179 = vpow.pop %v4178
        %v4180 = vadd.f32 %v4179, 1.0
        %v4181 = vrcp.pop %v4180
        %v4182 = vlaneseq
        %v4183 = vshrl.u32 %v4182, 7
        %v4184 = vsub.s32 0, %v4183
        %v4185 = vrot.slane %v4175, %v4184
        %v4186 = vsub.f32 %v790, %v4185
        %v4187 = vsub.f32 %v795, %v4185
        %v4188 = vsub.f32 %v800, %v4185
        %v4189 = vsub.f32 %v805, %v4185
        %v4190 = vsub.f32 %v810, %v4185
        %v4191 = vsub.f32 %v815, %v4185
        %v4192 = vsub.f32 %v820, %v4185
        %v4193 = vsub.f32 %v825, %v4185
        %v4194 = vsub.f32 %v830, %v4185
        %v4195 = vsub.f32 %v835, %v4185
        %v4196 = vsub.f32 %v840, %v4185
        %v4197 = vsub.f32 %v845, %v4185
        %v4198 = vsub.f32 %v850, %v4185
        %v4199 = vsub.f32 %v855, %v4185
        %v4200 = vsub.f32 %v860, %v4185
        %v4201 = vsub.f32 %v865, %v4185
        %v4202 = vsub.f32 %v870, %v4185
        %v4203 = vsub.f32 %v875, %v4185
        %v4204 = vsub.f32 %v880, %v4185
        %v4205 = vsub.f32 %v885, %v4185
        %v4206 = vsub.f32 %v890, %v4185
        %v4207 = vsub.f32 %v895, %v4185
        %v4208 = vsub.f32 %v900, %v4185
        %v4209 = vsub.f32 %v905, %v4185
        %v4210 = vsub.f32 %v910, %v4185
        %v4211 = vsub.f32 %v915, %v4185
        %v4212 = vsub.f32 %v920, %v4185
        %v4213 = vsub.f32 %v925, %v4185
        %v4214 = vsub.f32 %v930, %v4185
        %v4215 = vsub.f32 %v935, %v4185
        %v4216 = vsub.f32 %v940, %v4185
        %v4217 = vsub.f32 %v945, %v4185
        %v4218 = vand.u32 2147483647, %v4186
        %v4219 = vand.u32 2147483647, %v4187
        %v4220 = vand.u32 2147483647, %v4188
        %v4221 = vand.u32 2147483647, %v4189
        %v4222 = vand.u32 2147483647, %v4190
        %v4223 = vand.u32 2147483647, %v4191
        %v4224 = vand.u32 2147483647, %v4192
        %v4225 = vand.u32 2147483647, %v4193
        %v4226 = vand.u32 2147483647, %v4194
        %v4227 = vand.u32 2147483647, %v4195
        %v4228 = vand.u32 2147483647, %v4196
        %v4229 = vand.u32 2147483647, %v4197
        %v4230 = vand.u32 2147483647, %v4198
        %v4231 = vand.u32 2147483647, %v4199
        %v4232 = vand.u32 2147483647, %v4200
        %v4233 = vand.u32 2147483647, %v4201
        %v4234 = vand.u32 2147483647, %v4202
        %v4235 = vand.u32 2147483647, %v4203
        %v4236 = vand.u32 2147483647, %v4204
        %v4237 = vand.u32 2147483647, %v4205
        %v4238 = vand.u32 2147483647, %v4206
        %v4239 = vand.u32 2147483647, %v4207
        %v4240 = vand.u32 2147483647, %v4208
        %v4241 = vand.u32 2147483647, %v4209
        %v4242 = vand.u32 2147483647, %v4210
        %v4243 = vand.u32 2147483647, %v4211
        %v4244 = vand.u32 2147483647, %v4212
        %v4245 = vand.u32 2147483647, %v4213
        %v4246 = vand.u32 2147483647, %v4214
        %v4247 = vand.u32 2147483647, %v4215
        %v4248 = vand.u32 2147483647, %v4216
        %v4249 = vand.u32 2147483647, %v4217
        %v4250 = vsub.f32 1.0, %v4218
        %v4251 = vsub.f32 1.0, %v4219
        %v4252 = vsub.f32 1.0, %v4220
        %v4253 = vsub.f32 1.0, %v4221
        %v4254 = vsub.f32 1.0, %v4222
        %v4255 = vsub.f32 1.0, %v4223
        %v4256 = vsub.f32 1.0, %v4224
        %v4257 = vsub.f32 1.0, %v4225
        %v4258 = vsub.f32 1.0, %v4226
        %v4259 = vsub.f32 1.0, %v4227
        %v4260 = vsub.f32 1.0, %v4228
        %v4261 = vsub.f32 1.0, %v4229
        %v4262 = vsub.f32 1.0, %v4230
        %v4263 = vsub.f32 1.0, %v4231
        %v4264 = vsub.f32 1.0, %v4232
        %v4265 = vsub.f32 1.0, %v4233
        %v4266 = vsub.f32 1.0, %v4234
        %v4267 = vsub.f32 1.0, %v4235
        %v4268 = vsub.f32 1.0, %v4236
        %v4269 = vsub.f32 1.0, %v4237
        %v4270 = vsub.f32 1.0, %v4238
        %v4271 = vsub.f32 1.0, %v4239
        %v4272 = vsub.f32 1.0, %v4240
        %v4273 = vsub.f32 1.0, %v4241
        %v4274 = vsub.f32 1.0, %v4242
        %v4275 = vsub.f32 1.0, %v4243
        %v4276 = vsub.f32 1.0, %v4244
        %v4277 = vsub.f32 1.0, %v4245
        %v4278 = vsub.f32 1.0, %v4246
        %v4279 = vsub.f32 1.0, %v4247
        %v4280 = vsub.f32 1.0, %v4248
        %v4281 = vsub.f32 1.0, %v4249
        %v4282 = vmax.f32 %v4250, 0.0
        %v4283 = vmax.f32 %v4251, 0.0
        %v4284 = vmax.f32 %v4252, 0.0
        %v4285 = vmax.f32 %v4253, 0.0
        %v4286 = vmax.f32 %v4254, 0.0
        %v4287 = vmax.f32 %v4255, 0.0
        %v4288 = vmax.f32 %v4256, 0.0
        %v4289 = vmax.f32 %v4257, 0.0
        %v4290 = vmax.f32 %v4258, 0.0
        %v4291 = vmax.f32 %v4259, 0.0
        %v4292 = vmax.f32 %v4260, 0.0
        %v4293 = vmax.f32 %v4261, 0.0
        %v4294 = vmax.f32 %v4262, 0.0
        %v4295 = vmax.f32 %v4263, 0.0
        %v4296 = vmax.f32 %v4264, 0.0
        %v4297 = vmax.f32 %v4265, 0.0
        %v4298 = vmax.f32 %v4266, 0.0
        %v4299 = vmax.f32 %v4267, 0.0
        %v4300 = vmax.f32 %v4268, 0.0
        %v4301 = vmax.f32 %v4269, 0.0
        %v4302 = vmax.f32 %v4270, 0.0
        %v4303 = vmax.f32 %v4271, 0.0
        %v4304 = vmax.f32 %v4272, 0.0
        %v4305 = vmax.f32 %v4273, 0.0
        %v4306 = vmax.f32 %v4274, 0.0
        %v4307 = vmax.f32 %v4275, 0.0
        %v4308 = vmax.f32 %v4276, 0.0
        %v4309 = vmax.f32 %v4277, 0.0
        %v4310 = vmax.f32 %v4278, 0.0
        %v4311 = vmax.f32 %v4279, 0.0
        %v4312 = vmax.f32 %v4280, 0.0
        %v4313 = vmax.f32 %v4281, 0.0
        %v4314 = vlaneseq
        %v4315 = vshrl.u32 %v4314, 7
        %v4316 = vsub.s32 0, %v4315
        %v4317 = vrot.slane %v4172, %v4316
        %v4318 = vsub.f32 %v1082, %v4317
        %v4319 = vsub.f32 %v1087, %v4317
        %v4320 = vsub.f32 %v1092, %v4317
        %v4321 = vsub.f32 %v1097, %v4317
        %v4322 = vsub.f32 %v1102, %v4317
        %v4323 = vsub.f32 %v1107, %v4317
        %v4324 = vsub.f32 %v1112, %v4317
        %v4325 = vsub.f32 %v1117, %v4317
        %v4326 = vsub.f32 %v1122, %v4317
        %v4327 = vsub.f32 %v1127, %v4317
        %v4328 = vsub.f32 %v1132, %v4317
        %v4329 = vsub.f32 %v1137, %v4317
        %v4330 = vsub.f32 %v1142, %v4317
        %v4331 = vsub.f32 %v1147, %v4317
        %v4332 = vsub.f32 %v1152, %v4317
        %v4333 = vsub.f32 %v1157, %v4317
        %v4334 = vsub.f32 %v1162, %v4317
        %v4335 = vsub.f32 %v1167, %v4317
        %v4336 = vsub.f32 %v1172, %v4317
        %v4337 = vsub.f32 %v1177, %v4317
        %v4338 = vsub.f32 %v1182, %v4317
        %v4339 = vsub.f32 %v1187, %v4317
        %v4340 = vsub.f32 %v1192, %v4317
        %v4341 = vsub.f32 %v1197, %v4317
        %v4342 = vsub.f32 %v1202, %v4317
        %v4343 = vsub.f32 %v1207, %v4317
        %v4344 = vsub.f32 %v1212, %v4317
        %v4345 = vsub.f32 %v1217, %v4317
        %v4346 = vsub.f32 %v1222, %v4317
        %v4347 = vsub.f32 %v1227, %v4317
        %v4348 = vsub.f32 %v1232, %v4317
        %v4349 = vsub.f32 %v1237, %v4317
        %v4350 = vand.u32 2147483647, %v4318
        %v4351 = vand.u32 2147483647, %v4319
        %v4352 = vand.u32 2147483647, %v4320
        %v4353 = vand.u32 2147483647, %v4321
        %v4354 = vand.u32 2147483647, %v4322
        %v4355 = vand.u32 2147483647, %v4323
        %v4356 = vand.u32 2147483647, %v4324
        %v4357 = vand.u32 2147483647, %v4325
        %v4358 = vand.u32 2147483647, %v4326
        %v4359 = vand.u32 2147483647, %v4327
        %v4360 = vand.u32 2147483647, %v4328
        %v4361 = vand.u32 2147483647, %v4329
        %v4362 = vand.u32 2147483647, %v4330
        %v4363 = vand.u32 2147483647, %v4331
        %v4364 = vand.u32 2147483647, %v4332
        %v4365 = vand.u32 2147483647, %v4333
        %v4366 = vand.u32 2147483647, %v4334
        %v4367 = vand.u32 2147483647, %v4335
        %v4368 = vand.u32 2147483647, %v4336
        %v4369 = vand.u32 2147483647, %v4337
        %v4370 = vand.u32 2147483647, %v4338
        %v4371 = vand.u32 2147483647, %v4339
        %v4372 = vand.u32 2147483647, %v4340
        %v4373 = vand.u32 2147483647, %v4341
        %v4374 = vand.u32 2147483647, %v4342
        %v4375 = vand.u32 2147483647, %v4343
        %v4376 = vand.u32 2147483647, %v4344
        %v4377 = vand.u32 2147483647, %v4345
        %v4378 = vand.u32 2147483647, %v4346
        %v4379 = vand.u32 2147483647, %v4347
        %v4380 = vand.u32 2147483647, %v4348
        %v4381 = vand.u32 2147483647, %v4349
        %v4382 = vsub.f32 1.0, %v4350
        %v4383 = vsub.f32 1.0, %v4351
        %v4384 = vsub.f32 1.0, %v4352
        %v4385 = vsub.f32 1.0, %v4353
        %v4386 = vsub.f32 1.0, %v4354
        %v4387 = vsub.f32 1.0, %v4355
        %v4388 = vsub.f32 1.0, %v4356
        %v4389 = vsub.f32 1.0, %v4357
        %v4390 = vsub.f32 1.0, %v4358
        %v4391 = vsub.f32 1.0, %v4359
        %v4392 = vsub.f32 1.0, %v4360
        %v4393 = vsub.f32 1.0, %v4361
        %v4394 = vsub.f32 1.0, %v4362
        %v4395 = vsub.f32 1.0, %v4363
        %v4396 = vsub.f32 1.0, %v4364
        %v4397 = vsub.f32 1.0, %v4365
        %v4398 = vsub.f32 1.0, %v4366
        %v4399 = vsub.f32 1.0, %v4367
        %v4400 = vsub.f32 1.0, %v4368
        %v4401 = vsub.f32 1.0, %v4369
        %v4402 = vsub.f32 1.0, %v4370
        %v4403 = vsub.f32 1.0, %v4371
        %v4404 = vsub.f32 1.0, %v4372
        %v4405 = vsub.f32 1.0, %v4373
        %v4406 = vsub.f32 1.0, %v4374
        %v4407 = vsub.f32 1.0, %v4375
        %v4408 = vsub.f32 1.0, %v4376
        %v4409 = vsub.f32 1.0, %v4377
        %v4410 = vsub.f32 1.0, %v4378
        %v4411 = vsub.f32 1.0, %v4379
        %v4412 = vsub.f32 1.0, %v4380
        %v4413 = vsub.f32 1.0, %v4381
        %v4414 = vmax.f32 %v4382, 0.0
        %v4415 = vmax.f32 %v4383, 0.0
        %v4416 = vmax.f32 %v4384, 0.0
        %v4417 = vmax.f32 %v4385, 0.0
        %v4418 = vmax.f32 %v4386, 0.0
        %v4419 = vmax.f32 %v4387, 0.0
        %v4420 = vmax.f32 %v4388, 0.0
        %v4421 = vmax.f32 %v4389, 0.0
        %v4422 = vmax.f32 %v4390, 0.0
        %v4423 = vmax.f32 %v4391, 0.0
        %v4424 = vmax.f32 %v4392, 0.0
        %v4425 = vmax.f32 %v4393, 0.0
        %v4426 = vmax.f32 %v4394, 0.0
        %v4427 = vmax.f32 %v4395, 0.0
        %v4428 = vmax.f32 %v4396, 0.0
        %v4429 = vmax.f32 %v4397, 0.0
        %v4430 = vmax.f32 %v4398, 0.0
        %v4431 = vmax.f32 %v4399, 0.0
        %v4432 = vmax.f32 %v4400, 0.0
        %v4433 = vmax.f32 %v4401, 0.0
        %v4434 = vmax.f32 %v4402, 0.0
        %v4435 = vmax.f32 %v4403, 0.0
        %v4436 = vmax.f32 %v4404, 0.0
        %v4437 = vmax.f32 %v4405, 0.0
        %v4438 = vmax.f32 %v4406, 0.0
        %v4439 = vmax.f32 %v4407, 0.0
        %v4440 = vmax.f32 %v4408, 0.0
        %v4441 = vmax.f32 %v4409, 0.0
        %v4442 = vmax.f32 %v4410, 0.0
        %v4443 = vmax.f32 %v4411, 0.0
        %v4444 = vmax.f32 %v4412, 0.0
        %v4445 = vmax.f32 %v4413, 0.0
        %v4446 = vmul.f32 %v4282, %v4414
        %v4447 = vmul.f32 %v4283, %v4415
        %v4448 = vmul.f32 %v4284, %v4416
        %v4449 = vmul.f32 %v4285, %v4417
        %v4450 = vmul.f32 %v4286, %v4418
        %v4451 = vmul.f32 %v4287, %v4419
        %v4452 = vmul.f32 %v4288, %v4420
        %v4453 = vmul.f32 %v4289, %v4421
        %v4454 = vmul.f32 %v4290, %v4422
        %v4455 = vmul.f32 %v4291, %v4423
        %v4456 = vmul.f32 %v4292, %v4424
        %v4457 = vmul.f32 %v4293, %v4425
        %v4458 = vmul.f32 %v4294, %v4426
        %v4459 = vmul.f32 %v4295, %v4427
        %v4460 = vmul.f32 %v4296, %v4428
        %v4461 = vmul.f32 %v4297, %v4429
        %v4462 = vmul.f32 %v4298, %v4430
        %v4463 = vmul.f32 %v4299, %v4431
        %v4464 = vmul.f32 %v4300, %v4432
        %v4465 = vmul.f32 %v4301, %v4433
        %v4466 = vmul.f32 %v4302, %v4434
        %v4467 = vmul.f32 %v4303, %v4435
        %v4468 = vmul.f32 %v4304, %v4436
        %v4469 = vmul.f32 %v4305, %v4437
        %v4470 = vmul.f32 %v4306, %v4438
        %v4471 = vmul.f32 %v4307, %v4439
        %v4472 = vmul.f32 %v4308, %v4440
        %v4473 = vmul.f32 %v4309, %v4441
        %v4474 = vmul.f32 %v4310, %v4442
        %v4475 = vmul.f32 %v4311, %v4443
        %v4476 = vmul.f32 %v4312, %v4444
        %v4477 = vmul.f32 %v4313, %v4445
        %4478 = vmatprep.subr.mxu0 0.0
        %4479 = vmatpush1.msra.mxu0 %v4446
        %4480 = vmatprep.subr.mxu0 0.0
        %4481 = vmatpush1.msra.mxu0 %v4447
        %4482 = vmatprep.subr.mxu0 0.0
        %4483 = vmatpush1.msra.mxu0 %v4448
        %4484 = vmatprep.subr.mxu0 0.0
        %4485 = vmatpush1.msra.mxu0 %v4449
        %4486 = vmatprep.subr.mxu0 0.0
        %4487 = vmatpush1.msra.mxu0 %v4450
        %4488 = vmatprep.subr.mxu0 0.0
        %4489 = vmatpush1.msra.mxu0 %v4451
        %4490 = vmatprep.subr.mxu0 0.0
        %4491 = vmatpush1.msra.mxu0 %v4452
        %4492 = vmatprep.subr.mxu0 0.0
        %4493 = vmatpush1.msra.mxu0 %v4453
        %4494 = vmatprep.subr.mxu0 0.0
        %4495 = vmatpush1.msra.mxu0 %v4454
        %4496 = vmatprep.subr.mxu0 0.0
        %4497 = vmatpush1.msra.mxu0 %v4455
        %4498 = vmatprep.subr.mxu0 0.0
        %4499 = vmatpush1.msra.mxu0 %v4456
        %4500 = vmatprep.subr.mxu0 0.0
        %4501 = vmatpush1.msra.mxu0 %v4457
        %4502 = vmatprep.subr.mxu0 0.0
        %4503 = vmatpush1.msra.mxu0 %v4458
        %4504 = vmatprep.subr.mxu0 0.0
        %4505 = vmatpush1.msra.mxu0 %v4459
        %4506 = vmatprep.subr.mxu0 0.0
        %4507 = vmatpush1.msra.mxu0 %v4460
        %4508 = vmatprep.subr.mxu0 0.0
        %4509 = vmatpush1.msra.mxu0 %v4461
        %4510 = vmatprep.subr.mxu0 0.0
        %4511 = vmatpush1.msra.mxu0 %v4462
        %4512 = vmatprep.subr.mxu0 0.0
        %4513 = vmatpush1.msra.mxu0 %v4463
        %4514 = vmatprep.subr.mxu0 0.0
        %4515 = vmatpush1.msra.mxu0 %v4464
        %4516 = vmatprep.subr.mxu0 0.0
        %4517 = vmatpush1.msra.mxu0 %v4465
        %4518 = vmatprep.subr.mxu0 0.0
        %4519 = vmatpush1.msra.mxu0 %v4466
        %4520 = vmatprep.subr.mxu0 0.0
        %4521 = vmatpush1.msra.mxu0 %v4467
        %4522 = vmatprep.subr.mxu0 0.0
        %4523 = vmatpush1.msra.mxu0 %v4468
        %4524 = vmatprep.subr.mxu0 0.0
        %4525 = vmatpush1.msra.mxu0 %v4469
        %4526 = vmatprep.subr.mxu0 0.0
        %4527 = vmatpush1.msra.mxu0 %v4470
        %4528 = vmatprep.subr.mxu0 0.0
        %4529 = vmatpush1.msra.mxu0 %v4471
        %4530 = vmatprep.subr.mxu0 0.0
        %4531 = vmatpush1.msra.mxu0 %v4472
        %4532 = vmatprep.subr.mxu0 0.0
        %4533 = vmatpush1.msra.mxu0 %v4473
        %4534 = vmatprep.subr.mxu0 0.0
        %4535 = vmatpush1.msra.mxu0 %v4474
        %4536 = vmatprep.subr.mxu0 0.0
        %4537 = vmatpush1.msra.mxu0 %v4475
        %4538 = vmatprep.subr.mxu0 0.0
        %4539 = vmatpush1.msra.mxu0 %v4476
        %4540 = vmatprep.subr.mxu0 0.0
        %4541 = vmatpush1.msra.mxu0 %v4477
        %4542 = vmatprep.mubr.f32.mxu0 %v1404
        %4543 = vmatmul.mubr.f32.gmra.mrb[0].mxu0 %v710
        %v4544 = vpop.f32.mrb[0].mxu0
        %v4545 = vadd.f32 0.0, %v4544
        %v4546 = vpop.f32.mrb[0].mxu0
        %4547 = vdwg.mxu0
        %v4548 = vlaneseq
        %v4549 = vshrl.u32 %v4548, 7
        %v4550 = vsub.s32 0, %v4549
        %v4551 = vrot.slane %v4181, %v4550
        %v4552 = vmul.f32 %v4545, %v4551
        %4553 = vst [vmem:[#allocation2 + $0x20] sm:$0xf] %v4552
        %v4554 = vld [vmem:[%s8] sm:$0xff]
        %v4555 = vld [vmem:[#allocation2] sm:$0xff]
        %v4556 = vld [vmem:[#allocation2 + $0x8] sm:$0xff]
        %v4557 = vld [vmem:[#allocation2 + $0x10] sm:$0xff]
        %v4558 = vld [vmem:[#allocation2 + $0x18] sm:$0xff]
        %v4559 = vld [vmem:[#allocation2 + $0x20] sm:$0xf]
        %v4561 = vsel %vm604, %v4554, 0
        %v4564 = vsel %vm617, %v4559, 0
        %4566 = vmatprep.subr.mxu0 0.0
        %4567 = vmatpush1.msra.mxu0 %v4555
        %4568 = vmatprep.subr.mxu0 0.0
        %4569 = vmatpush1.msra.mxu0 %v4556
        %4570 = vmatprep.subr.mxu0 0.0
        %4571 = vmatpush1.msra.mxu0 %v4557
        %4572 = vmatprep.subr.mxu0 0.0
        %4573 = vmatpush1.msra.mxu0 %v4558
        %4574 = vmatprep.subr.mxu0 0.0
        %4575 = vmatpush1.msra.mxu0 %v4564
        %4576 = vmatprep.subr.mxu0 0.0
        %4577 = vmatpush1.msra.mxu0 0.0
        %4578 = vmatprep.subr.mxu0 0.0
        %4579 = vmatpush1.msra.mxu0 0.0
        %4580 = vmatprep.subr.mxu0 0.0
        %4581 = vmatpush1.msra.mxu0 0.0
        %4582 = vmatprep.subr.mxu0 0.0
        %4583 = vmatpush1.msra.mxu0 0.0
        %4584 = vmatprep.subr.mxu0 0.0
        %4585 = vmatpush1.msra.mxu0 0.0
        %4586 = vmatprep.subr.mxu0 0.0
        %4587 = vmatpush1.msra.mxu0 0.0
        %4588 = vmatprep.subr.mxu0 0.0
        %4589 = vmatpush1.msra.mxu0 0.0
        %4590 = vmatprep.subr.mxu0 0.0
        %4591 = vmatpush1.msra.mxu0 0.0
        %4592 = vmatprep.subr.mxu0 0.0
        %4593 = vmatpush1.msra.mxu0 0.0
        %4594 = vmatprep.subr.mxu0 0.0
        %4595 = vmatpush1.msra.mxu0 0.0
        %4596 = vmatprep.subr.mxu0 0.0
        %4597 = vmatpush1.msra.mxu0 0.0
        %4598 = vmatprep.subr.mxu0 0.0
        %4599 = vmatpush1.msra.mxu0 0.0
        %4600 = vmatprep.subr.mxu0 0.0
        %4601 = vmatpush1.msra.mxu0 0.0
        %4602 = vmatprep.subr.mxu0 0.0
        %4603 = vmatpush1.msra.mxu0 0.0
        %4604 = vmatprep.subr.mxu0 0.0
        %4605 = vmatpush1.msra.mxu0 0.0
        %4606 = vmatprep.subr.mxu0 0.0
        %4607 = vmatpush1.msra.mxu0 0.0
        %4608 = vmatprep.subr.mxu0 0.0
        %4609 = vmatpush1.msra.mxu0 0.0
        %4610 = vmatprep.subr.mxu0 0.0
        %4611 = vmatpush1.msra.mxu0 0.0
        %4612 = vmatprep.subr.mxu0 0.0
        %4613 = vmatpush1.msra.mxu0 0.0
        %4614 = vmatprep.subr.mxu0 0.0
        %4615 = vmatpush1.msra.mxu0 0.0
        %4616 = vmatprep.subr.mxu0 0.0
        %4617 = vmatpush1.msra.mxu0 0.0
        %4618 = vmatprep.subr.mxu0 0.0
        %4619 = vmatpush1.msra.mxu0 0.0
        %4620 = vmatprep.subr.mxu0 0.0
        %4621 = vmatpush1.msra.mxu0 0.0
        %4622 = vmatprep.subr.mxu0 0.0
        %4623 = vmatpush1.msra.mxu0 0.0
        %4624 = vmatprep.subr.mxu0 0.0
        %4625 = vmatpush1.msra.mxu0 0.0
        %4626 = vmatprep.subr.mxu0 0.0
        %4627 = vmatpush1.msra.mxu0 0.0
        %4628 = vmatprep.subr.mxu0 0.0
        %4629 = vmatpush1.msra.mxu0 0.0
        %4630 = vmatprep.mubr.f32.mxu0 0.0
        %4631 = vmatmul.mubr.f32.gmra.mrb[0].mxu0 %v4561
        %v4632 = vpop.f32.mrb[0].mxu0
        %v4633 = vadd.f32 0.0, %v4632
        %v4634 = vpop.f32.mrb[0].mxu0
        %4635 = vdwg.mxu0
        %4636 = vst [vmem:[%s565] sm:$0xff] %v4633
        %s4637 = sand.u32 %s258, 1
        %s4638 = sand.u32 %s258, 1
        %s4639 = smul.addr %s4638, 32
        %s4640 = scalar_lea.vmem [#allocation6], %s4639
        %s4641 = sand.u32 %s286, 1
        %s4642 = scalar_lea.sflag [#allocation8], %s4641
        %s4643 = sand.u32 %s286, 1
        %s4644 = smul.addr %s4643, 8
        %s4645 = scalar_lea.vmem [#allocation7], %s4644
        // Predicated region
        $region171: #{tpu_custom_call.1} parent=157 // pred_check
          %p4646 = pneg %p268
        $region172: #{tpu_custom_call.1} parent=157 // pred_check_branch
          %4648 = sbr.rel (%p4646) target = $region174
        $region173: #{tpu_custom_call.1} parent=157 // pred_region
          %s4649 = smul.addr %s29, 8
          %s4650 = sadd.s32 %s30, %s4649
          %s4651 = smul.addr %s4650, 8
          %s4652 = scalar_lea.vmem %s9, %s4651
          // Predicated region
          $region175: #{tpu_custom_call.1} parent=173 // pred_check
            _
          $region176: #{tpu_custom_call.1} parent=173 // pred_check_branch
            %4654 = sbr.rel (0) target = $region178
          $region177: #{tpu_custom_call.1} parent=173 // pred_region
            // Predicated region
            $region179: #{tpu_custom_call.1} parent=177 // pred_check
              _
            $region180: #{tpu_custom_call.1} parent=177 // pred_check_branch
              %4656 = sbr.rel (0) target = $region182
            $region181: #{tpu_custom_call.1} parent=177 // pred_region
              // Predicated region
              $region194: #{tpu_custom_call.1} parent=181 // pred_check
                _
              $region195: #{tpu_custom_call.1} parent=181 // pred_check_branch
                %4677 = sbr.rel (0) target = $region197
              $region196: #{tpu_custom_call.1} parent=181 // pred_region
                loop: start=0, step=1, limit=1
                $region198: #{tpu_custom_call.1} parent=196 // loop_pre_header
                  _
                $region199: #{tpu_custom_call.1} parent=196 // loop_header
                  %s4679 = sphi 0, %s4683
                  %p4680 = scmp.ge.s32.totalorder %s4679, 1
                  %s4684 = sphi %s4640, %s4640
                  %s4685 = sphi %s4652, %s4652
                $region200: #{tpu_custom_call.1} parent=196 // loop_header_branch
                  %4682 = sbr.rel (%p4680) target = $region204
                $region201: #{tpu_custom_call.1} parent=196 // loop_body
                  %v4686 = vld [vmem:[%s4684] sm:$0xff]
                  %4687 = vst [vmem:[%s4685] sm:$0xff] %v4686
                  %v4688 = vld [vmem:[%s4684 + $0x8] sm:$0xff]
                  %4689 = vst [vmem:[%s4685 + $0x10] sm:$0xff] %v4688
                  %v4690 = vld [vmem:[%s4684 + $0x10] sm:$0xff]
                  %4691 = vst [vmem:[%s4685 + $0x20] sm:$0xff] %v4690
                  %v4692 = vld [vmem:[%s4684 + $0x18] sm:$0xff]
                  %4693 = vst [vmem:[%s4685 + $0x30] sm:$0xff] %v4692
                $region202: #{tpu_custom_call.1} parent=196 // loop_footer
                  %s4683 = sadd.s32 1, %s4679
                $region203: #{tpu_custom_call.1} parent=196 // loop_footer_branch
                  %4678 = sbr.rel target = $region199
                $region204: #{tpu_custom_call.1} parent=196 // loop_exit
                  _
              $region197: #{tpu_custom_call.1} parent=181 // pred_fallthru
                _
              // Predicated region
              $region205: #{tpu_custom_call.1} parent=181 // pred_check
                _
              $region206: #{tpu_custom_call.1} parent=181 // pred_check_branch
                %4695 = sbr.rel target = $region208
              $region207: #{tpu_custom_call.1} parent=181 // pred_region
                _
              $region208: #{tpu_custom_call.1} parent=181 // pred_fallthru
                _
            $region182: #{tpu_custom_call.1} parent=177 // pred_fallthru
              _
            // Predicated region
            $region183: #{tpu_custom_call.1} parent=177 // pred_check
              _
            $region184: #{tpu_custom_call.1} parent=177 // pred_check_branch
              %4658 = sbr.rel target = $region186
            $region185: #{tpu_custom_call.1} parent=177 // pred_region
              loop: start=0, step=1, limit=1
              $region187: #{tpu_custom_call.1} parent=185 // loop_pre_header
                _
              $region188: #{tpu_custom_call.1} parent=185 // loop_header
                %s4661 = sphi 0, %s4665
                %p4662 = scmp.ge.s32.totalorder %s4661, 1
                %s4666 = sphi %s4640, %s4640
                %s4667 = sphi %s4652, %s4652
              $region189: #{tpu_custom_call.1} parent=185 // loop_header_branch
                %4664 = sbr.rel (%p4662) target = $region193
              $region190: #{tpu_custom_call.1} parent=185 // loop_body
                %v4668 = vld [vmem:[%s4666] sm:$0xff]
                %4669 = vst [vmem:[%s4667] sm:$0xff] %v4668
                %v4670 = vld [vmem:[%s4666 + $0x8] sm:$0xff]
                %4671 = vst [vmem:[%s4667 + $0x10] sm:$0xff] %v4670
                %v4672 = vld [vmem:[%s4666 + $0x10] sm:$0xff]
                %4673 = vst [vmem:[%s4667 + $0x20] sm:$0xff] %v4672
                %v4674 = vld [vmem:[%s4666 + $0x18] sm:$0xff]
                %4675 = vst [vmem:[%s4667 + $0x30] sm:$0xff] %v4674
              $region191: #{tpu_custom_call.1} parent=185 // loop_footer
                %s4665 = sadd.s32 1, %s4661
              $region192: #{tpu_custom_call.1} parent=185 // loop_footer_branch
                %4660 = sbr.rel target = $region188
              $region193: #{tpu_custom_call.1} parent=185 // loop_exit
                _
            $region186: #{tpu_custom_call.1} parent=177 // pred_fallthru
              _
          $region178: #{tpu_custom_call.1} parent=173 // pred_fallthru
            _
          %4696 = vnop
        $region174: #{tpu_custom_call.1} parent=157 // pred_fallthru
          _
        // Predicated region
        $region209: #{tpu_custom_call.1} parent=157 // pred_check
          %p4697 = pneg %p296
        $region210: #{tpu_custom_call.1} parent=157 // pred_check_branch
          %4699 = sbr.rel (%p4697) target = $region212
        $region211: #{tpu_custom_call.1} parent=157 // pred_region
          %s4701 = ssub.s32 128, 128
          %4702 = vsyncadd %s4642, %s4701
          %s4703 = smul.addr %s29, 2
          %s4704 = sadd.s32 %s30, %s4703
          %s4705 = smul.addr %s4704, 128
          %s4706 = scalar_lea.hbm %s10, %s4705
          %s4708 = sshll.u32 %s4645, 4
          %s4709 = int_to_ptr.vmem [resolvable:$true] %s4708
          %4711 = dma.vmem_to_hbm [thread:$0]  %s4709, 128, %s4706, %s4642
        $region212: #{tpu_custom_call.1} parent=157 // pred_fallthru
          _
      $region158: #{tpu_custom_call.1} parent=5 // pred_fallthru
        _
      %p4712 = scmp.le.s32.totalorder 2, %s20
      // Predicated region
      $region213: #{tpu_custom_call.1} parent=5 // pred_check
        %p4713 = pneg %p4712
      $region214: #{tpu_custom_call.1} parent=5 // pred_check_branch
        %4715 = sbr.rel (%p4713) target = $region216
      $region215: #{tpu_custom_call.1} parent=5 // pred_region
        %s4716 = ssub.s32 %s20, 2
        // Predicated region
        $region217: #{tpu_custom_call.1} parent=215 // pred_check
          %p4717 = pneg %p274
        $region218: #{tpu_custom_call.1} parent=215 // pred_check_branch
          %4719 = sbr.rel (%p4717) target = $region220
        $region219: #{tpu_custom_call.1} parent=215 // pred_region
          %s4720 = sand.u32 %s259, 1
          %s4721 = sand.u32 %s259, 1
          %s4722 = smul.addr %s4721, 32
          %s4723 = scalar_lea.vmem [#allocation6], %s4722
        $region220: #{tpu_custom_call.1} parent=215 // pred_fallthru
          _
        // Predicated region
        $region221: #{tpu_custom_call.1} parent=215 // pred_check
          %p4724 = pneg %p302
        $region222: #{tpu_custom_call.1} parent=215 // pred_check_branch
          %4726 = sbr.rel (%p4724) target = $region224
        $region223: #{tpu_custom_call.1} parent=215 // pred_region
          %s4727 = sand.u32 %s287, 1
          %s4728 = scalar_lea.sflag [#allocation8], %s4727
          %s4729 = sand.u32 %s287, 1
          %s4730 = smul.addr %s4729, 8
          %s4731 = scalar_lea.vmem [#allocation7], %s4730
          %4732 = dma.done %s4728, 128
        $region224: #{tpu_custom_call.1} parent=215 // pred_fallthru
          _
      $region216: #{tpu_custom_call.1} parent=5 // pred_fallthru
        _
    $region6: #{tpu_custom_call.1} parent=1 // loop_footer
      %s24 = sadd.s32 1, %s20
    $region7: #{tpu_custom_call.1} parent=1 // loop_footer_branch
      %19 = sbr.rel target = $region3
    $region8: #{tpu_custom_call.1} parent=1 // loop_exit
      _
    %4733 = vsyncpa [#allocation8], 1
    %s4734 = scalar_lea.sflag [#allocation8], 1
    %4735 = vsyncpa %s4734, 1

</llo_original>
